<compile_context>
chip_gen: v6e
topology: v6e:2x2x1
jax: 0.10.0
libtpu: 0.0.40
codegen_flags: <defaults>
</compile_context>

<pallas_src>
import functools

import jax
import jax.numpy as jnp
from jax.experimental import pallas as pl
from jax.experimental.pallas import tpu as pltpu


def _round_up(x, m):
    return ((x + m - 1) // m) * m


# --------------------------------------------------------------------------- kernel
def _generator_kernel(onehot_ref,    # (S*Bp, V)    bf16  t-major one-hot tokens
                      emb_proj_ref,  # (V, 4*Hp)    bf16  emb @ W_ih_l0^T, gate-padded cols
                      b0_ref,        # (1, 4*Hp)    f32   layer-0 bias, gate-padded
                      whh0_ref,      # (H, 4*Hp)    bf16  layer-0 recurrent weight (K un-padded)
                      w_l1_ref,      # (2*H, 4*Hp)  bf16  layer-1 [W_ih; W_hh] stacked
                      b_l1_ref,      # (1, 4*Hp)    f32
                      w_fc1_ref,     # (S*Hp, E)    bf16  Linear1, rows match h1 history layout
                      b_fc1_ref,     # (1, E)       f32
                      w_fc2_ref,     # (E, Vp)      bf16
                      b_fc2_ref,     # (1, Vp)      f32
                      out_ref,       # (Bp, Vp)     f32
                      xg_ref,        # scratch (S*Bp, 4*Hp) f32
                      hist_ref,      # scratch (Bp, S*Hp)   f32
                      *, batch_pad, seq_len, hidden, hidden_pad):
    Bp, S, H, Hp = batch_pad, seq_len, hidden, hidden_pad
    f32, bf16 = jnp.float32, jnp.bfloat16

    def sigmoid(x):
        # tanh formulation -> EUP slot (no exact VPU divide), numerically stable.
        return 0.5 * (jnp.tanh(0.5 * x) + 1.0)

    # Fused embedding gather + layer-0 input projection for ALL timesteps, written to
    # a VMEM scratch so it is NOT held live in vregs across the unrolled recurrence.
    # The layer-0 bias is added here in f32.
    xg_ref[...] = jnp.dot(onehot_ref[...], emb_proj_ref[...],
                          preferred_element_type=f32) + b0_ref[...]

    h0 = jnp.zeros((Bp, Hp), f32)
    c0 = jnp.zeros((Bp, Hp), f32)
    h1 = jnp.zeros((Bp, Hp), f32)
    c1 = jnp.zeros((Bp, Hp), f32)

    # Constant lane mask, hoisted out of the loop (broadcasts are not CSE'd by JAX).
    low_lanes = jax.lax.broadcasted_iota(jnp.int32, (Bp, Hp), 1) < H

    def gates(g):
        # 128-lane-aligned gate slices; PyTorch gate order i, f, g, o.
        i = sigmoid(g[:, 0 * Hp:1 * Hp])
        f = sigmoid(g[:, 1 * Hp:2 * Hp])
        gg = jnp.tanh(g[:, 2 * Hp:3 * Hp])
        o = sigmoid(g[:, 3 * Hp:4 * Hp])
        return i, f, gg, o

    # seq_len is small & static -> fully unroll.  One basic block: the scheduler can
    # overlap the layer-0 matmul of step t+1 (depends only on h0_t) with layer-1 of t.
    for t in range(S):
        # layer 0: input projection read back from scratch (aligned load); recurrent
        # matmul contracts over the TRUE hidden size H (smaller streamed RHS).
        g0 = xg_ref[t * Bp:(t + 1) * Bp, :] + jnp.dot(
            h0[:, :H].astype(bf16), whh0_ref[...], preferred_element_type=f32)
        i0, f0, gg0, o0 = gates(g0)
        c0 = f0 * c0 + i0 * gg0
        h0 = o0 * jnp.tanh(c0)

        # layer 1: single fused matmul over a dense (Bp, 2H) [h0_t | h1_{t-1}].
        if 2 * H <= Hp:
            hcat = jnp.where(low_lanes, h0, pltpu.roll(h1, H, 1))[:, :2 * H]
        else:  # general fallback (not hit at these shapes)
            hcat = jnp.concatenate([h0[:, :H], h1[:, :H]], axis=-1)
        g1 = jnp.dot(hcat.astype(bf16), w_l1_ref[...],
                     preferred_element_type=f32) + b_l1_ref[...]
        i1, f1, gg1, o1 = gates(g1)
        c1 = f1 * c1 + i1 * gg1
        h1 = o1 * jnp.tanh(c1)

        # Stash h1_t in a lane-aligned history slab (idle vst slot); Linear1 runs
        # once after the loop instead of S lane-sparse matmuls inside it.
        hist_ref[:, t * Hp:(t + 1) * Hp] = h1

    # Linear1 over the whole history in one matmul (K = S*Hp fills the MXU depth),
    # then ReLU and Linear2; lane/sublane-dense (Bp, Vp) output store.
    z = jnp.dot(hist_ref[...].astype(bf16), w_fc1_ref[...],
                preferred_element_type=f32) + b_fc1_ref[...]
    z = jnp.maximum(z, 0.0)                                               # ReLU
    out_ref[...] = jnp.dot(z.astype(bf16), w_fc2_ref[...],
                           preferred_element_type=f32) + b_fc2_ref[...]


# --------------------------------------------------------------------------- wrapper
def generator_forward(og_x, kparams, *, vocab_size, embedding_dim, input_dim):
    """og_x: int32 (B, S=input_dim) token ids. Returns logits (B, vocab_size)."""
    B, S = og_x.shape
    assert S == input_dim
    E = embedding_dim
    H = 2 * E
    Hp = _round_up(H, 128)
    Bp = _round_up(B, 8)
    V = vocab_size
    Vp = _round_up(V, 128)

    # t-major one-hot tokens built in the wrapper (bf16); padded batch rows use
    # token 0 and are never read back out.
    ids_t = jnp.pad(og_x.T.astype(jnp.int32), ((0, 0), (0, Bp - B))).reshape(S * Bp)
    onehot = jax.nn.one_hot(ids_t, V, dtype=jnp.bfloat16)                 # (S*Bp, V)

    kernel = functools.partial(_generator_kernel, batch_pad=Bp, seq_len=S,
                               hidden=H, hidden_pad=Hp)

    args = (onehot, kparams["emb_proj"], kparams["b0"], kparams["whh0"],
            kparams["w_l1"], kparams["b_l1"], kparams["w_fc1"], kparams["b_fc1"],
            kparams["w_fc2"], kparams["b_fc2"])

    flops = 2 * S * Bp * V * 4 * Hp              # fused embedding + L0 input proj
    flops += 2 * S * Bp * 3 * H * 4 * Hp         # recurrent matmuls (both layers)
    flops += 2 * Bp * S * Hp * E                 # Linear1 (single post-loop matmul)
    flops += 2 * Bp * E * Vp                     # Linear2
    transcendentals = S * Bp * 2 * 5 * Hp        # 3 sigmoid + 2 tanh per cell, 2 layers
    bytes_accessed = int(sum(int(a.size) * a.dtype.itemsize for a in args)
                         + Bp * Vp * 4)

    vmem = pl.BlockSpec(memory_space=pltpu.MemorySpace.VMEM)
    out = pl.pallas_call(
        kernel,
        out_shape=jax.ShapeDtypeStruct((Bp, Vp), jnp.float32),
        in_specs=[vmem] * len(args),
        out_specs=vmem,
        scratch_shapes=[pltpu.VMEM((S * Bp, 4 * Hp), jnp.float32),   # xg slab
                        pltpu.VMEM((Bp, S * Hp), jnp.float32)],      # h1 history slab
        cost_estimate=pl.CostEstimate(flops=int(flops),
                                      transcendentals=int(transcendentals),
                                      bytes_accessed=bytes_accessed),
    )(*args)
    return out[:B, :V]


# --------------------------------------------------------------------------- params
def init_raw_params(key, vocab_size, embedding_dim, input_dim):
    """Deterministic synthetic init with PyTorch shapes."""
    E = embedding_dim
    H = 2 * E
    n = H * input_dim
    ks = jax.random.split(key, 13)
    s = 0.1

    def rnd(k, shape):
        return (s * jax.random.normal(k, shape)).astype(jnp.float32)

    return {
        "emb": rnd(ks[0], (vocab_size, E)),
        "w_ih_l0": rnd(ks[1], (4 * H, E)),
        "w_hh_l0": rnd(ks[2], (4 * H, H)),
        "b_ih_l0": rnd(ks[3], (4 * H,)),
        "b_hh_l0": rnd(ks[4], (4 * H,)),
        "w_ih_l1": rnd(ks[5], (4 * H, H)),
        "w_hh_l1": rnd(ks[6], (4 * H, H)),
        "b_ih_l1": rnd(ks[7], (4 * H,)),
        "b_hh_l1": rnd(ks[8], (4 * H,)),
        "lin1_w": rnd(ks[9], (E, n)),
        "lin1_b": rnd(ks[10], (E,)),
        "lin2_w": rnd(ks[11], (vocab_size, E)),
        "lin2_b": rnd(ks[12], (vocab_size,)),
    }


def _gate_pad_cols(w, H, Hp):
    """(in, 4*H) gate-ordered (i|f|g|o) -> (in, 4*Hp): each gate block starts at a
    128-lane-aligned column offset; padded columns are zero."""
    out = jnp.zeros((w.shape[0], 4 * Hp), w.dtype)
    for k in range(4):
        out = out.at[:, k * Hp:k * Hp + H].set(w[:, k * H:(k + 1) * H])
    return out


def pack_params(raw, *, vocab_size, embedding_dim, input_dim):
    """Weight-only transform: gate-pad columns to 128 lanes (rows stay un-padded),
    fuse embedding with the layer-0 input projection, stack layer-1 weights, lay
    Linear1 out to match the in-kernel h1-history slab, pad Linear2 output columns
    to 128, cast MXU operands to bf16 (biases stay f32)."""
    E, S, V = embedding_dim, input_dim, vocab_size
    H = 2 * E
    Hp = _round_up(H, 128)
    Vp = _round_up(V, 128)
    bf16, f32 = jnp.bfloat16, jnp.float32

    b0 = (raw["b_ih_l0"] + raw["b_hh_l0"])[None, :]                      # (1, 4H)
    b1 = (raw["b_ih_l1"] + raw["b_hh_l1"])[None, :]

    # Fused Embedding + layer-0 input projection (weight-only; bias stays f32).
    emb_proj = raw["emb"] @ _gate_pad_cols(raw["w_ih_l0"].T, H, Hp)      # (V, 4Hp)

    whh0 = _gate_pad_cols(raw["w_hh_l0"].T, H, Hp)                       # (H, 4Hp)
    w_l1 = jnp.concatenate([_gate_pad_cols(raw["w_ih_l1"].T, H, Hp),
                            _gate_pad_cols(raw["w_hh_l1"].T, H, Hp)],
                           axis=0)                                       # (2H, 4Hp)

    # Linear1 laid out to match the (Bp, S*Hp) h1-history slab:
    # row t*Hp + j (j < H) <- lin1_w^T row t*H + j; padded rows are zero.
    # PyTorch reshape semantics: flat[b, t*H + j] = h1[b, t, j].
    w1_T = raw["lin1_w"].T                                               # (S*H, E)
    w_fc1 = jnp.zeros((S * Hp, E), f32)
    for t in range(S):
        w_fc1 = w_fc1.at[t * Hp:t * Hp + H, :].set(w1_T[t * H:(t + 1) * H, :])

    w_fc2 = jnp.zeros((E, Vp), f32).at[:, :V].set(raw["lin2_w"].T)
    b_fc2 = jnp.zeros((1, Vp), f32).at[:, :V].set(raw["lin2_b"][None, :])

    return {
        "emb_proj": emb_proj.astype(bf16),
        "b0": _gate_pad_cols(b0, H, Hp).astype(f32),
        "whh0": whh0.astype(bf16),
        "w_l1": w_l1.astype(bf16),
        "b_l1": _gate_pad_cols(b1, H, Hp).astype(f32),
        "w_fc1": w_fc1.astype(bf16),
        "b_fc1": raw["lin1_b"].reshape(1, E).astype(f32),
        "w_fc2": w_fc2.astype(bf16),
        "b_fc2": b_fc2.astype(f32),
    }


# --------------------------------------------------------------------------- reference
def _reference_forward(og_x, raw, *, embedding_dim):
    """Pure-JAX f32 reference with PyTorch semantics (dropout = identity in eval)."""
    E = embedding_dim
    H = 2 * E
    x = raw["emb"][og_x]                                                 # (B, S, E)
    B, S, _ = x.shape

    def run_layer(inp, wih, whh, b_ih, b_hh):
        wih_T, whh_T, b = wih.T, whh.T, b_ih + b_hh
        h = jnp.zeros((B, H), jnp.float32)
        c = jnp.zeros((B, H), jnp.float32)
        outs = []
        for t in range(S):
            g = inp[:, t, :] @ wih_T + h @ whh_T + b
            i = jax.nn.sigmoid(g[:, :H])
            f = jax.nn.sigmoid(g[:, H:2 * H])
            gg = jnp.tanh(g[:, 2 * H:3 * H])
            o = jax.nn.sigmoid(g[:, 3 * H:])
            c = f * c + i * gg
            h = o * jnp.tanh(c)
            outs.append(h)
        return jnp.stack(outs, axis=1)

    y0 = run_layer(x, raw["w_ih_l0"], raw["w_hh_l0"], raw["b_ih_l0"], raw["b_hh_l0"])
    y1 = run_layer(y0, raw["w_ih_l1"], raw["w_hh_l1"], raw["b_ih_l1"], raw["b_hh_l1"])
    flat = y1.reshape(B, -1)
    z = jnp.maximum(flat @ raw["lin1_w"].T + raw["lin1_b"], 0.0)
    return z @ raw["lin2_w"].T + raw["lin2_b"]


if __name__ == "__main__":
    vocab_size = 32
    embedding_dim = 32     # hidden = 64 (gate columns padded to 128 lanes in-kernel)
    input_dim = 8          # sequence length
    batch = 2

    key = jax.random.PRNGKey(0)
    k_params, k_tokens = jax.random.split(key)
    raw = init_raw_params(k_params, vocab_size, embedding_dim, input_dim)
    packed = pack_params(raw, vocab_size=vocab_size, embedding_dim=embedding_dim,
                         input_dim=input_dim)
    og_x = jax.random.randint(k_tokens, (batch, input_dim), 0, vocab_size,
                              dtype=jnp.int32)

    out = generator_forward(og_x, packed, vocab_size=vocab_size,
                            embedding_dim=embedding_dim, input_dim=input_dim)
    out = jax.block_until_ready(out)

    ref = _reference_forward(og_x, raw, embedding_dim=embedding_dim)
    assert out.shape == (batch, vocab_size)
    # bf16 MXU operands (f32 accumulate) -> relaxed tolerance vs the pure-f32 reference.
    assert jnp.allclose(out, ref, atol=3e-2, rtol=3e-2), \
        float(jnp.max(jnp.abs(out - ref)))

    print("KERNEL_OK")
</pallas_src>

<mosaic_0001>
module attributes {stable_mosaic.version = 11 : i64} {
  func.func @_generator_kernel(%arg0: memref<64x32xbf16, #tpu.memory_space<vmem>>, %arg1: memref<32x512xbf16, #tpu.memory_space<vmem>>, %arg2: memref<1x512xf32, #tpu.memory_space<vmem>>, %arg3: memref<64x512xbf16, #tpu.memory_space<vmem>>, %arg4: memref<128x512xbf16, #tpu.memory_space<vmem>>, %arg5: memref<1x512xf32, #tpu.memory_space<vmem>>, %arg6: memref<1024x32xbf16, #tpu.memory_space<vmem>>, %arg7: memref<1x32xf32, #tpu.memory_space<vmem>>, %arg8: memref<32x128xbf16, #tpu.memory_space<vmem>>, %arg9: memref<1x128xf32, #tpu.memory_space<vmem>>, %arg10: memref<8x128xf32, #tpu.memory_space<vmem>>, %arg11: memref<64x512xf32, #tpu.memory_space<vmem>>, %arg12: memref<8x1024xf32, #tpu.memory_space<vmem>>) attributes {dimension_semantics = [], scalar_prefetch = 0 : i64, scratch_operands = 2 : i64, tpu.core_type = #tpu.core_type<tc>} {
    %c0 = arith.constant 0 : index
    %c0_0 = arith.constant 0 : index
    %0 = vector.load %arg0[%c0, %c0_0] : memref<64x32xbf16, #tpu.memory_space<vmem>>, vector<64x32xbf16>
    %c0_1 = arith.constant 0 : index
    %c0_2 = arith.constant 0 : index
    %1 = vector.load %arg1[%c0_1, %c0_2] : memref<32x512xbf16, #tpu.memory_space<vmem>>, vector<32x512xbf16>
    %cst = arith.constant dense<0.000000e+00> : vector<64x512xf32>
    %2 = tpu.matmul %0, %1, %cst {dimension_numbers = #tpu.dot_dimension_numbers<[1], [0], [0], [1], [0, 0, 1, 1], [], []>} : vector<64x32xbf16>, vector<32x512xbf16>, vector<64x512xf32> -> vector<64x512xf32>
    %c0_3 = arith.constant 0 : index
    %c0_4 = arith.constant 0 : index
    %3 = vector.load %arg2[%c0_3, %c0_4] : memref<1x512xf32, #tpu.memory_space<vmem>>, vector<1x512xf32>
    %4 = vector.broadcast %3 : vector<1x512xf32> to vector<64x512xf32>
    %5 = arith.addf %2, %4 : vector<64x512xf32>
    %c0_5 = arith.constant 0 : index
    %c0_6 = arith.constant 0 : index
    %6 = vector.load %arg11[%c0_5, %c0_6] : memref<64x512xf32, #tpu.memory_space<vmem>>, vector<64x512xf32>
    tpu.vector_store %arg11[%c0_5, %c0_6], %5 {strides = array<i32>} : memref<64x512xf32, #tpu.memory_space<vmem>>, vector<64x512xf32>,
    %cst_7 = arith.constant 0.000000e+00 : f32
    %7 = vector.broadcast %cst_7 : f32 to vector<8x128xf32>
    %cst_8 = arith.constant 0.000000e+00 : f32
    %8 = vector.broadcast %cst_8 : f32 to vector<8x128xf32>
    %cst_9 = arith.constant 0.000000e+00 : f32
    %9 = vector.broadcast %cst_9 : f32 to vector<8x128xf32>
    %cst_10 = arith.constant 0.000000e+00 : f32
    %10 = vector.broadcast %cst_10 : f32 to vector<8x128xf32>
    %11 = tpu.iota {dimensions = array<i32: 1>} : vector<8x128xi32>
    %c64_i32 = arith.constant 64 : i32
    %12 = vector.broadcast %c64_i32 : i32 to vector<8x128xi32>
    %13 = arith.cmpi slt, %11, %12 : vector<8x128xi32>
    %c0_11 = arith.constant 0 : index
    %c0_12 = arith.constant 0 : index
    %14 = vector.load %arg11[%c0_11, %c0_12] : memref<64x512xf32, #tpu.memory_space<vmem>>, vector<8x512xf32>
    %15 = vector.extract_strided_slice %7 {offsets = [0, 0], sizes = [8, 64], strides = [1, 1]} : vector<8x128xf32> to vector<8x64xf32>
    %16 = arith.truncf %15 : vector<8x64xf32> to vector<8x64xbf16>
    %c0_13 = arith.constant 0 : index
    %c0_14 = arith.constant 0 : index
    %17 = vector.load %arg3[%c0_13, %c0_14] : memref<64x512xbf16, #tpu.memory_space<vmem>>, vector<64x512xbf16>
    %cst_15 = arith.constant dense<0.000000e+00> : vector<8x512xf32>
    %18 = tpu.matmul %16, %17, %cst_15 {dimension_numbers = #tpu.dot_dimension_numbers<[1], [0], [0], [1], [0, 0, 1, 1], [], []>} : vector<8x64xbf16>, vector<64x512xbf16>, vector<8x512xf32> -> vector<8x512xf32>
    %19 = arith.addf %14, %18 : vector<8x512xf32>
    %20 = vector.extract_strided_slice %19 {offsets = [0, 0], sizes = [8, 128], strides = [1, 1]} : vector<8x512xf32> to vector<8x128xf32>
    %cst_16 = arith.constant 5.000000e-01 : f32
    %21 = vector.broadcast %cst_16 : f32 to vector<8x128xf32>
    %22 = arith.mulf %21, %20 : vector<8x128xf32>
    %23 = math.tanh %22 : vector<8x128xf32>
    %cst_17 = arith.constant 1.000000e+00 : f32
    %24 = vector.broadcast %cst_17 : f32 to vector<8x128xf32>
    %25 = arith.addf %23, %24 : vector<8x128xf32>
    %cst_18 = arith.constant 5.000000e-01 : f32
    %26 = vector.broadcast %cst_18 : f32 to vector<8x128xf32>
    %27 = arith.mulf %26, %25 : vector<8x128xf32>
    %28 = vector.extract_strided_slice %19 {offsets = [0, 128], sizes = [8, 128], strides = [1, 1]} : vector<8x512xf32> to vector<8x128xf32>
    %cst_19 = arith.constant 5.000000e-01 : f32
    %29 = vector.broadcast %cst_19 : f32 to vector<8x128xf32>
    %30 = arith.mulf %29, %28 : vector<8x128xf32>
    %31 = math.tanh %30 : vector<8x128xf32>
    %cst_20 = arith.constant 1.000000e+00 : f32
    %32 = vector.broadcast %cst_20 : f32 to vector<8x128xf32>
    %33 = arith.addf %31, %32 : vector<8x128xf32>
    %cst_21 = arith.constant 5.000000e-01 : f32
    %34 = vector.broadcast %cst_21 : f32 to vector<8x128xf32>
    %35 = arith.mulf %34, %33 : vector<8x128xf32>
    %36 = vector.extract_strided_slice %19 {offsets = [0, 256], sizes = [8, 128], strides = [1, 1]} : vector<8x512xf32> to vector<8x128xf32>
    %37 = math.tanh %36 : vector<8x128xf32>
    %38 = vector.extract_strided_slice %19 {offsets = [0, 384], sizes = [8, 128], strides = [1, 1]} : vector<8x512xf32> to vector<8x128xf32>
    %cst_22 = arith.constant 5.000000e-01 : f32
    %39 = vector.broadcast %cst_22 : f32 to vector<8x128xf32>
    %40 = arith.mulf %39, %38 : vector<8x128xf32>
    %41 = math.tanh %40 : vector<8x128xf32>
    %cst_23 = arith.constant 1.000000e+00 : f32
    %42 = vector.broadcast %cst_23 : f32 to vector<8x128xf32>
    %43 = arith.addf %41, %42 : vector<8x128xf32>
    %cst_24 = arith.constant 5.000000e-01 : f32
    %44 = vector.broadcast %cst_24 : f32 to vector<8x128xf32>
    %45 = arith.mulf %44, %43 : vector<8x128xf32>
    %46 = arith.mulf %35, %8 : vector<8x128xf32>
    %47 = arith.mulf %27, %37 : vector<8x128xf32>
    %48 = arith.addf %46, %47 : vector<8x128xf32>
    %49 = math.tanh %48 : vector<8x128xf32>
    %50 = arith.mulf %45, %49 : vector<8x128xf32>
    %c64_i32_25 = arith.constant 64 : i32
    %51 = tpu.dynamic_rotate %9 by %c64_i32_25 dim 1 : vector<8x128xf32>, i32 -> vector<8x128xf32>
    %52 = arith.select %13, %50, %51 : vector<8x128xi1>, vector<8x128xf32>
    %53 = arith.truncf %52 : vector<8x128xf32> to vector<8x128xbf16>
    %c0_26 = arith.constant 0 : index
    %c0_27 = arith.constant 0 : index
    %54 = vector.load %arg4[%c0_26, %c0_27] : memref<128x512xbf16, #tpu.memory_space<vmem>>, vector<128x512xbf16>
    %cst_28 = arith.constant dense<0.000000e+00> : vector<8x512xf32>
    %55 = tpu.matmul %53, %54, %cst_28 {dimension_numbers = #tpu.dot_dimension_numbers<[1], [0], [0], [1], [0, 0, 1, 1], [], []>} : vector<8x128xbf16>, vector<128x512xbf16>, vector<8x512xf32> -> vector<8x512xf32>
    %c0_29 = arith.constant 0 : index
    %c0_30 = arith.constant 0 : index
    %56 = vector.load %arg5[%c0_29, %c0_30] : memref<1x512xf32, #tpu.memory_space<vmem>>, vector<1x512xf32>
    %57 = vector.broadcast %56 : vector<1x512xf32> to vector<8x512xf32>
    %58 = arith.addf %55, %57 : vector<8x512xf32>
    %59 = vector.extract_strided_slice %58 {offsets = [0, 0], sizes = [8, 128], strides = [1, 1]} : vector<8x512xf32> to vector<8x128xf32>
    %cst_31 = arith.constant 5.000000e-01 : f32
    %60 = vector.broadcast %cst_31 : f32 to vector<8x128xf32>
    %61 = arith.mulf %60, %59 : vector<8x128xf32>
    %62 = math.tanh %61 : vector<8x128xf32>
    %cst_32 = arith.constant 1.000000e+00 : f32
    %63 = vector.broadcast %cst_32 : f32 to vector<8x128xf32>
    %64 = arith.addf %62, %63 : vector<8x128xf32>
    %cst_33 = arith.constant 5.000000e-01 : f32
    %65 = vector.broadcast %cst_33 : f32 to vector<8x128xf32>
    %66 = arith.mulf %65, %64 : vector<8x128xf32>
    %67 = vector.extract_strided_slice %58 {offsets = [0, 128], sizes = [8, 128], strides = [1, 1]} : vector<8x512xf32> to vector<8x128xf32>
    %cst_34 = arith.constant 5.000000e-01 : f32
    %68 = vector.broadcast %cst_34 : f32 to vector<8x128xf32>
    %69 = arith.mulf %68, %67 : vector<8x128xf32>
    %70 = math.tanh %69 : vector<8x128xf32>
    %cst_35 = arith.constant 1.000000e+00 : f32
    %71 = vector.broadcast %cst_35 : f32 to vector<8x128xf32>
    %72 = arith.addf %70, %71 : vector<8x128xf32>
    %cst_36 = arith.constant 5.000000e-01 : f32
    %73 = vector.broadcast %cst_36 : f32 to vector<8x128xf32>
    %74 = arith.mulf %73, %72 : vector<8x128xf32>
    %75 = vector.extract_strided_slice %58 {offsets = [0, 256], sizes = [8, 128], strides = [1, 1]} : vector<8x512xf32> to vector<8x128xf32>
    %76 = math.tanh %75 : vector<8x128xf32>
    %77 = vector.extract_strided_slice %58 {offsets = [0, 384], sizes = [8, 128], strides = [1, 1]} : vector<8x512xf32> to vector<8x128xf32>
    %cst_37 = arith.constant 5.000000e-01 : f32
    %78 = vector.broadcast %cst_37 : f32 to vector<8x128xf32>
    %79 = arith.mulf %78, %77 : vector<8x128xf32>
    %80 = math.tanh %79 : vector<8x128xf32>
    %cst_38 = arith.constant 1.000000e+00 : f32
    %81 = vector.broadcast %cst_38 : f32 to vector<8x128xf32>
    %82 = arith.addf %80, %81 : vector<8x128xf32>
    %cst_39 = arith.constant 5.000000e-01 : f32
    %83 = vector.broadcast %cst_39 : f32 to vector<8x128xf32>
    %84 = arith.mulf %83, %82 : vector<8x128xf32>
    %85 = arith.mulf %74, %10 : vector<8x128xf32>
    %86 = arith.mulf %66, %76 : vector<8x128xf32>
    %87 = arith.addf %85, %86 : vector<8x128xf32>
    %88 = math.tanh %87 : vector<8x128xf32>
    %89 = arith.mulf %84, %88 : vector<8x128xf32>
    %c0_40 = arith.constant 0 : index
    %c0_41 = arith.constant 0 : index
    %90 = vector.load %arg12[%c0_40, %c0_41] : memref<8x1024xf32, #tpu.memory_space<vmem>>, vector<8x128xf32>
    tpu.vector_store %arg12[%c0_40, %c0_41], %89 {strides = array<i32>} : memref<8x1024xf32, #tpu.memory_space<vmem>>, vector<8x128xf32>,
    %c8 = arith.constant 8 : index
    %c0_42 = arith.constant 0 : index
    %91 = vector.load %arg11[%c8, %c0_42] : memref<64x512xf32, #tpu.memory_space<vmem>>, vector<8x512xf32>
    %92 = vector.extract_strided_slice %50 {offsets = [0, 0], sizes = [8, 64], strides = [1, 1]} : vector<8x128xf32> to vector<8x64xf32>
    %93 = arith.truncf %92 : vector<8x64xf32> to vector<8x64xbf16>
    %c0_43 = arith.constant 0 : index
    %c0_44 = arith.constant 0 : index
    %94 = vector.load %arg3[%c0_43, %c0_44] : memref<64x512xbf16, #tpu.memory_space<vmem>>, vector<64x512xbf16>
    %cst_45 = arith.constant dense<0.000000e+00> : vector<8x512xf32>
    %95 = tpu.matmul %93, %94, %cst_45 {dimension_numbers = #tpu.dot_dimension_numbers<[1], [0], [0], [1], [0, 0, 1, 1], [], []>} : vector<8x64xbf16>, vector<64x512xbf16>, vector<8x512xf32> -> vector<8x512xf32>
    %96 = arith.addf %91, %95 : vector<8x512xf32>
    %97 = vector.extract_strided_slice %96 {offsets = [0, 0], sizes = [8, 128], strides = [1, 1]} : vector<8x512xf32> to vector<8x128xf32>
    %cst_46 = arith.constant 5.000000e-01 : f32
    %98 = vector.broadcast %cst_46 : f32 to vector<8x128xf32>
    %99 = arith.mulf %98, %97 : vector<8x128xf32>
    %100 = math.tanh %99 : vector<8x128xf32>
    %cst_47 = arith.constant 1.000000e+00 : f32
    %101 = vector.broadcast %cst_47 : f32 to vector<8x128xf32>
    %102 = arith.addf %100, %101 : vector<8x128xf32>
    %cst_48 = arith.constant 5.000000e-01 : f32
    %103 = vector.broadcast %cst_48 : f32 to vector<8x128xf32>
    %104 = arith.mulf %103, %102 : vector<8x128xf32>
    %105 = vector.extract_strided_slice %96 {offsets = [0, 128], sizes = [8, 128], strides = [1, 1]} : vector<8x512xf32> to vector<8x128xf32>
    %cst_49 = arith.constant 5.000000e-01 : f32
    %106 = vector.broadcast %cst_49 : f32 to vector<8x128xf32>
    %107 = arith.mulf %106, %105 : vector<8x128xf32>
    %108 = math.tanh %107 : vector<8x128xf32>
    %cst_50 = arith.constant 1.000000e+00 : f32
    %109 = vector.broadcast %cst_50 : f32 to vector<8x128xf32>
    %110 = arith.addf %108, %109 : vector<8x128xf32>
    %cst_51 = arith.constant 5.000000e-01 : f32
    %111 = vector.broadcast %cst_51 : f32 to vector<8x128xf32>
    %112 = arith.mulf %111, %110 : vector<8x128xf32>
    %113 = vector.extract_strided_slice %96 {offsets = [0, 256], sizes = [8, 128], strides = [1, 1]} : vector<8x512xf32> to vector<8x128xf32>
    %114 = math.tanh %113 : vector<8x128xf32>
    %115 = vector.extract_strided_slice %96 {offsets = [0, 384], sizes = [8, 128], strides = [1, 1]} : vector<8x512xf32> to vector<8x128xf32>
    %cst_52 = arith.constant 5.000000e-01 : f32
    %116 = vector.broadcast %cst_52 : f32 to vector<8x128xf32>
    %117 = arith.mulf %116, %115 : vector<8x128xf32>
    %118 = math.tanh %117 : vector<8x128xf32>
    %cst_53 = arith.constant 1.000000e+00 : f32
    %119 = vector.broadcast %cst_53 : f32 to vector<8x128xf32>
    %120 = arith.addf %118, %119 : vector<8x128xf32>
    %cst_54 = arith.constant 5.000000e-01 : f32
    %121 = vector.broadcast %cst_54 : f32 to vector<8x128xf32>
    %122 = arith.mulf %121, %120 : vector<8x128xf32>
    %123 = arith.mulf %112, %48 : vector<8x128xf32>
    %124 = arith.mulf %104, %114 : vector<8x128xf32>
    %125 = arith.addf %123, %124 : vector<8x128xf32>
    %126 = math.tanh %125 : vector<8x128xf32>
    %127 = arith.mulf %122, %126 : vector<8x128xf32>
    %c64_i32_55 = arith.constant 64 : i32
    %128 = tpu.dynamic_rotate %89 by %c64_i32_55 dim 1 : vector<8x128xf32>, i32 -> vector<8x128xf32>
    %129 = arith.select %13, %127, %128 : vector<8x128xi1>, vector<8x128xf32>
    %130 = arith.truncf %129 : vector<8x128xf32> to vector<8x128xbf16>
    %c0_56 = arith.constant 0 : index
    %c0_57 = arith.constant 0 : index
    %131 = vector.load %arg4[%c0_56, %c0_57] : memref<128x512xbf16, #tpu.memory_space<vmem>>, vector<128x512xbf16>
    %cst_58 = arith.constant dense<0.000000e+00> : vector<8x512xf32>
    %132 = tpu.matmul %130, %131, %cst_58 {dimension_numbers = #tpu.dot_dimension_numbers<[1], [0], [0], [1], [0, 0, 1, 1], [], []>} : vector<8x128xbf16>, vector<128x512xbf16>, vector<8x512xf32> -> vector<8x512xf32>
    %c0_59 = arith.constant 0 : index
    %c0_60 = arith.constant 0 : index
    %133 = vector.load %arg5[%c0_59, %c0_60] : memref<1x512xf32, #tpu.memory_space<vmem>>, vector<1x512xf32>
    %134 = vector.broadcast %133 : vector<1x512xf32> to vector<8x512xf32>
    %135 = arith.addf %132, %134 : vector<8x512xf32>
    %136 = vector.extract_strided_slice %135 {offsets = [0, 0], sizes = [8, 128], strides = [1, 1]} : vector<8x512xf32> to vector<8x128xf32>
    %cst_61 = arith.constant 5.000000e-01 : f32
    %137 = vector.broadcast %cst_61 : f32 to vector<8x128xf32>
    %138 = arith.mulf %137, %136 : vector<8x128xf32>
    %139 = math.tanh %138 : vector<8x128xf32>
    %cst_62 = arith.constant 1.000000e+00 : f32
    %140 = vector.broadcast %cst_62 : f32 to vector<8x128xf32>
    %141 = arith.addf %139, %140 : vector<8x128xf32>
    %cst_63 = arith.constant 5.000000e-01 : f32
    %142 = vector.broadcast %cst_63 : f32 to vector<8x128xf32>
    %143 = arith.mulf %142, %141 : vector<8x128xf32>
    %144 = vector.extract_strided_slice %135 {offsets = [0, 128], sizes = [8, 128], strides = [1, 1]} : vector<8x512xf32> to vector<8x128xf32>
    %cst_64 = arith.constant 5.000000e-01 : f32
    %145 = vector.broadcast %cst_64 : f32 to vector<8x128xf32>
    %146 = arith.mulf %145, %144 : vector<8x128xf32>
    %147 = math.tanh %146 : vector<8x128xf32>
    %cst_65 = arith.constant 1.000000e+00 : f32
    %148 = vector.broadcast %cst_65 : f32 to vector<8x128xf32>
    %149 = arith.addf %147, %148 : vector<8x128xf32>
    %cst_66 = arith.constant 5.000000e-01 : f32
    %150 = vector.broadcast %cst_66 : f32 to vector<8x128xf32>
    %151 = arith.mulf %150, %149 : vector<8x128xf32>
    %152 = vector.extract_strided_slice %135 {offsets = [0, 256], sizes = [8, 128], strides = [1, 1]} : vector<8x512xf32> to vector<8x128xf32>
    %153 = math.tanh %152 : vector<8x128xf32>
    %154 = vector.extract_strided_slice %135 {offsets = [0, 384], sizes = [8, 128], strides = [1, 1]} : vector<8x512xf32> to vector<8x128xf32>
    %cst_67 = arith.constant 5.000000e-01 : f32
    %155 = vector.broadcast %cst_67 : f32 to vector<8x128xf32>
    %156 = arith.mulf %155, %154 : vector<8x128xf32>
    %157 = math.tanh %156 : vector<8x128xf32>
    %cst_68 = arith.constant 1.000000e+00 : f32
    %158 = vector.broadcast %cst_68 : f32 to vector<8x128xf32>
    %159 = arith.addf %157, %158 : vector<8x128xf32>
    %cst_69 = arith.constant 5.000000e-01 : f32
    %160 = vector.broadcast %cst_69 : f32 to vector<8x128xf32>
    %161 = arith.mulf %160, %159 : vector<8x128xf32>
    %162 = arith.mulf %151, %87 : vector<8x128xf32>
    %163 = arith.mulf %143, %153 : vector<8x128xf32>
    %164 = arith.addf %162, %163 : vector<8x128xf32>
    %165 = math.tanh %164 : vector<8x128xf32>
    %166 = arith.mulf %161, %165 : vector<8x128xf32>
    %c0_70 = arith.constant 0 : index
    %c128 = arith.constant 128 : index
    %167 = vector.load %arg12[%c0_70, %c128] : memref<8x1024xf32, #tpu.memory_space<vmem>>, vector<8x128xf32>
    tpu.vector_store %arg12[%c0_70, %c128], %166 {strides = array<i32>} : memref<8x1024xf32, #tpu.memory_space<vmem>>, vector<8x128xf32>,
    %c16 = arith.constant 16 : index
    %c0_71 = arith.constant 0 : index
    %168 = vector.load %arg11[%c16, %c0_71] : memref<64x512xf32, #tpu.memory_space<vmem>>, vector<8x512xf32>
    %169 = vector.extract_strided_slice %127 {offsets = [0, 0], sizes = [8, 64], strides = [1, 1]} : vector<8x128xf32> to vector<8x64xf32>
    %170 = arith.truncf %169 : vector<8x64xf32> to vector<8x64xbf16>
    %c0_72 = arith.constant 0 : index
    %c0_73 = arith.constant 0 : index
    %171 = vector.load %arg3[%c0_72, %c0_73] : memref<64x512xbf16, #tpu.memory_space<vmem>>, vector<64x512xbf16>
    %cst_74 = arith.constant dense<0.000000e+00> : vector<8x512xf32>
    %172 = tpu.matmul %170, %171, %cst_74 {dimension_numbers = #tpu.dot_dimension_numbers<[1], [0], [0], [1], [0, 0, 1, 1], [], []>} : vector<8x64xbf16>, vector<64x512xbf16>, vector<8x512xf32> -> vector<8x512xf32>
    %173 = arith.addf %168, %172 : vector<8x512xf32>
    %174 = vector.extract_strided_slice %173 {offsets = [0, 0], sizes = [8, 128], strides = [1, 1]} : vector<8x512xf32> to vector<8x128xf32>
    %cst_75 = arith.constant 5.000000e-01 : f32
    %175 = vector.broadcast %cst_75 : f32 to vector<8x128xf32>
    %176 = arith.mulf %175, %174 : vector<8x128xf32>
    %177 = math.tanh %176 : vector<8x128xf32>
    %cst_76 = arith.constant 1.000000e+00 : f32
    %178 = vector.broadcast %cst_76 : f32 to vector<8x128xf32>
    %179 = arith.addf %177, %178 : vector<8x128xf32>
    %cst_77 = arith.constant 5.000000e-01 : f32
    %180 = vector.broadcast %cst_77 : f32 to vector<8x128xf32>
    %181 = arith.mulf %180, %179 : vector<8x128xf32>
    %182 = vector.extract_strided_slice %173 {offsets = [0, 128], sizes = [8, 128], strides = [1, 1]} : vector<8x512xf32> to vector<8x128xf32>
    %cst_78 = arith.constant 5.000000e-01 : f32
    %183 = vector.broadcast %cst_78 : f32 to vector<8x128xf32>
    %184 = arith.mulf %183, %182 : vector<8x128xf32>
    %185 = math.tanh %184 : vector<8x128xf32>
    %cst_79 = arith.constant 1.000000e+00 : f32
    %186 = vector.broadcast %cst_79 : f32 to vector<8x128xf32>
    %187 = arith.addf %185, %186 : vector<8x128xf32>
    %cst_80 = arith.constant 5.000000e-01 : f32
    %188 = vector.broadcast %cst_80 : f32 to vector<8x128xf32>
    %189 = arith.mulf %188, %187 : vector<8x128xf32>
    %190 = vector.extract_strided_slice %173 {offsets = [0, 256], sizes = [8, 128], strides = [1, 1]} : vector<8x512xf32> to vector<8x128xf32>
    %191 = math.tanh %190 : vector<8x128xf32>
    %192 = vector.extract_strided_slice %173 {offsets = [0, 384], sizes = [8, 128], strides = [1, 1]} : vector<8x512xf32> to vector<8x128xf32>
    %cst_81 = arith.constant 5.000000e-01 : f32
    %193 = vector.broadcast %cst_81 : f32 to vector<8x128xf32>
    %194 = arith.mulf %193, %192 : vector<8x128xf32>
    %195 = math.tanh %194 : vector<8x128xf32>
    %cst_82 = arith.constant 1.000000e+00 : f32
    %196 = vector.broadcast %cst_82 : f32 to vector<8x128xf32>
    %197 = arith.addf %195, %196 : vector<8x128xf32>
    %cst_83 = arith.constant 5.000000e-01 : f32
    %198 = vector.broadcast %cst_83 : f32 to vector<8x128xf32>
    %199 = arith.mulf %198, %197 : vector<8x128xf32>
    %200 = arith.mulf %189, %125 : vector<8x128xf32>
    %201 = arith.mulf %181, %191 : vector<8x128xf32>
    %202 = arith.addf %200, %201 : vector<8x128xf32>
    %203 = math.tanh %202 : vector<8x128xf32>
    %204 = arith.mulf %199, %203 : vector<8x128xf32>
    %c64_i32_84 = arith.constant 64 : i32
    %205 = tpu.dynamic_rotate %166 by %c64_i32_84 dim 1 : vector<8x128xf32>, i32 -> vector<8x128xf32>
    %206 = arith.select %13, %204, %205 : vector<8x128xi1>, vector<8x128xf32>
    %207 = arith.truncf %206 : vector<8x128xf32> to vector<8x128xbf16>
    %c0_85 = arith.constant 0 : index
    %c0_86 = arith.constant 0 : index
    %208 = vector.load %arg4[%c0_85, %c0_86] : memref<128x512xbf16, #tpu.memory_space<vmem>>, vector<128x512xbf16>
    %cst_87 = arith.constant dense<0.000000e+00> : vector<8x512xf32>
    %209 = tpu.matmul %207, %208, %cst_87 {dimension_numbers = #tpu.dot_dimension_numbers<[1], [0], [0], [1], [0, 0, 1, 1], [], []>} : vector<8x128xbf16>, vector<128x512xbf16>, vector<8x512xf32> -> vector<8x512xf32>
    %c0_88 = arith.constant 0 : index
    %c0_89 = arith.constant 0 : index
    %210 = vector.load %arg5[%c0_88, %c0_89] : memref<1x512xf32, #tpu.memory_space<vmem>>, vector<1x512xf32>
    %211 = vector.broadcast %210 : vector<1x512xf32> to vector<8x512xf32>
    %212 = arith.addf %209, %211 : vector<8x512xf32>
    %213 = vector.extract_strided_slice %212 {offsets = [0, 0], sizes = [8, 128], strides = [1, 1]} : vector<8x512xf32> to vector<8x128xf32>
    %cst_90 = arith.constant 5.000000e-01 : f32
    %214 = vector.broadcast %cst_90 : f32 to vector<8x128xf32>
    %215 = arith.mulf %214, %213 : vector<8x128xf32>
    %216 = math.tanh %215 : vector<8x128xf32>
    %cst_91 = arith.constant 1.000000e+00 : f32
    %217 = vector.broadcast %cst_91 : f32 to vector<8x128xf32>
    %218 = arith.addf %216, %217 : vector<8x128xf32>
    %cst_92 = arith.constant 5.000000e-01 : f32
    %219 = vector.broadcast %cst_92 : f32 to vector<8x128xf32>
    %220 = arith.mulf %219, %218 : vector<8x128xf32>
    %221 = vector.extract_strided_slice %212 {offsets = [0, 128], sizes = [8, 128], strides = [1, 1]} : vector<8x512xf32> to vector<8x128xf32>
    %cst_93 = arith.constant 5.000000e-01 : f32
    %222 = vector.broadcast %cst_93 : f32 to vector<8x128xf32>
    %223 = arith.mulf %222, %221 : vector<8x128xf32>
    %224 = math.tanh %223 : vector<8x128xf32>
    %cst_94 = arith.constant 1.000000e+00 : f32
    %225 = vector.broadcast %cst_94 : f32 to vector<8x128xf32>
    %226 = arith.addf %224, %225 : vector<8x128xf32>
    %cst_95 = arith.constant 5.000000e-01 : f32
    %227 = vector.broadcast %cst_95 : f32 to vector<8x128xf32>
    %228 = arith.mulf %227, %226 : vector<8x128xf32>
    %229 = vector.extract_strided_slice %212 {offsets = [0, 256], sizes = [8, 128], strides = [1, 1]} : vector<8x512xf32> to vector<8x128xf32>
    %230 = math.tanh %229 : vector<8x128xf32>
    %231 = vector.extract_strided_slice %212 {offsets = [0, 384], sizes = [8, 128], strides = [1, 1]} : vector<8x512xf32> to vector<8x128xf32>
    %cst_96 = arith.constant 5.000000e-01 : f32
    %232 = vector.broadcast %cst_96 : f32 to vector<8x128xf32>
    %233 = arith.mulf %232, %231 : vector<8x128xf32>
    %234 = math.tanh %233 : vector<8x128xf32>
    %cst_97 = arith.constant 1.000000e+00 : f32
    %235 = vector.broadcast %cst_97 : f32 to vector<8x128xf32>
    %236 = arith.addf %234, %235 : vector<8x128xf32>
    %cst_98 = arith.constant 5.000000e-01 : f32
    %237 = vector.broadcast %cst_98 : f32 to vector<8x128xf32>
    %238 = arith.mulf %237, %236 : vector<8x128xf32>
    %239 = arith.mulf %228, %164 : vector<8x128xf32>
    %240 = arith.mulf %220, %230 : vector<8x128xf32>
    %241 = arith.addf %239, %240 : vector<8x128xf32>
    %242 = math.tanh %241 : vector<8x128xf32>
    %243 = arith.mulf %238, %242 : vector<8x128xf32>
    %c0_99 = arith.constant 0 : index
    %c256 = arith.constant 256 : index
    %244 = vector.load %arg12[%c0_99, %c256] : memref<8x1024xf32, #tpu.memory_space<vmem>>, vector<8x128xf32>
    tpu.vector_store %arg12[%c0_99, %c256], %243 {strides = array<i32>} : memref<8x1024xf32, #tpu.memory_space<vmem>>, vector<8x128xf32>,
    %c24 = arith.constant 24 : index
    %c0_100 = arith.constant 0 : index
    %245 = vector.load %arg11[%c24, %c0_100] : memref<64x512xf32, #tpu.memory_space<vmem>>, vector<8x512xf32>
    %246 = vector.extract_strided_slice %204 {offsets = [0, 0], sizes = [8, 64], strides = [1, 1]} : vector<8x128xf32> to vector<8x64xf32>
    %247 = arith.truncf %246 : vector<8x64xf32> to vector<8x64xbf16>
    %c0_101 = arith.constant 0 : index
    %c0_102 = arith.constant 0 : index
    %248 = vector.load %arg3[%c0_101, %c0_102] : memref<64x512xbf16, #tpu.memory_space<vmem>>, vector<64x512xbf16>
    %cst_103 = arith.constant dense<0.000000e+00> : vector<8x512xf32>
    %249 = tpu.matmul %247, %248, %cst_103 {dimension_numbers = #tpu.dot_dimension_numbers<[1], [0], [0], [1], [0, 0, 1, 1], [], []>} : vector<8x64xbf16>, vector<64x512xbf16>, vector<8x512xf32> -> vector<8x512xf32>
    %250 = arith.addf %245, %249 : vector<8x512xf32>
    %251 = vector.extract_strided_slice %250 {offsets = [0, 0], sizes = [8, 128], strides = [1, 1]} : vector<8x512xf32> to vector<8x128xf32>
    %cst_104 = arith.constant 5.000000e-01 : f32
    %252 = vector.broadcast %cst_104 : f32 to vector<8x128xf32>
    %253 = arith.mulf %252, %251 : vector<8x128xf32>
    %254 = math.tanh %253 : vector<8x128xf32>
    %cst_105 = arith.constant 1.000000e+00 : f32
    %255 = vector.broadcast %cst_105 : f32 to vector<8x128xf32>
    %256 = arith.addf %254, %255 : vector<8x128xf32>
    %cst_106 = arith.constant 5.000000e-01 : f32
    %257 = vector.broadcast %cst_106 : f32 to vector<8x128xf32>
    %258 = arith.mulf %257, %256 : vector<8x128xf32>
    %259 = vector.extract_strided_slice %250 {offsets = [0, 128], sizes = [8, 128], strides = [1, 1]} : vector<8x512xf32> to vector<8x128xf32>
    %cst_107 = arith.constant 5.000000e-01 : f32
    %260 = vector.broadcast %cst_107 : f32 to vector<8x128xf32>
    %261 = arith.mulf %260, %259 : vector<8x128xf32>
    %262 = math.tanh %261 : vector<8x128xf32>
    %cst_108 = arith.constant 1.000000e+00 : f32
    %263 = vector.broadcast %cst_108 : f32 to vector<8x128xf32>
    %264 = arith.addf %262, %263 : vector<8x128xf32>
    %cst_109 = arith.constant 5.000000e-01 : f32
    %265 = vector.broadcast %cst_109 : f32 to vector<8x128xf32>
    %266 = arith.mulf %265, %264 : vector<8x128xf32>
    %267 = vector.extract_strided_slice %250 {offsets = [0, 256], sizes = [8, 128], strides = [1, 1]} : vector<8x512xf32> to vector<8x128xf32>
    %268 = math.tanh %267 : vector<8x128xf32>
    %269 = vector.extract_strided_slice %250 {offsets = [0, 384], sizes = [8, 128], strides = [1, 1]} : vector<8x512xf32> to vector<8x128xf32>
    %cst_110 = arith.constant 5.000000e-01 : f32
    %270 = vector.broadcast %cst_110 : f32 to vector<8x128xf32>
    %271 = arith.mulf %270, %269 : vector<8x128xf32>
    %272 = math.tanh %271 : vector<8x128xf32>
    %cst_111 = arith.constant 1.000000e+00 : f32
    %273 = vector.broadcast %cst_111 : f32 to vector<8x128xf32>
    %274 = arith.addf %272, %273 : vector<8x128xf32>
    %cst_112 = arith.constant 5.000000e-01 : f32
    %275 = vector.broadcast %cst_112 : f32 to vector<8x128xf32>
    %276 = arith.mulf %275, %274 : vector<8x128xf32>
    %277 = arith.mulf %266, %202 : vector<8x128xf32>
    %278 = arith.mulf %258, %268 : vector<8x128xf32>
    %279 = arith.addf %277, %278 : vector<8x128xf32>
    %280 = math.tanh %279 : vector<8x128xf32>
    %281 = arith.mulf %276, %280 : vector<8x128xf32>
    %c64_i32_113 = arith.constant 64 : i32
    %282 = tpu.dynamic_rotate %243 by %c64_i32_113 dim 1 : vector<8x128xf32>, i32 -> vector<8x128xf32>
    %283 = arith.select %13, %281, %282 : vector<8x128xi1>, vector<8x128xf32>
    %284 = arith.truncf %283 : vector<8x128xf32> to vector<8x128xbf16>
    %c0_114 = arith.constant 0 : index
    %c0_115 = arith.constant 0 : index
    %285 = vector.load %arg4[%c0_114, %c0_115] : memref<128x512xbf16, #tpu.memory_space<vmem>>, vector<128x512xbf16>
    %cst_116 = arith.constant dense<0.000000e+00> : vector<8x512xf32>
    %286 = tpu.matmul %284, %285, %cst_116 {dimension_numbers = #tpu.dot_dimension_numbers<[1], [0], [0], [1], [0, 0, 1, 1], [], []>} : vector<8x128xbf16>, vector<128x512xbf16>, vector<8x512xf32> -> vector<8x512xf32>
    %c0_117 = arith.constant 0 : index
    %c0_118 = arith.constant 0 : index
    %287 = vector.load %arg5[%c0_117, %c0_118] : memref<1x512xf32, #tpu.memory_space<vmem>>, vector<1x512xf32>
    %288 = vector.broadcast %287 : vector<1x512xf32> to vector<8x512xf32>
    %289 = arith.addf %286, %288 : vector<8x512xf32>
    %290 = vector.extract_strided_slice %289 {offsets = [0, 0], sizes = [8, 128], strides = [1, 1]} : vector<8x512xf32> to vector<8x128xf32>
    %cst_119 = arith.constant 5.000000e-01 : f32
    %291 = vector.broadcast %cst_119 : f32 to vector<8x128xf32>
    %292 = arith.mulf %291, %290 : vector<8x128xf32>
    %293 = math.tanh %292 : vector<8x128xf32>
    %cst_120 = arith.constant 1.000000e+00 : f32
    %294 = vector.broadcast %cst_120 : f32 to vector<8x128xf32>
    %295 = arith.addf %293, %294 : vector<8x128xf32>
    %cst_121 = arith.constant 5.000000e-01 : f32
    %296 = vector.broadcast %cst_121 : f32 to vector<8x128xf32>
    %297 = arith.mulf %296, %295 : vector<8x128xf32>
    %298 = vector.extract_strided_slice %289 {offsets = [0, 128], sizes = [8, 128], strides = [1, 1]} : vector<8x512xf32> to vector<8x128xf32>
    %cst_122 = arith.constant 5.000000e-01 : f32
    %299 = vector.broadcast %cst_122 : f32 to vector<8x128xf32>
    %300 = arith.mulf %299, %298 : vector<8x128xf32>
    %301 = math.tanh %300 : vector<8x128xf32>
    %cst_123 = arith.constant 1.000000e+00 : f32
    %302 = vector.broadcast %cst_123 : f32 to vector<8x128xf32>
    %303 = arith.addf %301, %302 : vector<8x128xf32>
    %cst_124 = arith.constant 5.000000e-01 : f32
    %304 = vector.broadcast %cst_124 : f32 to vector<8x128xf32>
    %305 = arith.mulf %304, %303 : vector<8x128xf32>
    %306 = vector.extract_strided_slice %289 {offsets = [0, 256], sizes = [8, 128], strides = [1, 1]} : vector<8x512xf32> to vector<8x128xf32>
    %307 = math.tanh %306 : vector<8x128xf32>
    %308 = vector.extract_strided_slice %289 {offsets = [0, 384], sizes = [8, 128], strides = [1, 1]} : vector<8x512xf32> to vector<8x128xf32>
    %cst_125 = arith.constant 5.000000e-01 : f32
    %309 = vector.broadcast %cst_125 : f32 to vector<8x128xf32>
    %310 = arith.mulf %309, %308 : vector<8x128xf32>
    %311 = math.tanh %310 : vector<8x128xf32>
    %cst_126 = arith.constant 1.000000e+00 : f32
    %312 = vector.broadcast %cst_126 : f32 to vector<8x128xf32>
    %313 = arith.addf %311, %312 : vector<8x128xf32>
    %cst_127 = arith.constant 5.000000e-01 : f32
    %314 = vector.broadcast %cst_127 : f32 to vector<8x128xf32>
    %315 = arith.mulf %314, %313 : vector<8x128xf32>
    %316 = arith.mulf %305, %241 : vector<8x128xf32>
    %317 = arith.mulf %297, %307 : vector<8x128xf32>
    %318 = arith.addf %316, %317 : vector<8x128xf32>
    %319 = math.tanh %318 : vector<8x128xf32>
    %320 = arith.mulf %315, %319 : vector<8x128xf32>
    %c0_128 = arith.constant 0 : index
    %c384 = arith.constant 384 : index
    %321 = vector.load %arg12[%c0_128, %c384] : memref<8x1024xf32, #tpu.memory_space<vmem>>, vector<8x128xf32>
    tpu.vector_store %arg12[%c0_128, %c384], %320 {strides = array<i32>} : memref<8x1024xf32, #tpu.memory_space<vmem>>, vector<8x128xf32>,
    %c32 = arith.constant 32 : index
    %c0_129 = arith.constant 0 : index
    %322 = vector.load %arg11[%c32, %c0_129] : memref<64x512xf32, #tpu.memory_space<vmem>>, vector<8x512xf32>
    %323 = vector.extract_strided_slice %281 {offsets = [0, 0], sizes = [8, 64], strides = [1, 1]} : vector<8x128xf32> to vector<8x64xf32>
    %324 = arith.truncf %323 : vector<8x64xf32> to vector<8x64xbf16>
    %c0_130 = arith.constant 0 : index
    %c0_131 = arith.constant 0 : index
    %325 = vector.load %arg3[%c0_130, %c0_131] : memref<64x512xbf16, #tpu.memory_space<vmem>>, vector<64x512xbf16>
    %cst_132 = arith.constant dense<0.000000e+00> : vector<8x512xf32>
    %326 = tpu.matmul %324, %325, %cst_132 {dimension_numbers = #tpu.dot_dimension_numbers<[1], [0], [0], [1], [0, 0, 1, 1], [], []>} : vector<8x64xbf16>, vector<64x512xbf16>, vector<8x512xf32> -> vector<8x512xf32>
    %327 = arith.addf %322, %326 : vector<8x512xf32>
    %328 = vector.extract_strided_slice %327 {offsets = [0, 0], sizes = [8, 128], strides = [1, 1]} : vector<8x512xf32> to vector<8x128xf32>
    %cst_133 = arith.constant 5.000000e-01 : f32
    %329 = vector.broadcast %cst_133 : f32 to vector<8x128xf32>
    %330 = arith.mulf %329, %328 : vector<8x128xf32>
    %331 = math.tanh %330 : vector<8x128xf32>
    %cst_134 = arith.constant 1.000000e+00 : f32
    %332 = vector.broadcast %cst_134 : f32 to vector<8x128xf32>
    %333 = arith.addf %331, %332 : vector<8x128xf32>
    %cst_135 = arith.constant 5.000000e-01 : f32
    %334 = vector.broadcast %cst_135 : f32 to vector<8x128xf32>
    %335 = arith.mulf %334, %333 : vector<8x128xf32>
    %336 = vector.extract_strided_slice %327 {offsets = [0, 128], sizes = [8, 128], strides = [1, 1]} : vector<8x512xf32> to vector<8x128xf32>
    %cst_136 = arith.constant 5.000000e-01 : f32
    %337 = vector.broadcast %cst_136 : f32 to vector<8x128xf32>
    %338 = arith.mulf %337, %336 : vector<8x128xf32>
    %339 = math.tanh %338 : vector<8x128xf32>
    %cst_137 = arith.constant 1.000000e+00 : f32
    %340 = vector.broadcast %cst_137 : f32 to vector<8x128xf32>
    %341 = arith.addf %339, %340 : vector<8x128xf32>
    %cst_138 = arith.constant 5.000000e-01 : f32
    %342 = vector.broadcast %cst_138 : f32 to vector<8x128xf32>
    %343 = arith.mulf %342, %341 : vector<8x128xf32>
    %344 = vector.extract_strided_slice %327 {offsets = [0, 256], sizes = [8, 128], strides = [1, 1]} : vector<8x512xf32> to vector<8x128xf32>
    %345 = math.tanh %344 : vector<8x128xf32>
    %346 = vector.extract_strided_slice %327 {offsets = [0, 384], sizes = [8, 128], strides = [1, 1]} : vector<8x512xf32> to vector<8x128xf32>
    %cst_139 = arith.constant 5.000000e-01 : f32
    %347 = vector.broadcast %cst_139 : f32 to vector<8x128xf32>
    %348 = arith.mulf %347, %346 : vector<8x128xf32>
    %349 = math.tanh %348 : vector<8x128xf32>
    %cst_140 = arith.constant 1.000000e+00 : f32
    %350 = vector.broadcast %cst_140 : f32 to vector<8x128xf32>
    %351 = arith.addf %349, %350 : vector<8x128xf32>
    %cst_141 = arith.constant 5.000000e-01 : f32
    %352 = vector.broadcast %cst_141 : f32 to vector<8x128xf32>
    %353 = arith.mulf %352, %351 : vector<8x128xf32>
    %354 = arith.mulf %343, %279 : vector<8x128xf32>
    %355 = arith.mulf %335, %345 : vector<8x128xf32>
    %356 = arith.addf %354, %355 : vector<8x128xf32>
    %357 = math.tanh %356 : vector<8x128xf32>
    %358 = arith.mulf %353, %357 : vector<8x128xf32>
    %c64_i32_142 = arith.constant 64 : i32
    %359 = tpu.dynamic_rotate %320 by %c64_i32_142 dim 1 : vector<8x128xf32>, i32 -> vector<8x128xf32>
    %360 = arith.select %13, %358, %359 : vector<8x128xi1>, vector<8x128xf32>
    %361 = arith.truncf %360 : vector<8x128xf32> to vector<8x128xbf16>
    %c0_143 = arith.constant 0 : index
    %c0_144 = arith.constant 0 : index
    %362 = vector.load %arg4[%c0_143, %c0_144] : memref<128x512xbf16, #tpu.memory_space<vmem>>, vector<128x512xbf16>
    %cst_145 = arith.constant dense<0.000000e+00> : vector<8x512xf32>
    %363 = tpu.matmul %361, %362, %cst_145 {dimension_numbers = #tpu.dot_dimension_numbers<[1], [0], [0], [1], [0, 0, 1, 1], [], []>} : vector<8x128xbf16>, vector<128x512xbf16>, vector<8x512xf32> -> vector<8x512xf32>
    %c0_146 = arith.constant 0 : index
    %c0_147 = arith.constant 0 : index
    %364 = vector.load %arg5[%c0_146, %c0_147] : memref<1x512xf32, #tpu.memory_space<vmem>>, vector<1x512xf32>
    %365 = vector.broadcast %364 : vector<1x512xf32> to vector<8x512xf32>
    %366 = arith.addf %363, %365 : vector<8x512xf32>
    %367 = vector.extract_strided_slice %366 {offsets = [0, 0], sizes = [8, 128], strides = [1, 1]} : vector<8x512xf32> to vector<8x128xf32>
    %cst_148 = arith.constant 5.000000e-01 : f32
    %368 = vector.broadcast %cst_148 : f32 to vector<8x128xf32>
    %369 = arith.mulf %368, %367 : vector<8x128xf32>
    %370 = math.tanh %369 : vector<8x128xf32>
    %cst_149 = arith.constant 1.000000e+00 : f32
    %371 = vector.broadcast %cst_149 : f32 to vector<8x128xf32>
    %372 = arith.addf %370, %371 : vector<8x128xf32>
    %cst_150 = arith.constant 5.000000e-01 : f32
    %373 = vector.broadcast %cst_150 : f32 to vector<8x128xf32>
    %374 = arith.mulf %373, %372 : vector<8x128xf32>
    %375 = vector.extract_strided_slice %366 {offsets = [0, 128], sizes = [8, 128], strides = [1, 1]} : vector<8x512xf32> to vector<8x128xf32>
    %cst_151 = arith.constant 5.000000e-01 : f32
    %376 = vector.broadcast %cst_151 : f32 to vector<8x128xf32>
    %377 = arith.mulf %376, %375 : vector<8x128xf32>
    %378 = math.tanh %377 : vector<8x128xf32>
    %cst_152 = arith.constant 1.000000e+00 : f32
    %379 = vector.broadcast %cst_152 : f32 to vector<8x128xf32>
    %380 = arith.addf %378, %379 : vector<8x128xf32>
    %cst_153 = arith.constant 5.000000e-01 : f32
    %381 = vector.broadcast %cst_153 : f32 to vector<8x128xf32>
    %382 = arith.mulf %381, %380 : vector<8x128xf32>
    %383 = vector.extract_strided_slice %366 {offsets = [0, 256], sizes = [8, 128], strides = [1, 1]} : vector<8x512xf32> to vector<8x128xf32>
    %384 = math.tanh %383 : vector<8x128xf32>
    %385 = vector.extract_strided_slice %366 {offsets = [0, 384], sizes = [8, 128], strides = [1, 1]} : vector<8x512xf32> to vector<8x128xf32>
    %cst_154 = arith.constant 5.000000e-01 : f32
    %386 = vector.broadcast %cst_154 : f32 to vector<8x128xf32>
    %387 = arith.mulf %386, %385 : vector<8x128xf32>
    %388 = math.tanh %387 : vector<8x128xf32>
    %cst_155 = arith.constant 1.000000e+00 : f32
    %389 = vector.broadcast %cst_155 : f32 to vector<8x128xf32>
    %390 = arith.addf %388, %389 : vector<8x128xf32>
    %cst_156 = arith.constant 5.000000e-01 : f32
    %391 = vector.broadcast %cst_156 : f32 to vector<8x128xf32>
    %392 = arith.mulf %391, %390 : vector<8x128xf32>
    %393 = arith.mulf %382, %318 : vector<8x128xf32>
    %394 = arith.mulf %374, %384 : vector<8x128xf32>
    %395 = arith.addf %393, %394 : vector<8x128xf32>
    %396 = math.tanh %395 : vector<8x128xf32>
    %397 = arith.mulf %392, %396 : vector<8x128xf32>
    %c0_157 = arith.constant 0 : index
    %c512 = arith.constant 512 : index
    %398 = vector.load %arg12[%c0_157, %c512] : memref<8x1024xf32, #tpu.memory_space<vmem>>, vector<8x128xf32>
    tpu.vector_store %arg12[%c0_157, %c512], %397 {strides = array<i32>} : memref<8x1024xf32, #tpu.memory_space<vmem>>, vector<8x128xf32>,
    %c40 = arith.constant 40 : index
    %c0_158 = arith.constant 0 : index
    %399 = vector.load %arg11[%c40, %c0_158] : memref<64x512xf32, #tpu.memory_space<vmem>>, vector<8x512xf32>
    %400 = vector.extract_strided_slice %358 {offsets = [0, 0], sizes = [8, 64], strides = [1, 1]} : vector<8x128xf32> to vector<8x64xf32>
    %401 = arith.truncf %400 : vector<8x64xf32> to vector<8x64xbf16>
    %c0_159 = arith.constant 0 : index
    %c0_160 = arith.constant 0 : index
    %402 = vector.load %arg3[%c0_159, %c0_160] : memref<64x512xbf16, #tpu.memory_space<vmem>>, vector<64x512xbf16>
    %cst_161 = arith.constant dense<0.000000e+00> : vector<8x512xf32>
    %403 = tpu.matmul %401, %402, %cst_161 {dimension_numbers = #tpu.dot_dimension_numbers<[1], [0], [0], [1], [0, 0, 1, 1], [], []>} : vector<8x64xbf16>, vector<64x512xbf16>, vector<8x512xf32> -> vector<8x512xf32>
    %404 = arith.addf %399, %403 : vector<8x512xf32>
    %405 = vector.extract_strided_slice %404 {offsets = [0, 0], sizes = [8, 128], strides = [1, 1]} : vector<8x512xf32> to vector<8x128xf32>
    %cst_162 = arith.constant 5.000000e-01 : f32
    %406 = vector.broadcast %cst_162 : f32 to vector<8x128xf32>
    %407 = arith.mulf %406, %405 : vector<8x128xf32>
    %408 = math.tanh %407 : vector<8x128xf32>
    %cst_163 = arith.constant 1.000000e+00 : f32
    %409 = vector.broadcast %cst_163 : f32 to vector<8x128xf32>
    %410 = arith.addf %408, %409 : vector<8x128xf32>
    %cst_164 = arith.constant 5.000000e-01 : f32
    %411 = vector.broadcast %cst_164 : f32 to vector<8x128xf32>
    %412 = arith.mulf %411, %410 : vector<8x128xf32>
    %413 = vector.extract_strided_slice %404 {offsets = [0, 128], sizes = [8, 128], strides = [1, 1]} : vector<8x512xf32> to vector<8x128xf32>
    %cst_165 = arith.constant 5.000000e-01 : f32
    %414 = vector.broadcast %cst_165 : f32 to vector<8x128xf32>
    %415 = arith.mulf %414, %413 : vector<8x128xf32>
    %416 = math.tanh %415 : vector<8x128xf32>
    %cst_166 = arith.constant 1.000000e+00 : f32
    %417 = vector.broadcast %cst_166 : f32 to vector<8x128xf32>
    %418 = arith.addf %416, %417 : vector<8x128xf32>
    %cst_167 = arith.constant 5.000000e-01 : f32
    %419 = vector.broadcast %cst_167 : f32 to vector<8x128xf32>
    %420 = arith.mulf %419, %418 : vector<8x128xf32>
    %421 = vector.extract_strided_slice %404 {offsets = [0, 256], sizes = [8, 128], strides = [1, 1]} : vector<8x512xf32> to vector<8x128xf32>
    %422 = math.tanh %421 : vector<8x128xf32>
    %423 = vector.extract_strided_slice %404 {offsets = [0, 384], sizes = [8, 128], strides = [1, 1]} : vector<8x512xf32> to vector<8x128xf32>
    %cst_168 = arith.constant 5.000000e-01 : f32
    %424 = vector.broadcast %cst_168 : f32 to vector<8x128xf32>
    %425 = arith.mulf %424, %423 : vector<8x128xf32>
    %426 = math.tanh %425 : vector<8x128xf32>
    %cst_169 = arith.constant 1.000000e+00 : f32
    %427 = vector.broadcast %cst_169 : f32 to vector<8x128xf32>
    %428 = arith.addf %426, %427 : vector<8x128xf32>
    %cst_170 = arith.constant 5.000000e-01 : f32
    %429 = vector.broadcast %cst_170 : f32 to vector<8x128xf32>
    %430 = arith.mulf %429, %428 : vector<8x128xf32>
    %431 = arith.mulf %420, %356 : vector<8x128xf32>
    %432 = arith.mulf %412, %422 : vector<8x128xf32>
    %433 = arith.addf %431, %432 : vector<8x128xf32>
    %434 = math.tanh %433 : vector<8x128xf32>
    %435 = arith.mulf %430, %434 : vector<8x128xf32>
    %c64_i32_171 = arith.constant 64 : i32
    %436 = tpu.dynamic_rotate %397 by %c64_i32_171 dim 1 : vector<8x128xf32>, i32 -> vector<8x128xf32>
    %437 = arith.select %13, %435, %436 : vector<8x128xi1>, vector<8x128xf32>
    %438 = arith.truncf %437 : vector<8x128xf32> to vector<8x128xbf16>
    %c0_172 = arith.constant 0 : index
    %c0_173 = arith.constant 0 : index
    %439 = vector.load %arg4[%c0_172, %c0_173] : memref<128x512xbf16, #tpu.memory_space<vmem>>, vector<128x512xbf16>
    %cst_174 = arith.constant dense<0.000000e+00> : vector<8x512xf32>
    %440 = tpu.matmul %438, %439, %cst_174 {dimension_numbers = #tpu.dot_dimension_numbers<[1], [0], [0], [1], [0, 0, 1, 1], [], []>} : vector<8x128xbf16>, vector<128x512xbf16>, vector<8x512xf32> -> vector<8x512xf32>
    %c0_175 = arith.constant 0 : index
    %c0_176 = arith.constant 0 : index
    %441 = vector.load %arg5[%c0_175, %c0_176] : memref<1x512xf32, #tpu.memory_space<vmem>>, vector<1x512xf32>
    %442 = vector.broadcast %441 : vector<1x512xf32> to vector<8x512xf32>
    %443 = arith.addf %440, %442 : vector<8x512xf32>
    %444 = vector.extract_strided_slice %443 {offsets = [0, 0], sizes = [8, 128], strides = [1, 1]} : vector<8x512xf32> to vector<8x128xf32>
    %cst_177 = arith.constant 5.000000e-01 : f32
    %445 = vector.broadcast %cst_177 : f32 to vector<8x128xf32>
    %446 = arith.mulf %445, %444 : vector<8x128xf32>
    %447 = math.tanh %446 : vector<8x128xf32>
    %cst_178 = arith.constant 1.000000e+00 : f32
    %448 = vector.broadcast %cst_178 : f32 to vector<8x128xf32>
    %449 = arith.addf %447, %448 : vector<8x128xf32>
    %cst_179 = arith.constant 5.000000e-01 : f32
    %450 = vector.broadcast %cst_179 : f32 to vector<8x128xf32>
    %451 = arith.mulf %450, %449 : vector<8x128xf32>
    %452 = vector.extract_strided_slice %443 {offsets = [0, 128], sizes = [8, 128], strides = [1, 1]} : vector<8x512xf32> to vector<8x128xf32>
    %cst_180 = arith.constant 5.000000e-01 : f32
    %453 = vector.broadcast %cst_180 : f32 to vector<8x128xf32>
    %454 = arith.mulf %453, %452 : vector<8x128xf32>
    %455 = math.tanh %454 : vector<8x128xf32>
    %cst_181 = arith.constant 1.000000e+00 : f32
    %456 = vector.broadcast %cst_181 : f32 to vector<8x128xf32>
    %457 = arith.addf %455, %456 : vector<8x128xf32>
    %cst_182 = arith.constant 5.000000e-01 : f32
    %458 = vector.broadcast %cst_182 : f32 to vector<8x128xf32>
    %459 = arith.mulf %458, %457 : vector<8x128xf32>
    %460 = vector.extract_strided_slice %443 {offsets = [0, 256], sizes = [8, 128], strides = [1, 1]} : vector<8x512xf32> to vector<8x128xf32>
    %461 = math.tanh %460 : vector<8x128xf32>
    %462 = vector.extract_strided_slice %443 {offsets = [0, 384], sizes = [8, 128], strides = [1, 1]} : vector<8x512xf32> to vector<8x128xf32>
    %cst_183 = arith.constant 5.000000e-01 : f32
    %463 = vector.broadcast %cst_183 : f32 to vector<8x128xf32>
    %464 = arith.mulf %463, %462 : vector<8x128xf32>
    %465 = math.tanh %464 : vector<8x128xf32>
    %cst_184 = arith.constant 1.000000e+00 : f32
    %466 = vector.broadcast %cst_184 : f32 to vector<8x128xf32>
    %467 = arith.addf %465, %466 : vector<8x128xf32>
    %cst_185 = arith.constant 5.000000e-01 : f32
    %468 = vector.broadcast %cst_185 : f32 to vector<8x128xf32>
    %469 = arith.mulf %468, %467 : vector<8x128xf32>
    %470 = arith.mulf %459, %395 : vector<8x128xf32>
    %471 = arith.mulf %451, %461 : vector<8x128xf32>
    %472 = arith.addf %470, %471 : vector<8x128xf32>
    %473 = math.tanh %472 : vector<8x128xf32>
    %474 = arith.mulf %469, %473 : vector<8x128xf32>
    %c0_186 = arith.constant 0 : index
    %c640 = arith.constant 640 : index
    %475 = vector.load %arg12[%c0_186, %c640] : memref<8x1024xf32, #tpu.memory_space<vmem>>, vector<8x128xf32>
    tpu.vector_store %arg12[%c0_186, %c640], %474 {strides = array<i32>} : memref<8x1024xf32, #tpu.memory_space<vmem>>, vector<8x128xf32>,
    %c48 = arith.constant 48 : index
    %c0_187 = arith.constant 0 : index
    %476 = vector.load %arg11[%c48, %c0_187] : memref<64x512xf32, #tpu.memory_space<vmem>>, vector<8x512xf32>
    %477 = vector.extract_strided_slice %435 {offsets = [0, 0], sizes = [8, 64], strides = [1, 1]} : vector<8x128xf32> to vector<8x64xf32>
    %478 = arith.truncf %477 : vector<8x64xf32> to vector<8x64xbf16>
    %c0_188 = arith.constant 0 : index
    %c0_189 = arith.constant 0 : index
    %479 = vector.load %arg3[%c0_188, %c0_189] : memref<64x512xbf16, #tpu.memory_space<vmem>>, vector<64x512xbf16>
    %cst_190 = arith.constant dense<0.000000e+00> : vector<8x512xf32>
    %480 = tpu.matmul %478, %479, %cst_190 {dimension_numbers = #tpu.dot_dimension_numbers<[1], [0], [0], [1], [0, 0, 1, 1], [], []>} : vector<8x64xbf16>, vector<64x512xbf16>, vector<8x512xf32> -> vector<8x512xf32>
    %481 = arith.addf %476, %480 : vector<8x512xf32>
    %482 = vector.extract_strided_slice %481 {offsets = [0, 0], sizes = [8, 128], strides = [1, 1]} : vector<8x512xf32> to vector<8x128xf32>
    %cst_191 = arith.constant 5.000000e-01 : f32
    %483 = vector.broadcast %cst_191 : f32 to vector<8x128xf32>
    %484 = arith.mulf %483, %482 : vector<8x128xf32>
    %485 = math.tanh %484 : vector<8x128xf32>
    %cst_192 = arith.constant 1.000000e+00 : f32
    %486 = vector.broadcast %cst_192 : f32 to vector<8x128xf32>
    %487 = arith.addf %485, %486 : vector<8x128xf32>
    %cst_193 = arith.constant 5.000000e-01 : f32
    %488 = vector.broadcast %cst_193 : f32 to vector<8x128xf32>
    %489 = arith.mulf %488, %487 : vector<8x128xf32>
    %490 = vector.extract_strided_slice %481 {offsets = [0, 128], sizes = [8, 128], strides = [1, 1]} : vector<8x512xf32> to vector<8x128xf32>
    %cst_194 = arith.constant 5.000000e-01 : f32
    %491 = vector.broadcast %cst_194 : f32 to vector<8x128xf32>
    %492 = arith.mulf %491, %490 : vector<8x128xf32>
    %493 = math.tanh %492 : vector<8x128xf32>
    %cst_195 = arith.constant 1.000000e+00 : f32
    %494 = vector.broadcast %cst_195 : f32 to vector<8x128xf32>
    %495 = arith.addf %493, %494 : vector<8x128xf32>
    %cst_196 = arith.constant 5.000000e-01 : f32
    %496 = vector.broadcast %cst_196 : f32 to vector<8x128xf32>
    %497 = arith.mulf %496, %495 : vector<8x128xf32>
    %498 = vector.extract_strided_slice %481 {offsets = [0, 256], sizes = [8, 128], strides = [1, 1]} : vector<8x512xf32> to vector<8x128xf32>
    %499 = math.tanh %498 : vector<8x128xf32>
    %500 = vector.extract_strided_slice %481 {offsets = [0, 384], sizes = [8, 128], strides = [1, 1]} : vector<8x512xf32> to vector<8x128xf32>
    %cst_197 = arith.constant 5.000000e-01 : f32
    %501 = vector.broadcast %cst_197 : f32 to vector<8x128xf32>
    %502 = arith.mulf %501, %500 : vector<8x128xf32>
    %503 = math.tanh %502 : vector<8x128xf32>
    %cst_198 = arith.constant 1.000000e+00 : f32
    %504 = vector.broadcast %cst_198 : f32 to vector<8x128xf32>
    %505 = arith.addf %503, %504 : vector<8x128xf32>
    %cst_199 = arith.constant 5.000000e-01 : f32
    %506 = vector.broadcast %cst_199 : f32 to vector<8x128xf32>
    %507 = arith.mulf %506, %505 : vector<8x128xf32>
    %508 = arith.mulf %497, %433 : vector<8x128xf32>
    %509 = arith.mulf %489, %499 : vector<8x128xf32>
    %510 = arith.addf %508, %509 : vector<8x128xf32>
    %511 = math.tanh %510 : vector<8x128xf32>
    %512 = arith.mulf %507, %511 : vector<8x128xf32>
    %c64_i32_200 = arith.constant 64 : i32
    %513 = tpu.dynamic_rotate %474 by %c64_i32_200 dim 1 : vector<8x128xf32>, i32 -> vector<8x128xf32>
    %514 = arith.select %13, %512, %513 : vector<8x128xi1>, vector<8x128xf32>
    %515 = arith.truncf %514 : vector<8x128xf32> to vector<8x128xbf16>
    %c0_201 = arith.constant 0 : index
    %c0_202 = arith.constant 0 : index
    %516 = vector.load %arg4[%c0_201, %c0_202] : memref<128x512xbf16, #tpu.memory_space<vmem>>, vector<128x512xbf16>
    %cst_203 = arith.constant dense<0.000000e+00> : vector<8x512xf32>
    %517 = tpu.matmul %515, %516, %cst_203 {dimension_numbers = #tpu.dot_dimension_numbers<[1], [0], [0], [1], [0, 0, 1, 1], [], []>} : vector<8x128xbf16>, vector<128x512xbf16>, vector<8x512xf32> -> vector<8x512xf32>
    %c0_204 = arith.constant 0 : index
    %c0_205 = arith.constant 0 : index
    %518 = vector.load %arg5[%c0_204, %c0_205] : memref<1x512xf32, #tpu.memory_space<vmem>>, vector<1x512xf32>
    %519 = vector.broadcast %518 : vector<1x512xf32> to vector<8x512xf32>
    %520 = arith.addf %517, %519 : vector<8x512xf32>
    %521 = vector.extract_strided_slice %520 {offsets = [0, 0], sizes = [8, 128], strides = [1, 1]} : vector<8x512xf32> to vector<8x128xf32>
    %cst_206 = arith.constant 5.000000e-01 : f32
    %522 = vector.broadcast %cst_206 : f32 to vector<8x128xf32>
    %523 = arith.mulf %522, %521 : vector<8x128xf32>
    %524 = math.tanh %523 : vector<8x128xf32>
    %cst_207 = arith.constant 1.000000e+00 : f32
    %525 = vector.broadcast %cst_207 : f32 to vector<8x128xf32>
    %526 = arith.addf %524, %525 : vector<8x128xf32>
    %cst_208 = arith.constant 5.000000e-01 : f32
    %527 = vector.broadcast %cst_208 : f32 to vector<8x128xf32>
    %528 = arith.mulf %527, %526 : vector<8x128xf32>
    %529 = vector.extract_strided_slice %520 {offsets = [0, 128], sizes = [8, 128], strides = [1, 1]} : vector<8x512xf32> to vector<8x128xf32>
    %cst_209 = arith.constant 5.000000e-01 : f32
    %530 = vector.broadcast %cst_209 : f32 to vector<8x128xf32>
    %531 = arith.mulf %530, %529 : vector<8x128xf32>
    %532 = math.tanh %531 : vector<8x128xf32>
    %cst_210 = arith.constant 1.000000e+00 : f32
    %533 = vector.broadcast %cst_210 : f32 to vector<8x128xf32>
    %534 = arith.addf %532, %533 : vector<8x128xf32>
    %cst_211 = arith.constant 5.000000e-01 : f32
    %535 = vector.broadcast %cst_211 : f32 to vector<8x128xf32>
    %536 = arith.mulf %535, %534 : vector<8x128xf32>
    %537 = vector.extract_strided_slice %520 {offsets = [0, 256], sizes = [8, 128], strides = [1, 1]} : vector<8x512xf32> to vector<8x128xf32>
    %538 = math.tanh %537 : vector<8x128xf32>
    %539 = vector.extract_strided_slice %520 {offsets = [0, 384], sizes = [8, 128], strides = [1, 1]} : vector<8x512xf32> to vector<8x128xf32>
    %cst_212 = arith.constant 5.000000e-01 : f32
    %540 = vector.broadcast %cst_212 : f32 to vector<8x128xf32>
    %541 = arith.mulf %540, %539 : vector<8x128xf32>
    %542 = math.tanh %541 : vector<8x128xf32>
    %cst_213 = arith.constant 1.000000e+00 : f32
    %543 = vector.broadcast %cst_213 : f32 to vector<8x128xf32>
    %544 = arith.addf %542, %543 : vector<8x128xf32>
    %cst_214 = arith.constant 5.000000e-01 : f32
    %545 = vector.broadcast %cst_214 : f32 to vector<8x128xf32>
    %546 = arith.mulf %545, %544 : vector<8x128xf32>
    %547 = arith.mulf %536, %472 : vector<8x128xf32>
    %548 = arith.mulf %528, %538 : vector<8x128xf32>
    %549 = arith.addf %547, %548 : vector<8x128xf32>
    %550 = math.tanh %549 : vector<8x128xf32>
    %551 = arith.mulf %546, %550 : vector<8x128xf32>
    %c0_215 = arith.constant 0 : index
    %c768 = arith.constant 768 : index
    %552 = vector.load %arg12[%c0_215, %c768] : memref<8x1024xf32, #tpu.memory_space<vmem>>, vector<8x128xf32>
    tpu.vector_store %arg12[%c0_215, %c768], %551 {strides = array<i32>} : memref<8x1024xf32, #tpu.memory_space<vmem>>, vector<8x128xf32>,
    %c56 = arith.constant 56 : index
    %c0_216 = arith.constant 0 : index
    %553 = vector.load %arg11[%c56, %c0_216] : memref<64x512xf32, #tpu.memory_space<vmem>>, vector<8x512xf32>
    %554 = vector.extract_strided_slice %512 {offsets = [0, 0], sizes = [8, 64], strides = [1, 1]} : vector<8x128xf32> to vector<8x64xf32>
    %555 = arith.truncf %554 : vector<8x64xf32> to vector<8x64xbf16>
    %c0_217 = arith.constant 0 : index
    %c0_218 = arith.constant 0 : index
    %556 = vector.load %arg3[%c0_217, %c0_218] : memref<64x512xbf16, #tpu.memory_space<vmem>>, vector<64x512xbf16>
    %cst_219 = arith.constant dense<0.000000e+00> : vector<8x512xf32>
    %557 = tpu.matmul %555, %556, %cst_219 {dimension_numbers = #tpu.dot_dimension_numbers<[1], [0], [0], [1], [0, 0, 1, 1], [], []>} : vector<8x64xbf16>, vector<64x512xbf16>, vector<8x512xf32> -> vector<8x512xf32>
    %558 = arith.addf %553, %557 : vector<8x512xf32>
    %559 = vector.extract_strided_slice %558 {offsets = [0, 0], sizes = [8, 128], strides = [1, 1]} : vector<8x512xf32> to vector<8x128xf32>
    %cst_220 = arith.constant 5.000000e-01 : f32
    %560 = vector.broadcast %cst_220 : f32 to vector<8x128xf32>
    %561 = arith.mulf %560, %559 : vector<8x128xf32>
    %562 = math.tanh %561 : vector<8x128xf32>
    %cst_221 = arith.constant 1.000000e+00 : f32
    %563 = vector.broadcast %cst_221 : f32 to vector<8x128xf32>
    %564 = arith.addf %562, %563 : vector<8x128xf32>
    %cst_222 = arith.constant 5.000000e-01 : f32
    %565 = vector.broadcast %cst_222 : f32 to vector<8x128xf32>
    %566 = arith.mulf %565, %564 : vector<8x128xf32>
    %567 = vector.extract_strided_slice %558 {offsets = [0, 128], sizes = [8, 128], strides = [1, 1]} : vector<8x512xf32> to vector<8x128xf32>
    %cst_223 = arith.constant 5.000000e-01 : f32
    %568 = vector.broadcast %cst_223 : f32 to vector<8x128xf32>
    %569 = arith.mulf %568, %567 : vector<8x128xf32>
    %570 = math.tanh %569 : vector<8x128xf32>
    %cst_224 = arith.constant 1.000000e+00 : f32
    %571 = vector.broadcast %cst_224 : f32 to vector<8x128xf32>
    %572 = arith.addf %570, %571 : vector<8x128xf32>
    %cst_225 = arith.constant 5.000000e-01 : f32
    %573 = vector.broadcast %cst_225 : f32 to vector<8x128xf32>
    %574 = arith.mulf %573, %572 : vector<8x128xf32>
    %575 = vector.extract_strided_slice %558 {offsets = [0, 256], sizes = [8, 128], strides = [1, 1]} : vector<8x512xf32> to vector<8x128xf32>
    %576 = math.tanh %575 : vector<8x128xf32>
    %577 = vector.extract_strided_slice %558 {offsets = [0, 384], sizes = [8, 128], strides = [1, 1]} : vector<8x512xf32> to vector<8x128xf32>
    %cst_226 = arith.constant 5.000000e-01 : f32
    %578 = vector.broadcast %cst_226 : f32 to vector<8x128xf32>
    %579 = arith.mulf %578, %577 : vector<8x128xf32>
    %580 = math.tanh %579 : vector<8x128xf32>
    %cst_227 = arith.constant 1.000000e+00 : f32
    %581 = vector.broadcast %cst_227 : f32 to vector<8x128xf32>
    %582 = arith.addf %580, %581 : vector<8x128xf32>
    %cst_228 = arith.constant 5.000000e-01 : f32
    %583 = vector.broadcast %cst_228 : f32 to vector<8x128xf32>
    %584 = arith.mulf %583, %582 : vector<8x128xf32>
    %585 = arith.mulf %574, %510 : vector<8x128xf32>
    %586 = arith.mulf %566, %576 : vector<8x128xf32>
    %587 = arith.addf %585, %586 : vector<8x128xf32>
    %588 = math.tanh %587 : vector<8x128xf32>
    %589 = arith.mulf %584, %588 : vector<8x128xf32>
    %c64_i32_229 = arith.constant 64 : i32
    %590 = tpu.dynamic_rotate %551 by %c64_i32_229 dim 1 : vector<8x128xf32>, i32 -> vector<8x128xf32>
    %591 = arith.select %13, %589, %590 : vector<8x128xi1>, vector<8x128xf32>
    %592 = arith.truncf %591 : vector<8x128xf32> to vector<8x128xbf16>
    %c0_230 = arith.constant 0 : index
    %c0_231 = arith.constant 0 : index
    %593 = vector.load %arg4[%c0_230, %c0_231] : memref<128x512xbf16, #tpu.memory_space<vmem>>, vector<128x512xbf16>
    %cst_232 = arith.constant dense<0.000000e+00> : vector<8x512xf32>
    %594 = tpu.matmul %592, %593, %cst_232 {dimension_numbers = #tpu.dot_dimension_numbers<[1], [0], [0], [1], [0, 0, 1, 1], [], []>} : vector<8x128xbf16>, vector<128x512xbf16>, vector<8x512xf32> -> vector<8x512xf32>
    %c0_233 = arith.constant 0 : index
    %c0_234 = arith.constant 0 : index
    %595 = vector.load %arg5[%c0_233, %c0_234] : memref<1x512xf32, #tpu.memory_space<vmem>>, vector<1x512xf32>
    %596 = vector.broadcast %595 : vector<1x512xf32> to vector<8x512xf32>
    %597 = arith.addf %594, %596 : vector<8x512xf32>
    %598 = vector.extract_strided_slice %597 {offsets = [0, 0], sizes = [8, 128], strides = [1, 1]} : vector<8x512xf32> to vector<8x128xf32>
    %cst_235 = arith.constant 5.000000e-01 : f32
    %599 = vector.broadcast %cst_235 : f32 to vector<8x128xf32>
    %600 = arith.mulf %599, %598 : vector<8x128xf32>
    %601 = math.tanh %600 : vector<8x128xf32>
    %cst_236 = arith.constant 1.000000e+00 : f32
    %602 = vector.broadcast %cst_236 : f32 to vector<8x128xf32>
    %603 = arith.addf %601, %602 : vector<8x128xf32>
    %cst_237 = arith.constant 5.000000e-01 : f32
    %604 = vector.broadcast %cst_237 : f32 to vector<8x128xf32>
    %605 = arith.mulf %604, %603 : vector<8x128xf32>
    %606 = vector.extract_strided_slice %597 {offsets = [0, 128], sizes = [8, 128], strides = [1, 1]} : vector<8x512xf32> to vector<8x128xf32>
    %cst_238 = arith.constant 5.000000e-01 : f32
    %607 = vector.broadcast %cst_238 : f32 to vector<8x128xf32>
    %608 = arith.mulf %607, %606 : vector<8x128xf32>
    %609 = math.tanh %608 : vector<8x128xf32>
    %cst_239 = arith.constant 1.000000e+00 : f32
    %610 = vector.broadcast %cst_239 : f32 to vector<8x128xf32>
    %611 = arith.addf %609, %610 : vector<8x128xf32>
    %cst_240 = arith.constant 5.000000e-01 : f32
    %612 = vector.broadcast %cst_240 : f32 to vector<8x128xf32>
    %613 = arith.mulf %612, %611 : vector<8x128xf32>
    %614 = vector.extract_strided_slice %597 {offsets = [0, 256], sizes = [8, 128], strides = [1, 1]} : vector<8x512xf32> to vector<8x128xf32>
    %615 = math.tanh %614 : vector<8x128xf32>
    %616 = vector.extract_strided_slice %597 {offsets = [0, 384], sizes = [8, 128], strides = [1, 1]} : vector<8x512xf32> to vector<8x128xf32>
    %cst_241 = arith.constant 5.000000e-01 : f32
    %617 = vector.broadcast %cst_241 : f32 to vector<8x128xf32>
    %618 = arith.mulf %617, %616 : vector<8x128xf32>
    %619 = math.tanh %618 : vector<8x128xf32>
    %cst_242 = arith.constant 1.000000e+00 : f32
    %620 = vector.broadcast %cst_242 : f32 to vector<8x128xf32>
    %621 = arith.addf %619, %620 : vector<8x128xf32>
    %cst_243 = arith.constant 5.000000e-01 : f32
    %622 = vector.broadcast %cst_243 : f32 to vector<8x128xf32>
    %623 = arith.mulf %622, %621 : vector<8x128xf32>
    %624 = arith.mulf %613, %549 : vector<8x128xf32>
    %625 = arith.mulf %605, %615 : vector<8x128xf32>
    %626 = arith.addf %624, %625 : vector<8x128xf32>
    %627 = math.tanh %626 : vector<8x128xf32>
    %628 = arith.mulf %623, %627 : vector<8x128xf32>
    %c0_244 = arith.constant 0 : index
    %c896 = arith.constant 896 : index
    %629 = vector.load %arg12[%c0_244, %c896] : memref<8x1024xf32, #tpu.memory_space<vmem>>, vector<8x128xf32>
    tpu.vector_store %arg12[%c0_244, %c896], %628 {strides = array<i32>} : memref<8x1024xf32, #tpu.memory_space<vmem>>, vector<8x128xf32>,
    %c0_245 = arith.constant 0 : index
    %c0_246 = arith.constant 0 : index
    %630 = vector.load %arg12[%c0_245, %c0_246] : memref<8x1024xf32, #tpu.memory_space<vmem>>, vector<8x1024xf32>
    %631 = arith.truncf %630 : vector<8x1024xf32> to vector<8x1024xbf16>
    %c0_247 = arith.constant 0 : index
    %c0_248 = arith.constant 0 : index
    %632 = vector.load %arg6[%c0_247, %c0_248] : memref<1024x32xbf16, #tpu.memory_space<vmem>>, vector<1024x32xbf16>
    %cst_249 = arith.constant dense<0.000000e+00> : vector<8x32xf32>
    %633 = tpu.matmul %631, %632, %cst_249 {dimension_numbers = #tpu.dot_dimension_numbers<[1], [0], [0], [1], [0, 0, 1, 1], [], []>} : vector<8x1024xbf16>, vector<1024x32xbf16>, vector<8x32xf32> -> vector<8x32xf32>
    %c0_250 = arith.constant 0 : index
    %c0_251 = arith.constant 0 : index
    %634 = vector.load %arg7[%c0_250, %c0_251] : memref<1x32xf32, #tpu.memory_space<vmem>>, vector<1x32xf32>
    %635 = vector.broadcast %634 : vector<1x32xf32> to vector<8x32xf32>
    %636 = arith.addf %633, %635 : vector<8x32xf32>
    %cst_252 = arith.constant 0.000000e+00 : f32
    %637 = vector.broadcast %cst_252 : f32 to vector<8x32xf32>
    %638 = arith.maximumf %636, %637 : vector<8x32xf32>
    %639 = arith.truncf %638 : vector<8x32xf32> to vector<8x32xbf16>
    %c0_253 = arith.constant 0 : index
    %c0_254 = arith.constant 0 : index
    %640 = vector.load %arg8[%c0_253, %c0_254] : memref<32x128xbf16, #tpu.memory_space<vmem>>, vector<32x128xbf16>
    %cst_255 = arith.constant dense<0.000000e+00> : vector<8x128xf32>
    %641 = tpu.matmul %639, %640, %cst_255 {dimension_numbers = #tpu.dot_dimension_numbers<[1], [0], [0], [1], [0, 0, 1, 1], [], []>} : vector<8x32xbf16>, vector<32x128xbf16>, vector<8x128xf32> -> vector<8x128xf32>
    %c0_256 = arith.constant 0 : index
    %c0_257 = arith.constant 0 : index
    %642 = vector.load %arg9[%c0_256, %c0_257] : memref<1x128xf32, #tpu.memory_space<vmem>>, vector<1x128xf32>
    %643 = vector.broadcast %642 : vector<1x128xf32> to vector<8x128xf32>
    %644 = arith.addf %641, %643 : vector<8x128xf32>
    %c0_258 = arith.constant 0 : index
    %c0_259 = arith.constant 0 : index
    %645 = vector.load %arg10[%c0_258, %c0_259] : memref<8x128xf32, #tpu.memory_space<vmem>>, vector<8x128xf32>
    tpu.vector_store %arg10[%c0_258, %c0_259], %644 {strides = array<i32>} : memref<8x128xf32, #tpu.memory_space<vmem>>, vector<8x128xf32>,
    return
  }
}

</mosaic_0001>

<llo_original>
// kernel: tpu_custom_call.1
$region0: #{tpu_custom_call.1}
  #allocation0 [shape = 'u32[]', space=smem, size = 0x4, offset = 0x4, fixed_abs, tag = 'smem constant byte address 0x4 - core index']
  #allocation1 [shape = 'u32[144,128]{1,0:T(1,128)}', space=vmem, size = 0x12000, scoped, tag = 'internal scratch']
  #allocation2 [shape = 'f32[64,512]{1,0:T(8,128)}', space=vmem, size = 0x20000, scoped, tag = 'scratch operand']
  #allocation3 [shape = 'f32[8,1024]{1,0:T(8,128)}', space=vmem, size = 0x8000, scoped, tag = 'scratch operand']
  %s0 = inlined_call_operand.vmem [shape: bf16[64,32], index: 0, kind: input, shape index: {}]
  %s1 = inlined_call_operand.vmem [shape: bf16[32,512], index: 1, kind: input, shape index: {}]
  %s2 = inlined_call_operand.vmem [shape: f32[1,512], index: 2, kind: input, shape index: {}]
  %s3 = inlined_call_operand.vmem [shape: bf16[64,512], index: 3, kind: input, shape index: {}]
  %s4 = inlined_call_operand.vmem [shape: bf16[128,512], index: 4, kind: input, shape index: {}]
  %s5 = inlined_call_operand.vmem [shape: f32[1,512], index: 5, kind: input, shape index: {}]
  %s6 = inlined_call_operand.vmem [shape: bf16[1024,32], index: 6, kind: input, shape index: {}]
  %s7 = inlined_call_operand.vmem [shape: f32[1,32], index: 7, kind: input, shape index: {}]
  %s8 = inlined_call_operand.vmem [shape: bf16[32,128], index: 8, kind: input, shape index: {}]
  %s9 = inlined_call_operand.vmem [shape: f32[1,128], index: 9, kind: input, shape index: {}]
  %s10 = inlined_call_operand.hbm [shape: f32[8,128], index: 10, kind: output, shape index: {}]
  %s11 = sld [smem:[#allocation0]]
  $region50: #{tpu_custom_call.1} parent=0
    _
  %s13 = ssub.s32 1, %s11
  %s14 = scalar_select 0, %s13, %s11
  $region1: #{tpu_custom_call.1} parent=0
    #allocation4 [shape = 'u8[4096]{0}', space=vmem, size = 0x1000, scoped, tag = 'output window, operand 0, single buffered']
    #allocation5 [shape = 's32[1]{0}', space=sflag, size = 0x4, scoped, tag = 'scoped memory for tpu_custom_call.1']
    %15 = vsyncpa [#allocation5], 0
    // Predicated region
    $region2: #{tpu_custom_call.1} parent=1 // pred_check
      _
    $region3: #{tpu_custom_call.1} parent=1 // pred_check_branch
      %17 = sbr.rel (0) target = $region5
    $region4: #{tpu_custom_call.1} parent=1 // pred_region
      _
    $region5: #{tpu_custom_call.1} parent=1 // pred_fallthru
      _
    // Predicated region
    $region6: #{tpu_custom_call.1} parent=1 // pred_check
      _
    $region7: #{tpu_custom_call.1} parent=1 // pred_check_branch
      %19 = sbr.rel (0) target = $region9
    $region8: #{tpu_custom_call.1} parent=1 // pred_region
      _
    $region9: #{tpu_custom_call.1} parent=1 // pred_fallthru
      _
    // Predicated region
    $region10: #{tpu_custom_call.1} parent=1 // pred_check
      _
    $region11: #{tpu_custom_call.1} parent=1 // pred_check_branch
      %21 = sbr.rel (0) target = $region13
    $region12: #{tpu_custom_call.1} parent=1 // pred_region
      _
    $region13: #{tpu_custom_call.1} parent=1 // pred_fallthru
      _
    // Predicated region
    $region14: #{tpu_custom_call.1} parent=1 // pred_check
      _
    $region15: #{tpu_custom_call.1} parent=1 // pred_check_branch
      %23 = sbr.rel (0) target = $region17
    $region16: #{tpu_custom_call.1} parent=1 // pred_region
      _
    $region17: #{tpu_custom_call.1} parent=1 // pred_fallthru
      _
    // Predicated region
    $region18: #{tpu_custom_call.1} parent=1 // pred_check
      _
    $region19: #{tpu_custom_call.1} parent=1 // pred_check_branch
      %25 = sbr.rel (0) target = $region21
    $region20: #{tpu_custom_call.1} parent=1 // pred_region
      _
    $region21: #{tpu_custom_call.1} parent=1 // pred_fallthru
      _
    // Predicated region
    $region22: #{tpu_custom_call.1} parent=1 // pred_check
      _
    $region23: #{tpu_custom_call.1} parent=1 // pred_check_branch
      %27 = sbr.rel (0) target = $region25
    $region24: #{tpu_custom_call.1} parent=1 // pred_region
      _
    $region25: #{tpu_custom_call.1} parent=1 // pred_fallthru
      _
    // Predicated region
    $region26: #{tpu_custom_call.1} parent=1 // pred_check
      _
    $region27: #{tpu_custom_call.1} parent=1 // pred_check_branch
      %29 = sbr.rel (0) target = $region29
    $region28: #{tpu_custom_call.1} parent=1 // pred_region
      _
    $region29: #{tpu_custom_call.1} parent=1 // pred_fallthru
      _
    // Predicated region
    $region30: #{tpu_custom_call.1} parent=1 // pred_check
      _
    $region31: #{tpu_custom_call.1} parent=1 // pred_check_branch
      %31 = sbr.rel (0) target = $region33
    $region32: #{tpu_custom_call.1} parent=1 // pred_region
      _
    $region33: #{tpu_custom_call.1} parent=1 // pred_fallthru
      _
    // Predicated region
    $region34: #{tpu_custom_call.1} parent=1 // pred_check
      _
    $region35: #{tpu_custom_call.1} parent=1 // pred_check_branch
      %33 = sbr.rel (0) target = $region37
    $region36: #{tpu_custom_call.1} parent=1 // pred_region
      _
    $region37: #{tpu_custom_call.1} parent=1 // pred_fallthru
      _
    // Predicated region
    $region38: #{tpu_custom_call.1} parent=1 // pred_check
      _
    $region39: #{tpu_custom_call.1} parent=1 // pred_check_branch
      %35 = sbr.rel (0) target = $region41
    $region40: #{tpu_custom_call.1} parent=1 // pred_region
      _
    $region41: #{tpu_custom_call.1} parent=1 // pred_fallthru
      _
    %v37 = vld [vmem:[%s0] sm:$0xf]
    %v38 = vld [vmem:[%s0 + $0x4] sm:$0xf]
    %v39 = vld [vmem:[%s0 + $0x8] sm:$0xf]
    %v40 = vld [vmem:[%s0 + $0xc] sm:$0xf]
    %v41 = vld [vmem:[%s0 + $0x10] sm:$0xf]
    %v42 = vld [vmem:[%s0 + $0x14] sm:$0xf]
    %v43 = vld [vmem:[%s0 + $0x18] sm:$0xf]
    %v44 = vld [vmem:[%s0 + $0x1c] sm:$0xf]
    %v45 = vld [vmem:[%s1] sm:$0xff]
    %v46 = vld [vmem:[%s1 + $0x8] sm:$0xff]
    %v47 = vld [vmem:[%s1 + $0x10] sm:$0xff]
    %v48 = vld [vmem:[%s1 + $0x18] sm:$0xff]
    %v49 = vld [vmem:[%s1 + $0x20] sm:$0xff]
    %v50 = vld [vmem:[%s1 + $0x28] sm:$0xff]
    %v51 = vld [vmem:[%s1 + $0x30] sm:$0xff]
    %v52 = vld [vmem:[%s1 + $0x38] sm:$0xff]
    %v53 = vld [vmem:[%s2] sm:$0xf]
    %v55 = vlaneseq
    %v56 = vshrl.u32 %v55, 7
    %v57 = vsub.s32 0, %v56
    %v58 = vrot.slane %v53, %v57
    %v59 = vlaneseq
    %v60 = vshrl.u32 %v59, 7
    %v61 = vsub.s32 1, %v60
    %v62 = vrot.slane %v53, %v61
    %v63 = vlaneseq
    %v64 = vshrl.u32 %v63, 7
    %v65 = vsub.s32 2, %v64
    %v66 = vrot.slane %v53, %v65
    %v67 = vlaneseq
    %v68 = vshrl.u32 %v67, 7
    %v69 = vsub.s32 3, %v68
    %v70 = vrot.slane %v53, %v69
    %v83 = vunpack.c.l.b16 %v37
    %v84 = vunpack.c.l.b16 %v38
    %v85 = vunpack.c.l.b16 %v39
    %v86 = vunpack.c.l.b16 %v40
    %v87 = vunpack.c.l.b16 %v41
    %v88 = vunpack.c.l.b16 %v42
    %v89 = vunpack.c.l.b16 %v43
    %v90 = vunpack.c.l.b16 %v44
    %v91 = vpack.c.b16 %v84, %v83
    %v92 = vpack.c.b16 %v86, %v85
    %v93 = vpack.c.b16 %v88, %v87
    %v94 = vpack.c.b16 %v90, %v89
    %v103 = vunpack.c.l.b16 %v45
    %v104 = vunpack.c.h.b16 %v45
    %v105 = vunpack.c.l.b16 %v46
    %v106 = vunpack.c.h.b16 %v46
    %v107 = vunpack.c.l.b16 %v47
    %v108 = vunpack.c.h.b16 %v47
    %v109 = vunpack.c.l.b16 %v48
    %v110 = vunpack.c.h.b16 %v48
    %v111 = vunpack.c.l.b16 %v49
    %v112 = vunpack.c.h.b16 %v49
    %v113 = vunpack.c.l.b16 %v50
    %v114 = vunpack.c.h.b16 %v50
    %v115 = vunpack.c.l.b16 %v51
    %v116 = vunpack.c.h.b16 %v51
    %v117 = vunpack.c.l.b16 %v52
    %v118 = vunpack.c.h.b16 %v52
    %v119 = vpack.c.b16 %v107, %v103
    %v120 = vpack.c.b16 %v108, %v104
    %v121 = vpack.c.b16 %v109, %v105
    %v122 = vpack.c.b16 %v110, %v106
    %v123 = vpack.c.b16 %v115, %v111
    %v124 = vpack.c.b16 %v116, %v112
    %v125 = vpack.c.b16 %v117, %v113
    %v126 = vpack.c.b16 %v118, %v114
    %vm135 = vcmask 261120
    %v137 = vsel %vm135, %v91, 0
    %v140 = vsel %vm135, %v92, 0
    %v143 = vsel %vm135, %v93, 0
    %v146 = vsel %vm135, %v94, 0
    %148 = vmatprep.subr.bf16.mxu0 0
    %149 = vmatpush1.bf16.msra.mxu0 0
    %150 = vmatprep.subr.bf16.mxu0 0
    %151 = vmatpush1.bf16.msra.mxu0 0
    %152 = vmatprep.subr.bf16.mxu0 0
    %153 = vmatpush1.bf16.msra.mxu0 0
    %154 = vmatprep.subr.bf16.mxu0 0
    %155 = vmatpush1.bf16.msra.mxu0 0
    %156 = vmatprep.subr.bf16.mxu0 0
    %157 = vmatpush1.bf16.msra.mxu0 0
    %158 = vmatprep.subr.bf16.mxu0 0
    %159 = vmatpush1.bf16.msra.mxu0 0
    %160 = vmatprep.subr.bf16.mxu0 %v124
    %161 = vmatpush1.bf16.msra.mxu0 %v123
    %162 = vmatprep.subr.bf16.mxu0 %v120
    %163 = vmatpush1.bf16.msra.mxu0 %v119
    %164 = vmatprep.subr.bf16.mxu0 0
    %165 = vmatpush2.bf16.msra.mxu0 0
    %166 = vmatprep.subr.bf16.mxu0 0
    %167 = vmatpush2.bf16.msra.mxu0 0
    %168 = vmatprep.subr.bf16.mxu0 0
    %169 = vmatpush2.bf16.msra.mxu0 0
    %170 = vmatprep.subr.bf16.mxu0 0
    %171 = vmatpush2.bf16.msra.mxu0 0
    %172 = vmatprep.subr.bf16.mxu0 0
    %173 = vmatpush2.bf16.msra.mxu0 0
    %174 = vmatprep.subr.bf16.mxu0 0
    %175 = vmatpush2.bf16.msra.mxu0 0
    %176 = vmatprep.subr.bf16.mxu0 0
    %177 = vmatpush2.bf16.msra.mxu0 0
    %178 = vmatprep.subr.bf16.mxu0 0
    %179 = vmatpush2.bf16.msra.mxu0 0
    %180 = vmatprep.mubr.bf16.mxu0 0
    %181 = vmatmul.mubr.bf16.gmra.mxu0 %v137
    %v182 = vpop.f32.mrf.mxu0
    %v183 = vadd.f32 %v58, %v182
    %v184 = vpop.f32.mrf.mxu0
    %v185 = vadd.f32 %v62, %v184
    %v186 = vpop.f32.mrf.mxu0
    %v187 = vadd.f32 %v58, %v186
    %v188 = vpop.f32.mrf.mxu0
    %v189 = vadd.f32 %v62, %v188
    %190 = vmatprep.mubr.bf16.mxu0 0
    %191 = vmatmul.mubr.bf16.gmra.mxu0 %v140
    %v192 = vpop.f32.mrf.mxu0
    %v193 = vadd.f32 %v58, %v192
    %v194 = vpop.f32.mrf.mxu0
    %v195 = vadd.f32 %v62, %v194
    %v196 = vpop.f32.mrf.mxu0
    %v197 = vadd.f32 %v58, %v196
    %v198 = vpop.f32.mrf.mxu0
    %v199 = vadd.f32 %v62, %v198
    %200 = vmatprep.mubr.bf16.mxu0 0
    %201 = vmatmul.mubr.bf16.gmra.mxu0 %v143
    %v202 = vpop.f32.mrf.mxu0
    %v203 = vadd.f32 %v58, %v202
    %v204 = vpop.f32.mrf.mxu0
    %v205 = vadd.f32 %v62, %v204
    %v206 = vpop.f32.mrf.mxu0
    %v207 = vadd.f32 %v58, %v206
    %v208 = vpop.f32.mrf.mxu0
    %v209 = vadd.f32 %v62, %v208
    %210 = vmatprep.mubr.bf16.mxu0 0
    %211 = vmatmul.mubr.bf16.gmra.mxu0 %v146
    %v212 = vpop.f32.mrf.mxu0
    %v213 = vadd.f32 %v58, %v212
    %v214 = vpop.f32.mrf.mxu0
    %v215 = vadd.f32 %v62, %v214
    %v216 = vpop.f32.mrf.mxu0
    %v217 = vadd.f32 %v58, %v216
    %v218 = vpop.f32.mrf.mxu0
    %v219 = vadd.f32 %v62, %v218
    %220 = vdwg.mxu0
    %221 = vmatprep.subr.bf16.mxu0 0
    %222 = vmatpush1.bf16.msra.mxu0 0
    %223 = vmatprep.subr.bf16.mxu0 0
    %224 = vmatpush1.bf16.msra.mxu0 0
    %225 = vmatprep.subr.bf16.mxu0 0
    %226 = vmatpush1.bf16.msra.mxu0 0
    %227 = vmatprep.subr.bf16.mxu0 0
    %228 = vmatpush1.bf16.msra.mxu0 0
    %229 = vmatprep.subr.bf16.mxu0 0
    %230 = vmatpush1.bf16.msra.mxu0 0
    %231 = vmatprep.subr.bf16.mxu0 0
    %232 = vmatpush1.bf16.msra.mxu0 0
    %233 = vmatprep.subr.bf16.mxu0 %v126
    %234 = vmatpush1.bf16.msra.mxu0 %v125
    %235 = vmatprep.subr.bf16.mxu0 %v122
    %236 = vmatpush1.bf16.msra.mxu0 %v121
    %237 = vmatprep.subr.bf16.mxu0 0
    %238 = vmatpush2.bf16.msra.mxu0 0
    %239 = vmatprep.subr.bf16.mxu0 0
    %240 = vmatpush2.bf16.msra.mxu0 0
    %241 = vmatprep.subr.bf16.mxu0 0
    %242 = vmatpush2.bf16.msra.mxu0 0
    %243 = vmatprep.subr.bf16.mxu0 0
    %244 = vmatpush2.bf16.msra.mxu0 0
    %245 = vmatprep.subr.bf16.mxu0 0
    %246 = vmatpush2.bf16.msra.mxu0 0
    %247 = vmatprep.subr.bf16.mxu0 0
    %248 = vmatpush2.bf16.msra.mxu0 0
    %249 = vmatprep.subr.bf16.mxu0 0
    %250 = vmatpush2.bf16.msra.mxu0 0
    %251 = vmatprep.subr.bf16.mxu0 0
    %252 = vmatpush2.bf16.msra.mxu0 0
    %253 = vmatprep.mubr.bf16.mxu0 0
    %254 = vmatmul.mubr.bf16.gmra.mxu0 %v137
    %v255 = vpop.f32.mrf.mxu0
    %v256 = vadd.f32 %v66, %v255
    %v257 = vpop.f32.mrf.mxu0
    %v258 = vadd.f32 %v70, %v257
    %v259 = vpop.f32.mrf.mxu0
    %v260 = vadd.f32 %v66, %v259
    %v261 = vpop.f32.mrf.mxu0
    %v262 = vadd.f32 %v70, %v261
    %263 = vmatprep.mubr.bf16.mxu0 0
    %264 = vmatmul.mubr.bf16.gmra.mxu0 %v140
    %v265 = vpop.f32.mrf.mxu0
    %v266 = vadd.f32 %v66, %v265
    %v267 = vpop.f32.mrf.mxu0
    %v268 = vadd.f32 %v70, %v267
    %v269 = vpop.f32.mrf.mxu0
    %v270 = vadd.f32 %v66, %v269
    %v271 = vpop.f32.mrf.mxu0
    %v272 = vadd.f32 %v70, %v271
    %273 = vmatprep.mubr.bf16.mxu0 0
    %274 = vmatmul.mubr.bf16.gmra.mxu0 %v143
    %v275 = vpop.f32.mrf.mxu0
    %v276 = vadd.f32 %v66, %v275
    %v277 = vpop.f32.mrf.mxu0
    %v278 = vadd.f32 %v70, %v277
    %v279 = vpop.f32.mrf.mxu0
    %v280 = vadd.f32 %v66, %v279
    %v281 = vpop.f32.mrf.mxu0
    %v282 = vadd.f32 %v70, %v281
    %283 = vmatprep.mubr.bf16.mxu0 0
    %284 = vmatmul.mubr.bf16.gmra.mxu0 %v146
    %v285 = vpop.f32.mrf.mxu0
    %v286 = vadd.f32 %v66, %v285
    %v287 = vpop.f32.mrf.mxu0
    %v288 = vadd.f32 %v70, %v287
    %v289 = vpop.f32.mrf.mxu0
    %v290 = vadd.f32 %v66, %v289
    %v291 = vpop.f32.mrf.mxu0
    %v292 = vadd.f32 %v70, %v291
    %293 = vdwg.mxu0
    %294 = vst [vmem:[#allocation2] sm:$0xff] %v183
    %295 = vst [vmem:[#allocation2 + $0x8] sm:$0xff] %v185
    %296 = vst [vmem:[#allocation2 + $0x10] sm:$0xff] %v256
    %297 = vst [vmem:[#allocation2 + $0x18] sm:$0xff] %v258
    %298 = vst [vmem:[#allocation2 + $0x20] sm:$0xff] %v187
    %299 = vst [vmem:[#allocation2 + $0x28] sm:$0xff] %v189
    %300 = vst [vmem:[#allocation2 + $0x30] sm:$0xff] %v260
    %301 = vst [vmem:[#allocation2 + $0x38] sm:$0xff] %v262
    %302 = vst [vmem:[#allocation2 + $0x40] sm:$0xff] %v193
    %303 = vst [vmem:[#allocation2 + $0x48] sm:$0xff] %v195
    %304 = vst [vmem:[#allocation2 + $0x50] sm:$0xff] %v266
    %305 = vst [vmem:[#allocation2 + $0x58] sm:$0xff] %v268
    %306 = vst [vmem:[#allocation2 + $0x60] sm:$0xff] %v197
    %307 = vst [vmem:[#allocation2 + $0x68] sm:$0xff] %v199
    %308 = vst [vmem:[#allocation2 + $0x70] sm:$0xff] %v270
    %309 = vst [vmem:[#allocation2 + $0x78] sm:$0xff] %v272
    %310 = vst [vmem:[#allocation2 + $0x80] sm:$0xff] %v203
    %311 = vst [vmem:[#allocation2 + $0x88] sm:$0xff] %v205
    %312 = vst [vmem:[#allocation2 + $0x90] sm:$0xff] %v276
    %313 = vst [vmem:[#allocation2 + $0x98] sm:$0xff] %v278
    %314 = vst [vmem:[#allocation2 + $0xa0] sm:$0xff] %v207
    %315 = vst [vmem:[#allocation2 + $0xa8] sm:$0xff] %v209
    %316 = vst [vmem:[#allocation2 + $0xb0] sm:$0xff] %v280
    %317 = vst [vmem:[#allocation2 + $0xb8] sm:$0xff] %v282
    %318 = vst [vmem:[#allocation2 + $0xc0] sm:$0xff] %v213
    %319 = vst [vmem:[#allocation2 + $0xc8] sm:$0xff] %v215
    %320 = vst [vmem:[#allocation2 + $0xd0] sm:$0xff] %v286
    %321 = vst [vmem:[#allocation2 + $0xd8] sm:$0xff] %v288
    %322 = vst [vmem:[#allocation2 + $0xe0] sm:$0xff] %v217
    %323 = vst [vmem:[#allocation2 + $0xe8] sm:$0xff] %v219
    %324 = vst [vmem:[#allocation2 + $0xf0] sm:$0xff] %v290
    %325 = vst [vmem:[#allocation2 + $0xf8] sm:$0xff] %v292
    %v326 = vlaneseq
    %v327 = vand.u32 %v326, 127
    %vm328 = vcmp.lt.s32.totalorder %v327, 64
    %v329 = vld [vmem:[#allocation2] sm:$0xff]
    %v330 = vld [vmem:[#allocation2 + $0x8] sm:$0xff]
    %v331 = vld [vmem:[#allocation2 + $0x10] sm:$0xff]
    %v332 = vld [vmem:[#allocation2 + $0x18] sm:$0xff]
    %v333 = vld [vmem:[%s3] sm:$0xff]
    %v334 = vld [vmem:[%s3 + $0x8] sm:$0xff]
    %v335 = vld [vmem:[%s3 + $0x10] sm:$0xff]
    %v336 = vld [vmem:[%s3 + $0x18] sm:$0xff]
    %v337 = vld [vmem:[%s3 + $0x20] sm:$0xff]
    %v338 = vld [vmem:[%s3 + $0x28] sm:$0xff]
    %v339 = vld [vmem:[%s3 + $0x30] sm:$0xff]
    %v340 = vld [vmem:[%s3 + $0x38] sm:$0xff]
    %v341 = vld [vmem:[%s3 + $0x40] sm:$0xff]
    %v342 = vld [vmem:[%s3 + $0x48] sm:$0xff]
    %v343 = vld [vmem:[%s3 + $0x50] sm:$0xff]
    %v344 = vld [vmem:[%s3 + $0x58] sm:$0xff]
    %v345 = vld [vmem:[%s3 + $0x60] sm:$0xff]
    %v346 = vld [vmem:[%s3 + $0x68] sm:$0xff]
    %v347 = vld [vmem:[%s3 + $0x70] sm:$0xff]
    %v348 = vld [vmem:[%s3 + $0x78] sm:$0xff]
    %v365 = vunpack.c.l.b16 %v333
    %v366 = vunpack.c.h.b16 %v333
    %v367 = vunpack.c.l.b16 %v334
    %v368 = vunpack.c.h.b16 %v334
    %v369 = vunpack.c.l.b16 %v335
    %v370 = vunpack.c.h.b16 %v335
    %v371 = vunpack.c.l.b16 %v336
    %v372 = vunpack.c.h.b16 %v336
    %v373 = vunpack.c.l.b16 %v337
    %v374 = vunpack.c.h.b16 %v337
    %v375 = vunpack.c.l.b16 %v338
    %v376 = vunpack.c.h.b16 %v338
    %v377 = vunpack.c.l.b16 %v339
    %v378 = vunpack.c.h.b16 %v339
    %v379 = vunpack.c.l.b16 %v340
    %v380 = vunpack.c.h.b16 %v340
    %v381 = vunpack.c.l.b16 %v341
    %v382 = vunpack.c.h.b16 %v341
    %v383 = vunpack.c.l.b16 %v342
    %v384 = vunpack.c.h.b16 %v342
    %v385 = vunpack.c.l.b16 %v343
    %v386 = vunpack.c.h.b16 %v343
    %v387 = vunpack.c.l.b16 %v344
    %v388 = vunpack.c.h.b16 %v344
    %v389 = vunpack.c.l.b16 %v345
    %v390 = vunpack.c.h.b16 %v345
    %v391 = vunpack.c.l.b16 %v346
    %v392 = vunpack.c.h.b16 %v346
    %v393 = vunpack.c.l.b16 %v347
    %v394 = vunpack.c.h.b16 %v347
    %v395 = vunpack.c.l.b16 %v348
    %v396 = vunpack.c.h.b16 %v348
    %v397 = vpack.c.b16 %v369, %v365
    %v398 = vpack.c.b16 %v370, %v366
    %v399 = vpack.c.b16 %v371, %v367
    %v400 = vpack.c.b16 %v372, %v368
    %v401 = vpack.c.b16 %v377, %v373
    %v402 = vpack.c.b16 %v378, %v374
    %v403 = vpack.c.b16 %v379, %v375
    %v404 = vpack.c.b16 %v380, %v376
    %v405 = vpack.c.b16 %v385, %v381
    %v406 = vpack.c.b16 %v386, %v382
    %v407 = vpack.c.b16 %v387, %v383
    %v408 = vpack.c.b16 %v388, %v384
    %v409 = vpack.c.b16 %v393, %v389
    %v410 = vpack.c.b16 %v394, %v390
    %v411 = vpack.c.b16 %v395, %v391
    %v412 = vpack.c.b16 %v396, %v392
    %vm429 = vcmask 523264
    %v431 = vsel %vm429, 0, 0
    %433 = vmatprep.subr.bf16.mxu0 0
    %434 = vmatpush1.bf16.msra.mxu0 0
    %435 = vmatprep.subr.bf16.mxu0 0
    %436 = vmatpush1.bf16.msra.mxu0 0
    %437 = vmatprep.subr.bf16.mxu0 0
    %438 = vmatpush1.bf16.msra.mxu0 0
    %439 = vmatprep.subr.bf16.mxu0 0
    %440 = vmatpush1.bf16.msra.mxu0 0
    %441 = vmatprep.subr.bf16.mxu0 %v410
    %442 = vmatpush1.bf16.msra.mxu0 %v409
    %443 = vmatprep.subr.bf16.mxu0 %v406
    %444 = vmatpush1.bf16.msra.mxu0 %v405
    %445 = vmatprep.subr.bf16.mxu0 %v402
    %446 = vmatpush1.bf16.msra.mxu0 %v401
    %447 = vmatprep.subr.bf16.mxu0 %v398
    %448 = vmatpush1.bf16.msra.mxu0 %v397
    %449 = vmatprep.subr.bf16.mxu0 0
    %450 = vmatpush2.bf16.msra.mxu0 0
    %451 = vmatprep.subr.bf16.mxu0 0
    %452 = vmatpush2.bf16.msra.mxu0 0
    %453 = vmatprep.subr.bf16.mxu0 0
    %454 = vmatpush2.bf16.msra.mxu0 0
    %455 = vmatprep.subr.bf16.mxu0 0
    %456 = vmatpush2.bf16.msra.mxu0 0
    %457 = vmatprep.subr.bf16.mxu0 0
    %458 = vmatpush2.bf16.msra.mxu0 0
    %459 = vmatprep.subr.bf16.mxu0 0
    %460 = vmatpush2.bf16.msra.mxu0 0
    %461 = vmatprep.subr.bf16.mxu0 0
    %462 = vmatpush2.bf16.msra.mxu0 0
    %463 = vmatprep.subr.bf16.mxu0 0
    %464 = vmatpush2.bf16.msra.mxu0 0
    %465 = vmatprep.mubr.bf16.mxu0 0
    %466 = vmatmul.mubr.bf16.gmra.mxu0 %v431
    %v467 = vpop.f32.mrf.mxu0
    %v468 = vadd.f32 0.0, %v467
    %v469 = vpop.f32.mrf.mxu0
    %v470 = vadd.f32 0.0, %v469
    %v471 = vpop.f32.mrf.mxu0
    %v472 = vpop.f32.mrf.mxu0
    %473 = vdwg.mxu0
    %474 = vmatprep.subr.bf16.mxu0 0
    %475 = vmatpush1.bf16.msra.mxu0 0
    %476 = vmatprep.subr.bf16.mxu0 0
    %477 = vmatpush1.bf16.msra.mxu0 0
    %478 = vmatprep.subr.bf16.mxu0 0
    %479 = vmatpush1.bf16.msra.mxu0 0
    %480 = vmatprep.subr.bf16.mxu0 0
    %481 = vmatpush1.bf16.msra.mxu0 0
    %482 = vmatprep.subr.bf16.mxu0 %v412
    %483 = vmatpush1.bf16.msra.mxu0 %v411
    %484 = vmatprep.subr.bf16.mxu0 %v408
    %485 = vmatpush1.bf16.msra.mxu0 %v407
    %486 = vmatprep.subr.bf16.mxu0 %v404
    %487 = vmatpush1.bf16.msra.mxu0 %v403
    %488 = vmatprep.subr.bf16.mxu0 %v400
    %489 = vmatpush1.bf16.msra.mxu0 %v399
    %490 = vmatprep.subr.bf16.mxu0 0
    %491 = vmatpush2.bf16.msra.mxu0 0
    %492 = vmatprep.subr.bf16.mxu0 0
    %493 = vmatpush2.bf16.msra.mxu0 0
    %494 = vmatprep.subr.bf16.mxu0 0
    %495 = vmatpush2.bf16.msra.mxu0 0
    %496 = vmatprep.subr.bf16.mxu0 0
    %497 = vmatpush2.bf16.msra.mxu0 0
    %498 = vmatprep.subr.bf16.mxu0 0
    %499 = vmatpush2.bf16.msra.mxu0 0
    %500 = vmatprep.subr.bf16.mxu0 0
    %501 = vmatpush2.bf16.msra.mxu0 0
    %502 = vmatprep.subr.bf16.mxu0 0
    %503 = vmatpush2.bf16.msra.mxu0 0
    %504 = vmatprep.subr.bf16.mxu0 0
    %505 = vmatpush2.bf16.msra.mxu0 0
    %506 = vmatprep.mubr.bf16.mxu0 0
    %507 = vmatmul.mubr.bf16.gmra.mxu0 %v431
    %v508 = vpop.f32.mrf.mxu0
    %v509 = vadd.f32 0.0, %v508
    %v510 = vpop.f32.mrf.mxu0
    %v511 = vadd.f32 0.0, %v510
    %v512 = vpop.f32.mrf.mxu0
    %v513 = vpop.f32.mrf.mxu0
    %514 = vdwg.mxu0
    %v515 = vadd.f32 %v329, %v468
    %v516 = vadd.f32 %v330, %v470
    %v517 = vadd.f32 %v331, %v509
    %v518 = vadd.f32 %v332, %v511
    %v519 = vmul.f32 %v515, 0.5
    %v520 = vtanh.pop %v519
    %v521 = vadd.f32 %v520, 1.0
    %v522 = vmul.f32 %v521, 0.5
    %v523 = vmul.f32 %v516, 0.5
    %v524 = vtanh.pop %v523
    %v525 = vadd.f32 %v524, 1.0
    %v526 = vmul.f32 %v525, 0.5
    %v527 = vtanh.pop %v517
    %v528 = vmul.f32 %v518, 0.5
    %v529 = vtanh.pop %v528
    %v530 = vadd.f32 %v529, 1.0
    %v531 = vmul.f32 %v530, 0.5
    %v532 = vmul.f32 %v526, 0.0
    %v533 = vmul.f32 %v522, %v527
    %v534 = vadd.f32 %v532, %v533
    %v535 = vtanh.pop %v534
    %v536 = vmul.f32 %v531, %v535
    %537 = vrot.lane.b32.xlu0 0.0, 64
    %v538 = vpop.permute.xlu0 %537
    %v539 = vsel %vm328, %v536, %v538
    %v540 = vpack.c.bf16 %v539, %v539
    %v541 = vld [vmem:[%s4] sm:$0xff]
    %v542 = vld [vmem:[%s4 + $0x8] sm:$0xff]
    %v543 = vld [vmem:[%s4 + $0x10] sm:$0xff]
    %v544 = vld [vmem:[%s4 + $0x18] sm:$0xff]
    %v545 = vld [vmem:[%s4 + $0x20] sm:$0xff]
    %v546 = vld [vmem:[%s4 + $0x28] sm:$0xff]
    %v547 = vld [vmem:[%s4 + $0x30] sm:$0xff]
    %v548 = vld [vmem:[%s4 + $0x38] sm:$0xff]
    %v549 = vld [vmem:[%s4 + $0x40] sm:$0xff]
    %v550 = vld [vmem:[%s4 + $0x48] sm:$0xff]
    %v551 = vld [vmem:[%s4 + $0x50] sm:$0xff]
    %v552 = vld [vmem:[%s4 + $0x58] sm:$0xff]
    %v553 = vld [vmem:[%s4 + $0x60] sm:$0xff]
    %v554 = vld [vmem:[%s4 + $0x68] sm:$0xff]
    %v555 = vld [vmem:[%s4 + $0x70] sm:$0xff]
    %v556 = vld [vmem:[%s4 + $0x78] sm:$0xff]
    %v557 = vld [vmem:[%s4 + $0x80] sm:$0xff]
    %v558 = vld [vmem:[%s4 + $0x88] sm:$0xff]
    %v559 = vld [vmem:[%s4 + $0x90] sm:$0xff]
    %v560 = vld [vmem:[%s4 + $0x98] sm:$0xff]
    %v561 = vld [vmem:[%s4 + $0xa0] sm:$0xff]
    %v562 = vld [vmem:[%s4 + $0xa8] sm:$0xff]
    %v563 = vld [vmem:[%s4 + $0xb0] sm:$0xff]
    %v564 = vld [vmem:[%s4 + $0xb8] sm:$0xff]
    %v565 = vld [vmem:[%s4 + $0xc0] sm:$0xff]
    %v566 = vld [vmem:[%s4 + $0xc8] sm:$0xff]
    %v567 = vld [vmem:[%s4 + $0xd0] sm:$0xff]
    %v568 = vld [vmem:[%s4 + $0xd8] sm:$0xff]
    %v569 = vld [vmem:[%s4 + $0xe0] sm:$0xff]
    %v570 = vld [vmem:[%s4 + $0xe8] sm:$0xff]
    %v571 = vld [vmem:[%s4 + $0xf0] sm:$0xff]
    %v572 = vld [vmem:[%s4 + $0xf8] sm:$0xff]
    %v573 = vld [vmem:[%s5] sm:$0xf]
    %v575 = vlaneseq
    %v576 = vshrl.u32 %v575, 7
    %v577 = vsub.s32 0, %v576
    %v578 = vrot.slane %v573, %v577
    %v579 = vlaneseq
    %v580 = vshrl.u32 %v579, 7
    %v581 = vsub.s32 1, %v580
    %v582 = vrot.slane %v573, %v581
    %v583 = vlaneseq
    %v584 = vshrl.u32 %v583, 7
    %v585 = vsub.s32 2, %v584
    %v586 = vrot.slane %v573, %v585
    %v587 = vlaneseq
    %v588 = vshrl.u32 %v587, 7
    %v589 = vsub.s32 3, %v588
    %v590 = vrot.slane %v573, %v589
    %v627 = vunpack.c.l.b16 %v541
    %v628 = vunpack.c.h.b16 %v541
    %v629 = vunpack.c.l.b16 %v542
    %v630 = vunpack.c.h.b16 %v542
    %v631 = vunpack.c.l.b16 %v543
    %v632 = vunpack.c.h.b16 %v543
    %v633 = vunpack.c.l.b16 %v544
    %v634 = vunpack.c.h.b16 %v544
    %v635 = vunpack.c.l.b16 %v545
    %v636 = vunpack.c.h.b16 %v545
    %v637 = vunpack.c.l.b16 %v546
    %v638 = vunpack.c.h.b16 %v546
    %v639 = vunpack.c.l.b16 %v547
    %v640 = vunpack.c.h.b16 %v547
    %v641 = vunpack.c.l.b16 %v548
    %v642 = vunpack.c.h.b16 %v548
    %v643 = vunpack.c.l.b16 %v549
    %v644 = vunpack.c.h.b16 %v549
    %v645 = vunpack.c.l.b16 %v550
    %v646 = vunpack.c.h.b16 %v550
    %v647 = vunpack.c.l.b16 %v551
    %v648 = vunpack.c.h.b16 %v551
    %v649 = vunpack.c.l.b16 %v552
    %v650 = vunpack.c.h.b16 %v552
    %v651 = vunpack.c.l.b16 %v553
    %v652 = vunpack.c.h.b16 %v553
    %v653 = vunpack.c.l.b16 %v554
    %v654 = vunpack.c.h.b16 %v554
    %v655 = vunpack.c.l.b16 %v555
    %v656 = vunpack.c.h.b16 %v555
    %v657 = vunpack.c.l.b16 %v556
    %v658 = vunpack.c.h.b16 %v556
    %v659 = vunpack.c.l.b16 %v557
    %v660 = vunpack.c.h.b16 %v557
    %v661 = vunpack.c.l.b16 %v558
    %v662 = vunpack.c.h.b16 %v558
    %v663 = vunpack.c.l.b16 %v559
    %v664 = vunpack.c.h.b16 %v559
    %v665 = vunpack.c.l.b16 %v560
    %v666 = vunpack.c.h.b16 %v560
    %v667 = vunpack.c.l.b16 %v561
    %v668 = vunpack.c.h.b16 %v561
    %v669 = vunpack.c.l.b16 %v562
    %v670 = vunpack.c.h.b16 %v562
    %v671 = vunpack.c.l.b16 %v563
    %v672 = vunpack.c.h.b16 %v563
    %v673 = vunpack.c.l.b16 %v564
    %v674 = vunpack.c.h.b16 %v564
    %v675 = vunpack.c.l.b16 %v565
    %v676 = vunpack.c.h.b16 %v565
    %v677 = vunpack.c.l.b16 %v566
    %v678 = vunpack.c.h.b16 %v566
    %v679 = vunpack.c.l.b16 %v567
    %v680 = vunpack.c.h.b16 %v567
    %v681 = vunpack.c.l.b16 %v568
    %v682 = vunpack.c.h.b16 %v568
    %v683 = vunpack.c.l.b16 %v569
    %v684 = vunpack.c.h.b16 %v569
    %v685 = vunpack.c.l.b16 %v570
    %v686 = vunpack.c.h.b16 %v570
    %v687 = vunpack.c.l.b16 %v571
    %v688 = vunpack.c.h.b16 %v571
    %v689 = vunpack.c.l.b16 %v572
    %v690 = vunpack.c.h.b16 %v572
    %v691 = vpack.c.b16 %v631, %v627
    %v692 = vpack.c.b16 %v632, %v628
    %v693 = vpack.c.b16 %v633, %v629
    %v694 = vpack.c.b16 %v634, %v630
    %v695 = vpack.c.b16 %v639, %v635
    %v696 = vpack.c.b16 %v640, %v636
    %v697 = vpack.c.b16 %v641, %v637
    %v698 = vpack.c.b16 %v642, %v638
    %v699 = vpack.c.b16 %v647, %v643
    %v700 = vpack.c.b16 %v648, %v644
    %v701 = vpack.c.b16 %v649, %v645
    %v702 = vpack.c.b16 %v650, %v646
    %v703 = vpack.c.b16 %v655, %v651
    %v704 = vpack.c.b16 %v656, %v652
    %v705 = vpack.c.b16 %v657, %v653
    %v706 = vpack.c.b16 %v658, %v654
    %v707 = vpack.c.b16 %v663, %v659
    %v708 = vpack.c.b16 %v664, %v660
    %v709 = vpack.c.b16 %v665, %v661
    %v710 = vpack.c.b16 %v666, %v662
    %v711 = vpack.c.b16 %v671, %v667
    %v712 = vpack.c.b16 %v672, %v668
    %v713 = vpack.c.b16 %v673, %v669
    %v714 = vpack.c.b16 %v674, %v670
    %v715 = vpack.c.b16 %v679, %v675
    %v716 = vpack.c.b16 %v680, %v676
    %v717 = vpack.c.b16 %v681, %v677
    %v718 = vpack.c.b16 %v682, %v678
    %v719 = vpack.c.b16 %v687, %v683
    %v720 = vpack.c.b16 %v688, %v684
    %v721 = vpack.c.b16 %v689, %v685
    %v722 = vpack.c.b16 %v690, %v686
    %755 = vmatprep.subr.bf16.mxu0 %v720
    %756 = vmatpush1.bf16.msra.mxu0 %v719
    %757 = vmatprep.subr.bf16.mxu0 %v716
    %758 = vmatpush1.bf16.msra.mxu0 %v715
    %759 = vmatprep.subr.bf16.mxu0 %v712
    %760 = vmatpush1.bf16.msra.mxu0 %v711
    %761 = vmatprep.subr.bf16.mxu0 %v708
    %762 = vmatpush1.bf16.msra.mxu0 %v707
    %763 = vmatprep.subr.bf16.mxu0 %v704
    %764 = vmatpush1.bf16.msra.mxu0 %v703
    %765 = vmatprep.subr.bf16.mxu0 %v700
    %766 = vmatpush1.bf16.msra.mxu0 %v699
    %767 = vmatprep.subr.bf16.mxu0 %v696
    %768 = vmatpush1.bf16.msra.mxu0 %v695
    %769 = vmatprep.subr.bf16.mxu0 %v692
    %770 = vmatpush1.bf16.msra.mxu0 %v691
    %771 = vmatprep.subr.bf16.mxu0 0
    %772 = vmatpush2.bf16.msra.mxu0 0
    %773 = vmatprep.subr.bf16.mxu0 0
    %774 = vmatpush2.bf16.msra.mxu0 0
    %775 = vmatprep.subr.bf16.mxu0 0
    %776 = vmatpush2.bf16.msra.mxu0 0
    %777 = vmatprep.subr.bf16.mxu0 0
    %778 = vmatpush2.bf16.msra.mxu0 0
    %779 = vmatprep.subr.bf16.mxu0 0
    %780 = vmatpush2.bf16.msra.mxu0 0
    %781 = vmatprep.subr.bf16.mxu0 0
    %782 = vmatpush2.bf16.msra.mxu0 0
    %783 = vmatprep.subr.bf16.mxu0 0
    %784 = vmatpush2.bf16.msra.mxu0 0
    %785 = vmatprep.subr.bf16.mxu0 0
    %786 = vmatpush2.bf16.msra.mxu0 0
    %787 = vmatprep.mubr.bf16.mxu0 0
    %788 = vmatmul.mubr.bf16.gmra.mxu0 %v540
    %v789 = vpop.f32.mrf.mxu0
    %v790 = vadd.f32 %v578, %v789
    %v791 = vpop.f32.mrf.mxu0
    %v792 = vadd.f32 %v582, %v791
    %v793 = vpop.f32.mrf.mxu0
    %v794 = vpop.f32.mrf.mxu0
    %795 = vdwg.mxu0
    %796 = vmatprep.subr.bf16.mxu0 %v722
    %797 = vmatpush1.bf16.msra.mxu0 %v721
    %798 = vmatprep.subr.bf16.mxu0 %v718
    %799 = vmatpush1.bf16.msra.mxu0 %v717
    %800 = vmatprep.subr.bf16.mxu0 %v714
    %801 = vmatpush1.bf16.msra.mxu0 %v713
    %802 = vmatprep.subr.bf16.mxu0 %v710
    %803 = vmatpush1.bf16.msra.mxu0 %v709
    %804 = vmatprep.subr.bf16.mxu0 %v706
    %805 = vmatpush1.bf16.msra.mxu0 %v705
    %806 = vmatprep.subr.bf16.mxu0 %v702
    %807 = vmatpush1.bf16.msra.mxu0 %v701
    %808 = vmatprep.subr.bf16.mxu0 %v698
    %809 = vmatpush1.bf16.msra.mxu0 %v697
    %810 = vmatprep.subr.bf16.mxu0 %v694
    %811 = vmatpush1.bf16.msra.mxu0 %v693
    %812 = vmatprep.subr.bf16.mxu0 0
    %813 = vmatpush2.bf16.msra.mxu0 0
    %814 = vmatprep.subr.bf16.mxu0 0
    %815 = vmatpush2.bf16.msra.mxu0 0
    %816 = vmatprep.subr.bf16.mxu0 0
    %817 = vmatpush2.bf16.msra.mxu0 0
    %818 = vmatprep.subr.bf16.mxu0 0
    %819 = vmatpush2.bf16.msra.mxu0 0
    %820 = vmatprep.subr.bf16.mxu0 0
    %821 = vmatpush2.bf16.msra.mxu0 0
    %822 = vmatprep.subr.bf16.mxu0 0
    %823 = vmatpush2.bf16.msra.mxu0 0
    %824 = vmatprep.subr.bf16.mxu0 0
    %825 = vmatpush2.bf16.msra.mxu0 0
    %826 = vmatprep.subr.bf16.mxu0 0
    %827 = vmatpush2.bf16.msra.mxu0 0
    %828 = vmatprep.mubr.bf16.mxu0 0
    %829 = vmatmul.mubr.bf16.gmra.mxu0 %v540
    %v830 = vpop.f32.mrf.mxu0
    %v831 = vadd.f32 %v586, %v830
    %v832 = vpop.f32.mrf.mxu0
    %v833 = vadd.f32 %v590, %v832
    %v834 = vpop.f32.mrf.mxu0
    %v835 = vpop.f32.mrf.mxu0
    %836 = vdwg.mxu0
    %v837 = vmul.f32 %v790, 0.5
    %v838 = vtanh.pop %v837
    %v839 = vadd.f32 %v838, 1.0
    %v840 = vmul.f32 %v839, 0.5
    %v841 = vmul.f32 %v792, 0.5
    %v842 = vtanh.pop %v841
    %v843 = vadd.f32 %v842, 1.0
    %v844 = vmul.f32 %v843, 0.5
    %v845 = vtanh.pop %v831
    %v846 = vmul.f32 %v833, 0.5
    %v847 = vtanh.pop %v846
    %v848 = vadd.f32 %v847, 1.0
    %v849 = vmul.f32 %v848, 0.5
    %v850 = vmul.f32 %v844, 0.0
    %v851 = vmul.f32 %v840, %v845
    %v852 = vadd.f32 %v850, %v851
    %v853 = vtanh.pop %v852
    %v854 = vmul.f32 %v849, %v853
    %855 = vst [vmem:[#allocation3] sm:$0xff] %v854
    %v856 = vld [vmem:[#allocation2 + $0x20] sm:$0xff]
    %v857 = vld [vmem:[#allocation2 + $0x28] sm:$0xff]
    %v858 = vld [vmem:[#allocation2 + $0x30] sm:$0xff]
    %v859 = vld [vmem:[#allocation2 + $0x38] sm:$0xff]
    %v860 = vpack.c.bf16 %v536, %v536
    %v861 = vld [vmem:[%s3] sm:$0xff]
    %v862 = vld [vmem:[%s3 + $0x8] sm:$0xff]
    %v863 = vld [vmem:[%s3 + $0x10] sm:$0xff]
    %v864 = vld [vmem:[%s3 + $0x18] sm:$0xff]
    %v865 = vld [vmem:[%s3 + $0x20] sm:$0xff]
    %v866 = vld [vmem:[%s3 + $0x28] sm:$0xff]
    %v867 = vld [vmem:[%s3 + $0x30] sm:$0xff]
    %v868 = vld [vmem:[%s3 + $0x38] sm:$0xff]
    %v869 = vld [vmem:[%s3 + $0x40] sm:$0xff]
    %v870 = vld [vmem:[%s3 + $0x48] sm:$0xff]
    %v871 = vld [vmem:[%s3 + $0x50] sm:$0xff]
    %v872 = vld [vmem:[%s3 + $0x58] sm:$0xff]
    %v873 = vld [vmem:[%s3 + $0x60] sm:$0xff]
    %v874 = vld [vmem:[%s3 + $0x68] sm:$0xff]
    %v875 = vld [vmem:[%s3 + $0x70] sm:$0xff]
    %v876 = vld [vmem:[%s3 + $0x78] sm:$0xff]
    %v893 = vunpack.c.l.b16 %v861
    %v894 = vunpack.c.h.b16 %v861
    %v895 = vunpack.c.l.b16 %v862
    %v896 = vunpack.c.h.b16 %v862
    %v897 = vunpack.c.l.b16 %v863
    %v898 = vunpack.c.h.b16 %v863
    %v899 = vunpack.c.l.b16 %v864
    %v900 = vunpack.c.h.b16 %v864
    %v901 = vunpack.c.l.b16 %v865
    %v902 = vunpack.c.h.b16 %v865
    %v903 = vunpack.c.l.b16 %v866
    %v904 = vunpack.c.h.b16 %v866
    %v905 = vunpack.c.l.b16 %v867
    %v906 = vunpack.c.h.b16 %v867
    %v907 = vunpack.c.l.b16 %v868
    %v908 = vunpack.c.h.b16 %v868
    %v909 = vunpack.c.l.b16 %v869
    %v910 = vunpack.c.h.b16 %v869
    %v911 = vunpack.c.l.b16 %v870
    %v912 = vunpack.c.h.b16 %v870
    %v913 = vunpack.c.l.b16 %v871
    %v914 = vunpack.c.h.b16 %v871
    %v915 = vunpack.c.l.b16 %v872
    %v916 = vunpack.c.h.b16 %v872
    %v917 = vunpack.c.l.b16 %v873
    %v918 = vunpack.c.h.b16 %v873
    %v919 = vunpack.c.l.b16 %v874
    %v920 = vunpack.c.h.b16 %v874
    %v921 = vunpack.c.l.b16 %v875
    %v922 = vunpack.c.h.b16 %v875
    %v923 = vunpack.c.l.b16 %v876
    %v924 = vunpack.c.h.b16 %v876
    %v925 = vpack.c.b16 %v897, %v893
    %v926 = vpack.c.b16 %v898, %v894
    %v927 = vpack.c.b16 %v899, %v895
    %v928 = vpack.c.b16 %v900, %v896
    %v929 = vpack.c.b16 %v905, %v901
    %v930 = vpack.c.b16 %v906, %v902
    %v931 = vpack.c.b16 %v907, %v903
    %v932 = vpack.c.b16 %v908, %v904
    %v933 = vpack.c.b16 %v913, %v909
    %v934 = vpack.c.b16 %v914, %v910
    %v935 = vpack.c.b16 %v915, %v911
    %v936 = vpack.c.b16 %v916, %v912
    %v937 = vpack.c.b16 %v921, %v917
    %v938 = vpack.c.b16 %v922, %v918
    %v939 = vpack.c.b16 %v923, %v919
    %v940 = vpack.c.b16 %v924, %v920
    %v958 = vsel %vm429, %v860, 0
    %960 = vmatprep.subr.bf16.mxu0 0
    %961 = vmatpush1.bf16.msra.mxu0 0
    %962 = vmatprep.subr.bf16.mxu0 0
    %963 = vmatpush1.bf16.msra.mxu0 0
    %964 = vmatprep.subr.bf16.mxu0 0
    %965 = vmatpush1.bf16.msra.mxu0 0
    %966 = vmatprep.subr.bf16.mxu0 0
    %967 = vmatpush1.bf16.msra.mxu0 0
    %968 = vmatprep.subr.bf16.mxu0 %v938
    %969 = vmatpush1.bf16.msra.mxu0 %v937
    %970 = vmatprep.subr.bf16.mxu0 %v934
    %971 = vmatpush1.bf16.msra.mxu0 %v933
    %972 = vmatprep.subr.bf16.mxu0 %v930
    %973 = vmatpush1.bf16.msra.mxu0 %v929
    %974 = vmatprep.subr.bf16.mxu0 %v926
    %975 = vmatpush1.bf16.msra.mxu0 %v925
    %976 = vmatprep.subr.bf16.mxu0 0
    %977 = vmatpush2.bf16.msra.mxu0 0
    %978 = vmatprep.subr.bf16.mxu0 0
    %979 = vmatpush2.bf16.msra.mxu0 0
    %980 = vmatprep.subr.bf16.mxu0 0
    %981 = vmatpush2.bf16.msra.mxu0 0
    %982 = vmatprep.subr.bf16.mxu0 0
    %983 = vmatpush2.bf16.msra.mxu0 0
    %984 = vmatprep.subr.bf16.mxu0 0
    %985 = vmatpush2.bf16.msra.mxu0 0
    %986 = vmatprep.subr.bf16.mxu0 0
    %987 = vmatpush2.bf16.msra.mxu0 0
    %988 = vmatprep.subr.bf16.mxu0 0
    %989 = vmatpush2.bf16.msra.mxu0 0
    %990 = vmatprep.subr.bf16.mxu0 0
    %991 = vmatpush2.bf16.msra.mxu0 0
    %992 = vmatprep.mubr.bf16.mxu0 0
    %993 = vmatmul.mubr.bf16.gmra.mxu0 %v958
    %v994 = vpop.f32.mrf.mxu0
    %v995 = vadd.f32 0.0, %v994
    %v996 = vpop.f32.mrf.mxu0
    %v997 = vadd.f32 0.0, %v996
    %v998 = vpop.f32.mrf.mxu0
    %v999 = vpop.f32.mrf.mxu0
    %1000 = vdwg.mxu0
    %1001 = vmatprep.subr.bf16.mxu0 0
    %1002 = vmatpush1.bf16.msra.mxu0 0
    %1003 = vmatprep.subr.bf16.mxu0 0
    %1004 = vmatpush1.bf16.msra.mxu0 0
    %1005 = vmatprep.subr.bf16.mxu0 0
    %1006 = vmatpush1.bf16.msra.mxu0 0
    %1007 = vmatprep.subr.bf16.mxu0 0
    %1008 = vmatpush1.bf16.msra.mxu0 0
    %1009 = vmatprep.subr.bf16.mxu0 %v940
    %1010 = vmatpush1.bf16.msra.mxu0 %v939
    %1011 = vmatprep.subr.bf16.mxu0 %v936
    %1012 = vmatpush1.bf16.msra.mxu0 %v935
    %1013 = vmatprep.subr.bf16.mxu0 %v932
    %1014 = vmatpush1.bf16.msra.mxu0 %v931
    %1015 = vmatprep.subr.bf16.mxu0 %v928
    %1016 = vmatpush1.bf16.msra.mxu0 %v927
    %1017 = vmatprep.subr.bf16.mxu0 0
    %1018 = vmatpush2.bf16.msra.mxu0 0
    %1019 = vmatprep.subr.bf16.mxu0 0
    %1020 = vmatpush2.bf16.msra.mxu0 0
    %1021 = vmatprep.subr.bf16.mxu0 0
    %1022 = vmatpush2.bf16.msra.mxu0 0
    %1023 = vmatprep.subr.bf16.mxu0 0
    %1024 = vmatpush2.bf16.msra.mxu0 0
    %1025 = vmatprep.subr.bf16.mxu0 0
    %1026 = vmatpush2.bf16.msra.mxu0 0
    %1027 = vmatprep.subr.bf16.mxu0 0
    %1028 = vmatpush2.bf16.msra.mxu0 0
    %1029 = vmatprep.subr.bf16.mxu0 0
    %1030 = vmatpush2.bf16.msra.mxu0 0
    %1031 = vmatprep.subr.bf16.mxu0 0
    %1032 = vmatpush2.bf16.msra.mxu0 0
    %1033 = vmatprep.mubr.bf16.mxu0 0
    %1034 = vmatmul.mubr.bf16.gmra.mxu0 %v958
    %v1035 = vpop.f32.mrf.mxu0
    %v1036 = vadd.f32 0.0, %v1035
    %v1037 = vpop.f32.mrf.mxu0
    %v1038 = vadd.f32 0.0, %v1037
    %v1039 = vpop.f32.mrf.mxu0
    %v1040 = vpop.f32.mrf.mxu0
    %1041 = vdwg.mxu0
    %v1042 = vadd.f32 %v856, %v995
    %v1043 = vadd.f32 %v857, %v997
    %v1044 = vadd.f32 %v858, %v1036
    %v1045 = vadd.f32 %v859, %v1038
    %v1046 = vmul.f32 %v1042, 0.5
    %v1047 = vtanh.pop %v1046
    %v1048 = vadd.f32 %v1047, 1.0
    %v1049 = vmul.f32 %v1048, 0.5
    %v1050 = vmul.f32 %v1043, 0.5
    %v1051 = vtanh.pop %v1050
    %v1052 = vadd.f32 %v1051, 1.0
    %v1053 = vmul.f32 %v1052, 0.5
    %v1054 = vtanh.pop %v1044
    %v1055 = vmul.f32 %v1045, 0.5
    %v1056 = vtanh.pop %v1055
    %v1057 = vadd.f32 %v1056, 1.0
    %v1058 = vmul.f32 %v1057, 0.5
    %v1059 = vmul.f32 %v1053, %v534
    %v1060 = vmul.f32 %v1049, %v1054
    %v1061 = vadd.f32 %v1059, %v1060
    %v1062 = vtanh.pop %v1061
    %v1063 = vmul.f32 %v1058, %v1062
    %1064 = vrot.lane.b32.xlu0 %v854, 64
    %v1065 = vpop.permute.xlu0 %1064
    %v1066 = vsel %vm328, %v1063, %v1065
    %v1067 = vpack.c.bf16 %v1066, %v1066
    %v1068 = vld [vmem:[%s4] sm:$0xff]
    %v1069 = vld [vmem:[%s4 + $0x8] sm:$0xff]
    %v1070 = vld [vmem:[%s4 + $0x10] sm:$0xff]
    %v1071 = vld [vmem:[%s4 + $0x18] sm:$0xff]
    %v1072 = vld [vmem:[%s4 + $0x20] sm:$0xff]
    %v1073 = vld [vmem:[%s4 + $0x28] sm:$0xff]
    %v1074 = vld [vmem:[%s4 + $0x30] sm:$0xff]
    %v1075 = vld [vmem:[%s4 + $0x38] sm:$0xff]
    %v1076 = vld [vmem:[%s4 + $0x40] sm:$0xff]
    %v1077 = vld [vmem:[%s4 + $0x48] sm:$0xff]
    %v1078 = vld [vmem:[%s4 + $0x50] sm:$0xff]
    %v1079 = vld [vmem:[%s4 + $0x58] sm:$0xff]
    %v1080 = vld [vmem:[%s4 + $0x60] sm:$0xff]
    %v1081 = vld [vmem:[%s4 + $0x68] sm:$0xff]
    %v1082 = vld [vmem:[%s4 + $0x70] sm:$0xff]
    %v1083 = vld [vmem:[%s4 + $0x78] sm:$0xff]
    %v1084 = vld [vmem:[%s4 + $0x80] sm:$0xff]
    %v1085 = vld [vmem:[%s4 + $0x88] sm:$0xff]
    %v1086 = vld [vmem:[%s4 + $0x90] sm:$0xff]
    %v1087 = vld [vmem:[%s4 + $0x98] sm:$0xff]
    %v1088 = vld [vmem:[%s4 + $0xa0] sm:$0xff]
    %v1089 = vld [vmem:[%s4 + $0xa8] sm:$0xff]
    %v1090 = vld [vmem:[%s4 + $0xb0] sm:$0xff]
    %v1091 = vld [vmem:[%s4 + $0xb8] sm:$0xff]
    %v1092 = vld [vmem:[%s4 + $0xc0] sm:$0xff]
    %v1093 = vld [vmem:[%s4 + $0xc8] sm:$0xff]
    %v1094 = vld [vmem:[%s4 + $0xd0] sm:$0xff]
    %v1095 = vld [vmem:[%s4 + $0xd8] sm:$0xff]
    %v1096 = vld [vmem:[%s4 + $0xe0] sm:$0xff]
    %v1097 = vld [vmem:[%s4 + $0xe8] sm:$0xff]
    %v1098 = vld [vmem:[%s4 + $0xf0] sm:$0xff]
    %v1099 = vld [vmem:[%s4 + $0xf8] sm:$0xff]
    %v1100 = vld [vmem:[%s5] sm:$0xf]
    %v1102 = vlaneseq
    %v1103 = vshrl.u32 %v1102, 7
    %v1104 = vsub.s32 0, %v1103
    %v1105 = vrot.slane %v1100, %v1104
    %v1106 = vlaneseq
    %v1107 = vshrl.u32 %v1106, 7
    %v1108 = vsub.s32 1, %v1107
    %v1109 = vrot.slane %v1100, %v1108
    %v1110 = vlaneseq
    %v1111 = vshrl.u32 %v1110, 7
    %v1112 = vsub.s32 2, %v1111
    %v1113 = vrot.slane %v1100, %v1112
    %v1114 = vlaneseq
    %v1115 = vshrl.u32 %v1114, 7
    %v1116 = vsub.s32 3, %v1115
    %v1117 = vrot.slane %v1100, %v1116
    %v1154 = vunpack.c.l.b16 %v1068
    %v1155 = vunpack.c.h.b16 %v1068
    %v1156 = vunpack.c.l.b16 %v1069
    %v1157 = vunpack.c.h.b16 %v1069
    %v1158 = vunpack.c.l.b16 %v1070
    %v1159 = vunpack.c.h.b16 %v1070
    %v1160 = vunpack.c.l.b16 %v1071
    %v1161 = vunpack.c.h.b16 %v1071
    %v1162 = vunpack.c.l.b16 %v1072
    %v1163 = vunpack.c.h.b16 %v1072
    %v1164 = vunpack.c.l.b16 %v1073
    %v1165 = vunpack.c.h.b16 %v1073
    %v1166 = vunpack.c.l.b16 %v1074
    %v1167 = vunpack.c.h.b16 %v1074
    %v1168 = vunpack.c.l.b16 %v1075
    %v1169 = vunpack.c.h.b16 %v1075
    %v1170 = vunpack.c.l.b16 %v1076
    %v1171 = vunpack.c.h.b16 %v1076
    %v1172 = vunpack.c.l.b16 %v1077
    %v1173 = vunpack.c.h.b16 %v1077
    %v1174 = vunpack.c.l.b16 %v1078
    %v1175 = vunpack.c.h.b16 %v1078
    %v1176 = vunpack.c.l.b16 %v1079
    %v1177 = vunpack.c.h.b16 %v1079
    %v1178 = vunpack.c.l.b16 %v1080
    %v1179 = vunpack.c.h.b16 %v1080
    %v1180 = vunpack.c.l.b16 %v1081
    %v1181 = vunpack.c.h.b16 %v1081
    %v1182 = vunpack.c.l.b16 %v1082
    %v1183 = vunpack.c.h.b16 %v1082
    %v1184 = vunpack.c.l.b16 %v1083
    %v1185 = vunpack.c.h.b16 %v1083
    %v1186 = vunpack.c.l.b16 %v1084
    %v1187 = vunpack.c.h.b16 %v1084
    %v1188 = vunpack.c.l.b16 %v1085
    %v1189 = vunpack.c.h.b16 %v1085
    %v1190 = vunpack.c.l.b16 %v1086
    %v1191 = vunpack.c.h.b16 %v1086
    %v1192 = vunpack.c.l.b16 %v1087
    %v1193 = vunpack.c.h.b16 %v1087
    %v1194 = vunpack.c.l.b16 %v1088
    %v1195 = vunpack.c.h.b16 %v1088
    %v1196 = vunpack.c.l.b16 %v1089
    %v1197 = vunpack.c.h.b16 %v1089
    %v1198 = vunpack.c.l.b16 %v1090
    %v1199 = vunpack.c.h.b16 %v1090
    %v1200 = vunpack.c.l.b16 %v1091
    %v1201 = vunpack.c.h.b16 %v1091
    %v1202 = vunpack.c.l.b16 %v1092
    %v1203 = vunpack.c.h.b16 %v1092
    %v1204 = vunpack.c.l.b16 %v1093
    %v1205 = vunpack.c.h.b16 %v1093
    %v1206 = vunpack.c.l.b16 %v1094
    %v1207 = vunpack.c.h.b16 %v1094
    %v1208 = vunpack.c.l.b16 %v1095
    %v1209 = vunpack.c.h.b16 %v1095
    %v1210 = vunpack.c.l.b16 %v1096
    %v1211 = vunpack.c.h.b16 %v1096
    %v1212 = vunpack.c.l.b16 %v1097
    %v1213 = vunpack.c.h.b16 %v1097
    %v1214 = vunpack.c.l.b16 %v1098
    %v1215 = vunpack.c.h.b16 %v1098
    %v1216 = vunpack.c.l.b16 %v1099
    %v1217 = vunpack.c.h.b16 %v1099
    %v1218 = vpack.c.b16 %v1158, %v1154
    %v1219 = vpack.c.b16 %v1159, %v1155
    %v1220 = vpack.c.b16 %v1160, %v1156
    %v1221 = vpack.c.b16 %v1161, %v1157
    %v1222 = vpack.c.b16 %v1166, %v1162
    %v1223 = vpack.c.b16 %v1167, %v1163
    %v1224 = vpack.c.b16 %v1168, %v1164
    %v1225 = vpack.c.b16 %v1169, %v1165
    %v1226 = vpack.c.b16 %v1174, %v1170
    %v1227 = vpack.c.b16 %v1175, %v1171
    %v1228 = vpack.c.b16 %v1176, %v1172
    %v1229 = vpack.c.b16 %v1177, %v1173
    %v1230 = vpack.c.b16 %v1182, %v1178
    %v1231 = vpack.c.b16 %v1183, %v1179
    %v1232 = vpack.c.b16 %v1184, %v1180
    %v1233 = vpack.c.b16 %v1185, %v1181
    %v1234 = vpack.c.b16 %v1190, %v1186
    %v1235 = vpack.c.b16 %v1191, %v1187
    %v1236 = vpack.c.b16 %v1192, %v1188
    %v1237 = vpack.c.b16 %v1193, %v1189
    %v1238 = vpack.c.b16 %v1198, %v1194
    %v1239 = vpack.c.b16 %v1199, %v1195
    %v1240 = vpack.c.b16 %v1200, %v1196
    %v1241 = vpack.c.b16 %v1201, %v1197
    %v1242 = vpack.c.b16 %v1206, %v1202
    %v1243 = vpack.c.b16 %v1207, %v1203
    %v1244 = vpack.c.b16 %v1208, %v1204
    %v1245 = vpack.c.b16 %v1209, %v1205
    %v1246 = vpack.c.b16 %v1214, %v1210
    %v1247 = vpack.c.b16 %v1215, %v1211
    %v1248 = vpack.c.b16 %v1216, %v1212
    %v1249 = vpack.c.b16 %v1217, %v1213
    %1282 = vmatprep.subr.bf16.mxu0 %v1247
    %1283 = vmatpush1.bf16.msra.mxu0 %v1246
    %1284 = vmatprep.subr.bf16.mxu0 %v1243
    %1285 = vmatpush1.bf16.msra.mxu0 %v1242
    %1286 = vmatprep.subr.bf16.mxu0 %v1239
    %1287 = vmatpush1.bf16.msra.mxu0 %v1238
    %1288 = vmatprep.subr.bf16.mxu0 %v1235
    %1289 = vmatpush1.bf16.msra.mxu0 %v1234
    %1290 = vmatprep.subr.bf16.mxu0 %v1231
    %1291 = vmatpush1.bf16.msra.mxu0 %v1230
    %1292 = vmatprep.subr.bf16.mxu0 %v1227
    %1293 = vmatpush1.bf16.msra.mxu0 %v1226
    %1294 = vmatprep.subr.bf16.mxu0 %v1223
    %1295 = vmatpush1.bf16.msra.mxu0 %v1222
    %1296 = vmatprep.subr.bf16.mxu0 %v1219
    %1297 = vmatpush1.bf16.msra.mxu0 %v1218
    %1298 = vmatprep.subr.bf16.mxu0 0
    %1299 = vmatpush2.bf16.msra.mxu0 0
    %1300 = vmatprep.subr.bf16.mxu0 0
    %1301 = vmatpush2.bf16.msra.mxu0 0
    %1302 = vmatprep.subr.bf16.mxu0 0
    %1303 = vmatpush2.bf16.msra.mxu0 0
    %1304 = vmatprep.subr.bf16.mxu0 0
    %1305 = vmatpush2.bf16.msra.mxu0 0
    %1306 = vmatprep.subr.bf16.mxu0 0
    %1307 = vmatpush2.bf16.msra.mxu0 0
    %1308 = vmatprep.subr.bf16.mxu0 0
    %1309 = vmatpush2.bf16.msra.mxu0 0
    %1310 = vmatprep.subr.bf16.mxu0 0
    %1311 = vmatpush2.bf16.msra.mxu0 0
    %1312 = vmatprep.subr.bf16.mxu0 0
    %1313 = vmatpush2.bf16.msra.mxu0 0
    %1314 = vmatprep.mubr.bf16.mxu0 0
    %1315 = vmatmul.mubr.bf16.gmra.mxu0 %v1067
    %v1316 = vpop.f32.mrf.mxu0
    %v1317 = vadd.f32 %v1105, %v1316
    %v1318 = vpop.f32.mrf.mxu0
    %v1319 = vadd.f32 %v1109, %v1318
    %v1320 = vpop.f32.mrf.mxu0
    %v1321 = vpop.f32.mrf.mxu0
    %1322 = vdwg.mxu0
    %1323 = vmatprep.subr.bf16.mxu0 %v1249
    %1324 = vmatpush1.bf16.msra.mxu0 %v1248
    %1325 = vmatprep.subr.bf16.mxu0 %v1245
    %1326 = vmatpush1.bf16.msra.mxu0 %v1244
    %1327 = vmatprep.subr.bf16.mxu0 %v1241
    %1328 = vmatpush1.bf16.msra.mxu0 %v1240
    %1329 = vmatprep.subr.bf16.mxu0 %v1237
    %1330 = vmatpush1.bf16.msra.mxu0 %v1236
    %1331 = vmatprep.subr.bf16.mxu0 %v1233
    %1332 = vmatpush1.bf16.msra.mxu0 %v1232
    %1333 = vmatprep.subr.bf16.mxu0 %v1229
    %1334 = vmatpush1.bf16.msra.mxu0 %v1228
    %1335 = vmatprep.subr.bf16.mxu0 %v1225
    %1336 = vmatpush1.bf16.msra.mxu0 %v1224
    %1337 = vmatprep.subr.bf16.mxu0 %v1221
    %1338 = vmatpush1.bf16.msra.mxu0 %v1220
    %1339 = vmatprep.subr.bf16.mxu0 0
    %1340 = vmatpush2.bf16.msra.mxu0 0
    %1341 = vmatprep.subr.bf16.mxu0 0
    %1342 = vmatpush2.bf16.msra.mxu0 0
    %1343 = vmatprep.subr.bf16.mxu0 0
    %1344 = vmatpush2.bf16.msra.mxu0 0
    %1345 = vmatprep.subr.bf16.mxu0 0
    %1346 = vmatpush2.bf16.msra.mxu0 0
    %1347 = vmatprep.subr.bf16.mxu0 0
    %1348 = vmatpush2.bf16.msra.mxu0 0
    %1349 = vmatprep.subr.bf16.mxu0 0
    %1350 = vmatpush2.bf16.msra.mxu0 0
    %1351 = vmatprep.subr.bf16.mxu0 0
    %1352 = vmatpush2.bf16.msra.mxu0 0
    %1353 = vmatprep.subr.bf16.mxu0 0
    %1354 = vmatpush2.bf16.msra.mxu0 0
    %1355 = vmatprep.mubr.bf16.mxu0 0
    %1356 = vmatmul.mubr.bf16.gmra.mxu0 %v1067
    %v1357 = vpop.f32.mrf.mxu0
    %v1358 = vadd.f32 %v1113, %v1357
    %v1359 = vpop.f32.mrf.mxu0
    %v1360 = vadd.f32 %v1117, %v1359
    %v1361 = vpop.f32.mrf.mxu0
    %v1362 = vpop.f32.mrf.mxu0
    %1363 = vdwg.mxu0
    %v1364 = vmul.f32 %v1317, 0.5
    %v1365 = vtanh.pop %v1364
    %v1366 = vadd.f32 %v1365, 1.0
    %v1367 = vmul.f32 %v1366, 0.5
    %v1368 = vmul.f32 %v1319, 0.5
    %v1369 = vtanh.pop %v1368
    %v1370 = vadd.f32 %v1369, 1.0
    %v1371 = vmul.f32 %v1370, 0.5
    %v1372 = vtanh.pop %v1358
    %v1373 = vmul.f32 %v1360, 0.5
    %v1374 = vtanh.pop %v1373
    %v1375 = vadd.f32 %v1374, 1.0
    %v1376 = vmul.f32 %v1375, 0.5
    %v1377 = vmul.f32 %v1371, %v852
    %v1378 = vmul.f32 %v1367, %v1372
    %v1379 = vadd.f32 %v1377, %v1378
    %v1380 = vtanh.pop %v1379
    %v1381 = vmul.f32 %v1376, %v1380
    %1382 = vst [vmem:[#allocation3 + $0x8] sm:$0xff] %v1381
    %v1383 = vld [vmem:[#allocation2 + $0x40] sm:$0xff]
    %v1384 = vld [vmem:[#allocation2 + $0x48] sm:$0xff]
    %v1385 = vld [vmem:[#allocation2 + $0x50] sm:$0xff]
    %v1386 = vld [vmem:[#allocation2 + $0x58] sm:$0xff]
    %v1387 = vpack.c.bf16 %v1063, %v1063
    %v1388 = vld [vmem:[%s3] sm:$0xff]
    %v1389 = vld [vmem:[%s3 + $0x8] sm:$0xff]
    %v1390 = vld [vmem:[%s3 + $0x10] sm:$0xff]
    %v1391 = vld [vmem:[%s3 + $0x18] sm:$0xff]
    %v1392 = vld [vmem:[%s3 + $0x20] sm:$0xff]
    %v1393 = vld [vmem:[%s3 + $0x28] sm:$0xff]
    %v1394 = vld [vmem:[%s3 + $0x30] sm:$0xff]
    %v1395 = vld [vmem:[%s3 + $0x38] sm:$0xff]
    %v1396 = vld [vmem:[%s3 + $0x40] sm:$0xff]
    %v1397 = vld [vmem:[%s3 + $0x48] sm:$0xff]
    %v1398 = vld [vmem:[%s3 + $0x50] sm:$0xff]
    %v1399 = vld [vmem:[%s3 + $0x58] sm:$0xff]
    %v1400 = vld [vmem:[%s3 + $0x60] sm:$0xff]
    %v1401 = vld [vmem:[%s3 + $0x68] sm:$0xff]
    %v1402 = vld [vmem:[%s3 + $0x70] sm:$0xff]
    %v1403 = vld [vmem:[%s3 + $0x78] sm:$0xff]
    %v1420 = vunpack.c.l.b16 %v1388
    %v1421 = vunpack.c.h.b16 %v1388
    %v1422 = vunpack.c.l.b16 %v1389
    %v1423 = vunpack.c.h.b16 %v1389
    %v1424 = vunpack.c.l.b16 %v1390
    %v1425 = vunpack.c.h.b16 %v1390
    %v1426 = vunpack.c.l.b16 %v1391
    %v1427 = vunpack.c.h.b16 %v1391
    %v1428 = vunpack.c.l.b16 %v1392
    %v1429 = vunpack.c.h.b16 %v1392
    %v1430 = vunpack.c.l.b16 %v1393
    %v1431 = vunpack.c.h.b16 %v1393
    %v1432 = vunpack.c.l.b16 %v1394
    %v1433 = vunpack.c.h.b16 %v1394
    %v1434 = vunpack.c.l.b16 %v1395
    %v1435 = vunpack.c.h.b16 %v1395
    %v1436 = vunpack.c.l.b16 %v1396
    %v1437 = vunpack.c.h.b16 %v1396
    %v1438 = vunpack.c.l.b16 %v1397
    %v1439 = vunpack.c.h.b16 %v1397
    %v1440 = vunpack.c.l.b16 %v1398
    %v1441 = vunpack.c.h.b16 %v1398
    %v1442 = vunpack.c.l.b16 %v1399
    %v1443 = vunpack.c.h.b16 %v1399
    %v1444 = vunpack.c.l.b16 %v1400
    %v1445 = vunpack.c.h.b16 %v1400
    %v1446 = vunpack.c.l.b16 %v1401
    %v1447 = vunpack.c.h.b16 %v1401
    %v1448 = vunpack.c.l.b16 %v1402
    %v1449 = vunpack.c.h.b16 %v1402
    %v1450 = vunpack.c.l.b16 %v1403
    %v1451 = vunpack.c.h.b16 %v1403
    %v1452 = vpack.c.b16 %v1424, %v1420
    %v1453 = vpack.c.b16 %v1425, %v1421
    %v1454 = vpack.c.b16 %v1426, %v1422
    %v1455 = vpack.c.b16 %v1427, %v1423
    %v1456 = vpack.c.b16 %v1432, %v1428
    %v1457 = vpack.c.b16 %v1433, %v1429
    %v1458 = vpack.c.b16 %v1434, %v1430
    %v1459 = vpack.c.b16 %v1435, %v1431
    %v1460 = vpack.c.b16 %v1440, %v1436
    %v1461 = vpack.c.b16 %v1441, %v1437
    %v1462 = vpack.c.b16 %v1442, %v1438
    %v1463 = vpack.c.b16 %v1443, %v1439
    %v1464 = vpack.c.b16 %v1448, %v1444
    %v1465 = vpack.c.b16 %v1449, %v1445
    %v1466 = vpack.c.b16 %v1450, %v1446
    %v1467 = vpack.c.b16 %v1451, %v1447
    %v1485 = vsel %vm429, %v1387, 0
    %1487 = vmatprep.subr.bf16.mxu0 0
    %1488 = vmatpush1.bf16.msra.mxu0 0
    %1489 = vmatprep.subr.bf16.mxu0 0
    %1490 = vmatpush1.bf16.msra.mxu0 0
    %1491 = vmatprep.subr.bf16.mxu0 0
    %1492 = vmatpush1.bf16.msra.mxu0 0
    %1493 = vmatprep.subr.bf16.mxu0 0
    %1494 = vmatpush1.bf16.msra.mxu0 0
    %1495 = vmatprep.subr.bf16.mxu0 %v1465
    %1496 = vmatpush1.bf16.msra.mxu0 %v1464
    %1497 = vmatprep.subr.bf16.mxu0 %v1461
    %1498 = vmatpush1.bf16.msra.mxu0 %v1460
    %1499 = vmatprep.subr.bf16.mxu0 %v1457
    %1500 = vmatpush1.bf16.msra.mxu0 %v1456
    %1501 = vmatprep.subr.bf16.mxu0 %v1453
    %1502 = vmatpush1.bf16.msra.mxu0 %v1452
    %1503 = vmatprep.subr.bf16.mxu0 0
    %1504 = vmatpush2.bf16.msra.mxu0 0
    %1505 = vmatprep.subr.bf16.mxu0 0
    %1506 = vmatpush2.bf16.msra.mxu0 0
    %1507 = vmatprep.subr.bf16.mxu0 0
    %1508 = vmatpush2.bf16.msra.mxu0 0
    %1509 = vmatprep.subr.bf16.mxu0 0
    %1510 = vmatpush2.bf16.msra.mxu0 0
    %1511 = vmatprep.subr.bf16.mxu0 0
    %1512 = vmatpush2.bf16.msra.mxu0 0
    %1513 = vmatprep.subr.bf16.mxu0 0
    %1514 = vmatpush2.bf16.msra.mxu0 0
    %1515 = vmatprep.subr.bf16.mxu0 0
    %1516 = vmatpush2.bf16.msra.mxu0 0
    %1517 = vmatprep.subr.bf16.mxu0 0
    %1518 = vmatpush2.bf16.msra.mxu0 0
    %1519 = vmatprep.mubr.bf16.mxu0 0
    %1520 = vmatmul.mubr.bf16.gmra.mxu0 %v1485
    %v1521 = vpop.f32.mrf.mxu0
    %v1522 = vadd.f32 0.0, %v1521
    %v1523 = vpop.f32.mrf.mxu0
    %v1524 = vadd.f32 0.0, %v1523
    %v1525 = vpop.f32.mrf.mxu0
    %v1526 = vpop.f32.mrf.mxu0
    %1527 = vdwg.mxu0
    %1528 = vmatprep.subr.bf16.mxu0 0
    %1529 = vmatpush1.bf16.msra.mxu0 0
    %1530 = vmatprep.subr.bf16.mxu0 0
    %1531 = vmatpush1.bf16.msra.mxu0 0
    %1532 = vmatprep.subr.bf16.mxu0 0
    %1533 = vmatpush1.bf16.msra.mxu0 0
    %1534 = vmatprep.subr.bf16.mxu0 0
    %1535 = vmatpush1.bf16.msra.mxu0 0
    %1536 = vmatprep.subr.bf16.mxu0 %v1467
    %1537 = vmatpush1.bf16.msra.mxu0 %v1466
    %1538 = vmatprep.subr.bf16.mxu0 %v1463
    %1539 = vmatpush1.bf16.msra.mxu0 %v1462
    %1540 = vmatprep.subr.bf16.mxu0 %v1459
    %1541 = vmatpush1.bf16.msra.mxu0 %v1458
    %1542 = vmatprep.subr.bf16.mxu0 %v1455
    %1543 = vmatpush1.bf16.msra.mxu0 %v1454
    %1544 = vmatprep.subr.bf16.mxu0 0
    %1545 = vmatpush2.bf16.msra.mxu0 0
    %1546 = vmatprep.subr.bf16.mxu0 0
    %1547 = vmatpush2.bf16.msra.mxu0 0
    %1548 = vmatprep.subr.bf16.mxu0 0
    %1549 = vmatpush2.bf16.msra.mxu0 0
    %1550 = vmatprep.subr.bf16.mxu0 0
    %1551 = vmatpush2.bf16.msra.mxu0 0
    %1552 = vmatprep.subr.bf16.mxu0 0
    %1553 = vmatpush2.bf16.msra.mxu0 0
    %1554 = vmatprep.subr.bf16.mxu0 0
    %1555 = vmatpush2.bf16.msra.mxu0 0
    %1556 = vmatprep.subr.bf16.mxu0 0
    %1557 = vmatpush2.bf16.msra.mxu0 0
    %1558 = vmatprep.subr.bf16.mxu0 0
    %1559 = vmatpush2.bf16.msra.mxu0 0
    %1560 = vmatprep.mubr.bf16.mxu0 0
    %1561 = vmatmul.mubr.bf16.gmra.mxu0 %v1485
    %v1562 = vpop.f32.mrf.mxu0
    %v1563 = vadd.f32 0.0, %v1562
    %v1564 = vpop.f32.mrf.mxu0
    %v1565 = vadd.f32 0.0, %v1564
    %v1566 = vpop.f32.mrf.mxu0
    %v1567 = vpop.f32.mrf.mxu0
    %1568 = vdwg.mxu0
    %v1569 = vadd.f32 %v1383, %v1522
    %v1570 = vadd.f32 %v1384, %v1524
    %v1571 = vadd.f32 %v1385, %v1563
    %v1572 = vadd.f32 %v1386, %v1565
    %v1573 = vmul.f32 %v1569, 0.5
    %v1574 = vtanh.pop %v1573
    %v1575 = vadd.f32 %v1574, 1.0
    %v1576 = vmul.f32 %v1575, 0.5
    %v1577 = vmul.f32 %v1570, 0.5
    %v1578 = vtanh.pop %v1577
    %v1579 = vadd.f32 %v1578, 1.0
    %v1580 = vmul.f32 %v1579, 0.5
    %v1581 = vtanh.pop %v1571
    %v1582 = vmul.f32 %v1572, 0.5
    %v1583 = vtanh.pop %v1582
    %v1584 = vadd.f32 %v1583, 1.0
    %v1585 = vmul.f32 %v1584, 0.5
    %v1586 = vmul.f32 %v1580, %v1061
    %v1587 = vmul.f32 %v1576, %v1581
    %v1588 = vadd.f32 %v1586, %v1587
    %v1589 = vtanh.pop %v1588
    %v1590 = vmul.f32 %v1585, %v1589
    %1591 = vrot.lane.b32.xlu0 %v1381, 64
    %v1592 = vpop.permute.xlu0 %1591
    %v1593 = vsel %vm328, %v1590, %v1592
    %v1594 = vpack.c.bf16 %v1593, %v1593
    %v1595 = vld [vmem:[%s4] sm:$0xff]
    %v1596 = vld [vmem:[%s4 + $0x8] sm:$0xff]
    %v1597 = vld [vmem:[%s4 + $0x10] sm:$0xff]
    %v1598 = vld [vmem:[%s4 + $0x18] sm:$0xff]
    %v1599 = vld [vmem:[%s4 + $0x20] sm:$0xff]
    %v1600 = vld [vmem:[%s4 + $0x28] sm:$0xff]
    %v1601 = vld [vmem:[%s4 + $0x30] sm:$0xff]
    %v1602 = vld [vmem:[%s4 + $0x38] sm:$0xff]
    %v1603 = vld [vmem:[%s4 + $0x40] sm:$0xff]
    %v1604 = vld [vmem:[%s4 + $0x48] sm:$0xff]
    %v1605 = vld [vmem:[%s4 + $0x50] sm:$0xff]
    %v1606 = vld [vmem:[%s4 + $0x58] sm:$0xff]
    %v1607 = vld [vmem:[%s4 + $0x60] sm:$0xff]
    %v1608 = vld [vmem:[%s4 + $0x68] sm:$0xff]
    %v1609 = vld [vmem:[%s4 + $0x70] sm:$0xff]
    %v1610 = vld [vmem:[%s4 + $0x78] sm:$0xff]
    %v1611 = vld [vmem:[%s4 + $0x80] sm:$0xff]
    %v1612 = vld [vmem:[%s4 + $0x88] sm:$0xff]
    %v1613 = vld [vmem:[%s4 + $0x90] sm:$0xff]
    %v1614 = vld [vmem:[%s4 + $0x98] sm:$0xff]
    %v1615 = vld [vmem:[%s4 + $0xa0] sm:$0xff]
    %v1616 = vld [vmem:[%s4 + $0xa8] sm:$0xff]
    %v1617 = vld [vmem:[%s4 + $0xb0] sm:$0xff]
    %v1618 = vld [vmem:[%s4 + $0xb8] sm:$0xff]
    %v1619 = vld [vmem:[%s4 + $0xc0] sm:$0xff]
    %v1620 = vld [vmem:[%s4 + $0xc8] sm:$0xff]
    %v1621 = vld [vmem:[%s4 + $0xd0] sm:$0xff]
    %v1622 = vld [vmem:[%s4 + $0xd8] sm:$0xff]
    %v1623 = vld [vmem:[%s4 + $0xe0] sm:$0xff]
    %v1624 = vld [vmem:[%s4 + $0xe8] sm:$0xff]
    %v1625 = vld [vmem:[%s4 + $0xf0] sm:$0xff]
    %v1626 = vld [vmem:[%s4 + $0xf8] sm:$0xff]
    %v1627 = vld [vmem:[%s5] sm:$0xf]
    %v1629 = vlaneseq
    %v1630 = vshrl.u32 %v1629, 7
    %v1631 = vsub.s32 0, %v1630
    %v1632 = vrot.slane %v1627, %v1631
    %v1633 = vlaneseq
    %v1634 = vshrl.u32 %v1633, 7
    %v1635 = vsub.s32 1, %v1634
    %v1636 = vrot.slane %v1627, %v1635
    %v1637 = vlaneseq
    %v1638 = vshrl.u32 %v1637, 7
    %v1639 = vsub.s32 2, %v1638
    %v1640 = vrot.slane %v1627, %v1639
    %v1641 = vlaneseq
    %v1642 = vshrl.u32 %v1641, 7
    %v1643 = vsub.s32 3, %v1642
    %v1644 = vrot.slane %v1627, %v1643
    %v1681 = vunpack.c.l.b16 %v1595
    %v1682 = vunpack.c.h.b16 %v1595
    %v1683 = vunpack.c.l.b16 %v1596
    %v1684 = vunpack.c.h.b16 %v1596
    %v1685 = vunpack.c.l.b16 %v1597
    %v1686 = vunpack.c.h.b16 %v1597
    %v1687 = vunpack.c.l.b16 %v1598
    %v1688 = vunpack.c.h.b16 %v1598
    %v1689 = vunpack.c.l.b16 %v1599
    %v1690 = vunpack.c.h.b16 %v1599
    %v1691 = vunpack.c.l.b16 %v1600
    %v1692 = vunpack.c.h.b16 %v1600
    %v1693 = vunpack.c.l.b16 %v1601
    %v1694 = vunpack.c.h.b16 %v1601
    %v1695 = vunpack.c.l.b16 %v1602
    %v1696 = vunpack.c.h.b16 %v1602
    %v1697 = vunpack.c.l.b16 %v1603
    %v1698 = vunpack.c.h.b16 %v1603
    %v1699 = vunpack.c.l.b16 %v1604
    %v1700 = vunpack.c.h.b16 %v1604
    %v1701 = vunpack.c.l.b16 %v1605
    %v1702 = vunpack.c.h.b16 %v1605
    %v1703 = vunpack.c.l.b16 %v1606
    %v1704 = vunpack.c.h.b16 %v1606
    %v1705 = vunpack.c.l.b16 %v1607
    %v1706 = vunpack.c.h.b16 %v1607
    %v1707 = vunpack.c.l.b16 %v1608
    %v1708 = vunpack.c.h.b16 %v1608
    %v1709 = vunpack.c.l.b16 %v1609
    %v1710 = vunpack.c.h.b16 %v1609
    %v1711 = vunpack.c.l.b16 %v1610
    %v1712 = vunpack.c.h.b16 %v1610
    %v1713 = vunpack.c.l.b16 %v1611
    %v1714 = vunpack.c.h.b16 %v1611
    %v1715 = vunpack.c.l.b16 %v1612
    %v1716 = vunpack.c.h.b16 %v1612
    %v1717 = vunpack.c.l.b16 %v1613
    %v1718 = vunpack.c.h.b16 %v1613
    %v1719 = vunpack.c.l.b16 %v1614
    %v1720 = vunpack.c.h.b16 %v1614
    %v1721 = vunpack.c.l.b16 %v1615
    %v1722 = vunpack.c.h.b16 %v1615
    %v1723 = vunpack.c.l.b16 %v1616
    %v1724 = vunpack.c.h.b16 %v1616
    %v1725 = vunpack.c.l.b16 %v1617
    %v1726 = vunpack.c.h.b16 %v1617
    %v1727 = vunpack.c.l.b16 %v1618
    %v1728 = vunpack.c.h.b16 %v1618
    %v1729 = vunpack.c.l.b16 %v1619
    %v1730 = vunpack.c.h.b16 %v1619
    %v1731 = vunpack.c.l.b16 %v1620
    %v1732 = vunpack.c.h.b16 %v1620
    %v1733 = vunpack.c.l.b16 %v1621
    %v1734 = vunpack.c.h.b16 %v1621
    %v1735 = vunpack.c.l.b16 %v1622
    %v1736 = vunpack.c.h.b16 %v1622
    %v1737 = vunpack.c.l.b16 %v1623
    %v1738 = vunpack.c.h.b16 %v1623
    %v1739 = vunpack.c.l.b16 %v1624
    %v1740 = vunpack.c.h.b16 %v1624
    %v1741 = vunpack.c.l.b16 %v1625
    %v1742 = vunpack.c.h.b16 %v1625
    %v1743 = vunpack.c.l.b16 %v1626
    %v1744 = vunpack.c.h.b16 %v1626
    %v1745 = vpack.c.b16 %v1685, %v1681
    %v1746 = vpack.c.b16 %v1686, %v1682
    %v1747 = vpack.c.b16 %v1687, %v1683
    %v1748 = vpack.c.b16 %v1688, %v1684
    %v1749 = vpack.c.b16 %v1693, %v1689
    %v1750 = vpack.c.b16 %v1694, %v1690
    %v1751 = vpack.c.b16 %v1695, %v1691
    %v1752 = vpack.c.b16 %v1696, %v1692
    %v1753 = vpack.c.b16 %v1701, %v1697
    %v1754 = vpack.c.b16 %v1702, %v1698
    %v1755 = vpack.c.b16 %v1703, %v1699
    %v1756 = vpack.c.b16 %v1704, %v1700
    %v1757 = vpack.c.b16 %v1709, %v1705
    %v1758 = vpack.c.b16 %v1710, %v1706
    %v1759 = vpack.c.b16 %v1711, %v1707
    %v1760 = vpack.c.b16 %v1712, %v1708
    %v1761 = vpack.c.b16 %v1717, %v1713
    %v1762 = vpack.c.b16 %v1718, %v1714
    %v1763 = vpack.c.b16 %v1719, %v1715
    %v1764 = vpack.c.b16 %v1720, %v1716
    %v1765 = vpack.c.b16 %v1725, %v1721
    %v1766 = vpack.c.b16 %v1726, %v1722
    %v1767 = vpack.c.b16 %v1727, %v1723
    %v1768 = vpack.c.b16 %v1728, %v1724
    %v1769 = vpack.c.b16 %v1733, %v1729
    %v1770 = vpack.c.b16 %v1734, %v1730
    %v1771 = vpack.c.b16 %v1735, %v1731
    %v1772 = vpack.c.b16 %v1736, %v1732
    %v1773 = vpack.c.b16 %v1741, %v1737
    %v1774 = vpack.c.b16 %v1742, %v1738
    %v1775 = vpack.c.b16 %v1743, %v1739
    %v1776 = vpack.c.b16 %v1744, %v1740
    %1809 = vmatprep.subr.bf16.mxu0 %v1774
    %1810 = vmatpush1.bf16.msra.mxu0 %v1773
    %1811 = vmatprep.subr.bf16.mxu0 %v1770
    %1812 = vmatpush1.bf16.msra.mxu0 %v1769
    %1813 = vmatprep.subr.bf16.mxu0 %v1766
    %1814 = vmatpush1.bf16.msra.mxu0 %v1765
    %1815 = vmatprep.subr.bf16.mxu0 %v1762
    %1816 = vmatpush1.bf16.msra.mxu0 %v1761
    %1817 = vmatprep.subr.bf16.mxu0 %v1758
    %1818 = vmatpush1.bf16.msra.mxu0 %v1757
    %1819 = vmatprep.subr.bf16.mxu0 %v1754
    %1820 = vmatpush1.bf16.msra.mxu0 %v1753
    %1821 = vmatprep.subr.bf16.mxu0 %v1750
    %1822 = vmatpush1.bf16.msra.mxu0 %v1749
    %1823 = vmatprep.subr.bf16.mxu0 %v1746
    %1824 = vmatpush1.bf16.msra.mxu0 %v1745
    %1825 = vmatprep.subr.bf16.mxu0 0
    %1826 = vmatpush2.bf16.msra.mxu0 0
    %1827 = vmatprep.subr.bf16.mxu0 0
    %1828 = vmatpush2.bf16.msra.mxu0 0
    %1829 = vmatprep.subr.bf16.mxu0 0
    %1830 = vmatpush2.bf16.msra.mxu0 0
    %1831 = vmatprep.subr.bf16.mxu0 0
    %1832 = vmatpush2.bf16.msra.mxu0 0
    %1833 = vmatprep.subr.bf16.mxu0 0
    %1834 = vmatpush2.bf16.msra.mxu0 0
    %1835 = vmatprep.subr.bf16.mxu0 0
    %1836 = vmatpush2.bf16.msra.mxu0 0
    %1837 = vmatprep.subr.bf16.mxu0 0
    %1838 = vmatpush2.bf16.msra.mxu0 0
    %1839 = vmatprep.subr.bf16.mxu0 0
    %1840 = vmatpush2.bf16.msra.mxu0 0
    %1841 = vmatprep.mubr.bf16.mxu0 0
    %1842 = vmatmul.mubr.bf16.gmra.mxu0 %v1594
    %v1843 = vpop.f32.mrf.mxu0
    %v1844 = vadd.f32 %v1632, %v1843
    %v1845 = vpop.f32.mrf.mxu0
    %v1846 = vadd.f32 %v1636, %v1845
    %v1847 = vpop.f32.mrf.mxu0
    %v1848 = vpop.f32.mrf.mxu0
    %1849 = vdwg.mxu0
    %1850 = vmatprep.subr.bf16.mxu0 %v1776
    %1851 = vmatpush1.bf16.msra.mxu0 %v1775
    %1852 = vmatprep.subr.bf16.mxu0 %v1772
    %1853 = vmatpush1.bf16.msra.mxu0 %v1771
    %1854 = vmatprep.subr.bf16.mxu0 %v1768
    %1855 = vmatpush1.bf16.msra.mxu0 %v1767
    %1856 = vmatprep.subr.bf16.mxu0 %v1764
    %1857 = vmatpush1.bf16.msra.mxu0 %v1763
    %1858 = vmatprep.subr.bf16.mxu0 %v1760
    %1859 = vmatpush1.bf16.msra.mxu0 %v1759
    %1860 = vmatprep.subr.bf16.mxu0 %v1756
    %1861 = vmatpush1.bf16.msra.mxu0 %v1755
    %1862 = vmatprep.subr.bf16.mxu0 %v1752
    %1863 = vmatpush1.bf16.msra.mxu0 %v1751
    %1864 = vmatprep.subr.bf16.mxu0 %v1748
    %1865 = vmatpush1.bf16.msra.mxu0 %v1747
    %1866 = vmatprep.subr.bf16.mxu0 0
    %1867 = vmatpush2.bf16.msra.mxu0 0
    %1868 = vmatprep.subr.bf16.mxu0 0
    %1869 = vmatpush2.bf16.msra.mxu0 0
    %1870 = vmatprep.subr.bf16.mxu0 0
    %1871 = vmatpush2.bf16.msra.mxu0 0
    %1872 = vmatprep.subr.bf16.mxu0 0
    %1873 = vmatpush2.bf16.msra.mxu0 0
    %1874 = vmatprep.subr.bf16.mxu0 0
    %1875 = vmatpush2.bf16.msra.mxu0 0
    %1876 = vmatprep.subr.bf16.mxu0 0
    %1877 = vmatpush2.bf16.msra.mxu0 0
    %1878 = vmatprep.subr.bf16.mxu0 0
    %1879 = vmatpush2.bf16.msra.mxu0 0
    %1880 = vmatprep.subr.bf16.mxu0 0
    %1881 = vmatpush2.bf16.msra.mxu0 0
    %1882 = vmatprep.mubr.bf16.mxu0 0
    %1883 = vmatmul.mubr.bf16.gmra.mxu0 %v1594
    %v1884 = vpop.f32.mrf.mxu0
    %v1885 = vadd.f32 %v1640, %v1884
    %v1886 = vpop.f32.mrf.mxu0
    %v1887 = vadd.f32 %v1644, %v1886
    %v1888 = vpop.f32.mrf.mxu0
    %v1889 = vpop.f32.mrf.mxu0
    %1890 = vdwg.mxu0
    %v1891 = vmul.f32 %v1844, 0.5
    %v1892 = vtanh.pop %v1891
    %v1893 = vadd.f32 %v1892, 1.0
    %v1894 = vmul.f32 %v1893, 0.5
    %v1895 = vmul.f32 %v1846, 0.5
    %v1896 = vtanh.pop %v1895
    %v1897 = vadd.f32 %v1896, 1.0
    %v1898 = vmul.f32 %v1897, 0.5
    %v1899 = vtanh.pop %v1885
    %v1900 = vmul.f32 %v1887, 0.5
    %v1901 = vtanh.pop %v1900
    %v1902 = vadd.f32 %v1901, 1.0
    %v1903 = vmul.f32 %v1902, 0.5
    %v1904 = vmul.f32 %v1898, %v1379
    %v1905 = vmul.f32 %v1894, %v1899
    %v1906 = vadd.f32 %v1904, %v1905
    %v1907 = vtanh.pop %v1906
    %v1908 = vmul.f32 %v1903, %v1907
    %1909 = vst [vmem:[#allocation3 + $0x10] sm:$0xff] %v1908
    %v1910 = vld [vmem:[#allocation2 + $0x60] sm:$0xff]
    %v1911 = vld [vmem:[#allocation2 + $0x68] sm:$0xff]
    %v1912 = vld [vmem:[#allocation2 + $0x70] sm:$0xff]
    %v1913 = vld [vmem:[#allocation2 + $0x78] sm:$0xff]
    %v1914 = vpack.c.bf16 %v1590, %v1590
    %v1915 = vld [vmem:[%s3] sm:$0xff]
    %v1916 = vld [vmem:[%s3 + $0x8] sm:$0xff]
    %v1917 = vld [vmem:[%s3 + $0x10] sm:$0xff]
    %v1918 = vld [vmem:[%s3 + $0x18] sm:$0xff]
    %v1919 = vld [vmem:[%s3 + $0x20] sm:$0xff]
    %v1920 = vld [vmem:[%s3 + $0x28] sm:$0xff]
    %v1921 = vld [vmem:[%s3 + $0x30] sm:$0xff]
    %v1922 = vld [vmem:[%s3 + $0x38] sm:$0xff]
    %v1923 = vld [vmem:[%s3 + $0x40] sm:$0xff]
    %v1924 = vld [vmem:[%s3 + $0x48] sm:$0xff]
    %v1925 = vld [vmem:[%s3 + $0x50] sm:$0xff]
    %v1926 = vld [vmem:[%s3 + $0x58] sm:$0xff]
    %v1927 = vld [vmem:[%s3 + $0x60] sm:$0xff]
    %v1928 = vld [vmem:[%s3 + $0x68] sm:$0xff]
    %v1929 = vld [vmem:[%s3 + $0x70] sm:$0xff]
    %v1930 = vld [vmem:[%s3 + $0x78] sm:$0xff]
    %v1947 = vunpack.c.l.b16 %v1915
    %v1948 = vunpack.c.h.b16 %v1915
    %v1949 = vunpack.c.l.b16 %v1916
    %v1950 = vunpack.c.h.b16 %v1916
    %v1951 = vunpack.c.l.b16 %v1917
    %v1952 = vunpack.c.h.b16 %v1917
    %v1953 = vunpack.c.l.b16 %v1918
    %v1954 = vunpack.c.h.b16 %v1918
    %v1955 = vunpack.c.l.b16 %v1919
    %v1956 = vunpack.c.h.b16 %v1919
    %v1957 = vunpack.c.l.b16 %v1920
    %v1958 = vunpack.c.h.b16 %v1920
    %v1959 = vunpack.c.l.b16 %v1921
    %v1960 = vunpack.c.h.b16 %v1921
    %v1961 = vunpack.c.l.b16 %v1922
    %v1962 = vunpack.c.h.b16 %v1922
    %v1963 = vunpack.c.l.b16 %v1923
    %v1964 = vunpack.c.h.b16 %v1923
    %v1965 = vunpack.c.l.b16 %v1924
    %v1966 = vunpack.c.h.b16 %v1924
    %v1967 = vunpack.c.l.b16 %v1925
    %v1968 = vunpack.c.h.b16 %v1925
    %v1969 = vunpack.c.l.b16 %v1926
    %v1970 = vunpack.c.h.b16 %v1926
    %v1971 = vunpack.c.l.b16 %v1927
    %v1972 = vunpack.c.h.b16 %v1927
    %v1973 = vunpack.c.l.b16 %v1928
    %v1974 = vunpack.c.h.b16 %v1928
    %v1975 = vunpack.c.l.b16 %v1929
    %v1976 = vunpack.c.h.b16 %v1929
    %v1977 = vunpack.c.l.b16 %v1930
    %v1978 = vunpack.c.h.b16 %v1930
    %v1979 = vpack.c.b16 %v1951, %v1947
    %v1980 = vpack.c.b16 %v1952, %v1948
    %v1981 = vpack.c.b16 %v1953, %v1949
    %v1982 = vpack.c.b16 %v1954, %v1950
    %v1983 = vpack.c.b16 %v1959, %v1955
    %v1984 = vpack.c.b16 %v1960, %v1956
    %v1985 = vpack.c.b16 %v1961, %v1957
    %v1986 = vpack.c.b16 %v1962, %v1958
    %v1987 = vpack.c.b16 %v1967, %v1963
    %v1988 = vpack.c.b16 %v1968, %v1964
    %v1989 = vpack.c.b16 %v1969, %v1965
    %v1990 = vpack.c.b16 %v1970, %v1966
    %v1991 = vpack.c.b16 %v1975, %v1971
    %v1992 = vpack.c.b16 %v1976, %v1972
    %v1993 = vpack.c.b16 %v1977, %v1973
    %v1994 = vpack.c.b16 %v1978, %v1974
    %v2012 = vsel %vm429, %v1914, 0
    %2014 = vmatprep.subr.bf16.mxu0 0
    %2015 = vmatpush1.bf16.msra.mxu0 0
    %2016 = vmatprep.subr.bf16.mxu0 0
    %2017 = vmatpush1.bf16.msra.mxu0 0
    %2018 = vmatprep.subr.bf16.mxu0 0
    %2019 = vmatpush1.bf16.msra.mxu0 0
    %2020 = vmatprep.subr.bf16.mxu0 0
    %2021 = vmatpush1.bf16.msra.mxu0 0
    %2022 = vmatprep.subr.bf16.mxu0 %v1992
    %2023 = vmatpush1.bf16.msra.mxu0 %v1991
    %2024 = vmatprep.subr.bf16.mxu0 %v1988
    %2025 = vmatpush1.bf16.msra.mxu0 %v1987
    %2026 = vmatprep.subr.bf16.mxu0 %v1984
    %2027 = vmatpush1.bf16.msra.mxu0 %v1983
    %2028 = vmatprep.subr.bf16.mxu0 %v1980
    %2029 = vmatpush1.bf16.msra.mxu0 %v1979
    %2030 = vmatprep.subr.bf16.mxu0 0
    %2031 = vmatpush2.bf16.msra.mxu0 0
    %2032 = vmatprep.subr.bf16.mxu0 0
    %2033 = vmatpush2.bf16.msra.mxu0 0
    %2034 = vmatprep.subr.bf16.mxu0 0
    %2035 = vmatpush2.bf16.msra.mxu0 0
    %2036 = vmatprep.subr.bf16.mxu0 0
    %2037 = vmatpush2.bf16.msra.mxu0 0
    %2038 = vmatprep.subr.bf16.mxu0 0
    %2039 = vmatpush2.bf16.msra.mxu0 0
    %2040 = vmatprep.subr.bf16.mxu0 0
    %2041 = vmatpush2.bf16.msra.mxu0 0
    %2042 = vmatprep.subr.bf16.mxu0 0
    %2043 = vmatpush2.bf16.msra.mxu0 0
    %2044 = vmatprep.subr.bf16.mxu0 0
    %2045 = vmatpush2.bf16.msra.mxu0 0
    %2046 = vmatprep.mubr.bf16.mxu0 0
    %2047 = vmatmul.mubr.bf16.gmra.mxu0 %v2012
    %v2048 = vpop.f32.mrf.mxu0
    %v2049 = vadd.f32 0.0, %v2048
    %v2050 = vpop.f32.mrf.mxu0
    %v2051 = vadd.f32 0.0, %v2050
    %v2052 = vpop.f32.mrf.mxu0
    %v2053 = vpop.f32.mrf.mxu0
    %2054 = vdwg.mxu0
    %2055 = vmatprep.subr.bf16.mxu0 0
    %2056 = vmatpush1.bf16.msra.mxu0 0
    %2057 = vmatprep.subr.bf16.mxu0 0
    %2058 = vmatpush1.bf16.msra.mxu0 0
    %2059 = vmatprep.subr.bf16.mxu0 0
    %2060 = vmatpush1.bf16.msra.mxu0 0
    %2061 = vmatprep.subr.bf16.mxu0 0
    %2062 = vmatpush1.bf16.msra.mxu0 0
    %2063 = vmatprep.subr.bf16.mxu0 %v1994
    %2064 = vmatpush1.bf16.msra.mxu0 %v1993
    %2065 = vmatprep.subr.bf16.mxu0 %v1990
    %2066 = vmatpush1.bf16.msra.mxu0 %v1989
    %2067 = vmatprep.subr.bf16.mxu0 %v1986
    %2068 = vmatpush1.bf16.msra.mxu0 %v1985
    %2069 = vmatprep.subr.bf16.mxu0 %v1982
    %2070 = vmatpush1.bf16.msra.mxu0 %v1981
    %2071 = vmatprep.subr.bf16.mxu0 0
    %2072 = vmatpush2.bf16.msra.mxu0 0
    %2073 = vmatprep.subr.bf16.mxu0 0
    %2074 = vmatpush2.bf16.msra.mxu0 0
    %2075 = vmatprep.subr.bf16.mxu0 0
    %2076 = vmatpush2.bf16.msra.mxu0 0
    %2077 = vmatprep.subr.bf16.mxu0 0
    %2078 = vmatpush2.bf16.msra.mxu0 0
    %2079 = vmatprep.subr.bf16.mxu0 0
    %2080 = vmatpush2.bf16.msra.mxu0 0
    %2081 = vmatprep.subr.bf16.mxu0 0
    %2082 = vmatpush2.bf16.msra.mxu0 0
    %2083 = vmatprep.subr.bf16.mxu0 0
    %2084 = vmatpush2.bf16.msra.mxu0 0
    %2085 = vmatprep.subr.bf16.mxu0 0
    %2086 = vmatpush2.bf16.msra.mxu0 0
    %2087 = vmatprep.mubr.bf16.mxu0 0
    %2088 = vmatmul.mubr.bf16.gmra.mxu0 %v2012
    %v2089 = vpop.f32.mrf.mxu0
    %v2090 = vadd.f32 0.0, %v2089
    %v2091 = vpop.f32.mrf.mxu0
    %v2092 = vadd.f32 0.0, %v2091
    %v2093 = vpop.f32.mrf.mxu0
    %v2094 = vpop.f32.mrf.mxu0
    %2095 = vdwg.mxu0
    %v2096 = vadd.f32 %v1910, %v2049
    %v2097 = vadd.f32 %v1911, %v2051
    %v2098 = vadd.f32 %v1912, %v2090
    %v2099 = vadd.f32 %v1913, %v2092
    %v2100 = vmul.f32 %v2096, 0.5
    %v2101 = vtanh.pop %v2100
    %v2102 = vadd.f32 %v2101, 1.0
    %v2103 = vmul.f32 %v2102, 0.5
    %v2104 = vmul.f32 %v2097, 0.5
    %v2105 = vtanh.pop %v2104
    %v2106 = vadd.f32 %v2105, 1.0
    %v2107 = vmul.f32 %v2106, 0.5
    %v2108 = vtanh.pop %v2098
    %v2109 = vmul.f32 %v2099, 0.5
    %v2110 = vtanh.pop %v2109
    %v2111 = vadd.f32 %v2110, 1.0
    %v2112 = vmul.f32 %v2111, 0.5
    %v2113 = vmul.f32 %v2107, %v1588
    %v2114 = vmul.f32 %v2103, %v2108
    %v2115 = vadd.f32 %v2113, %v2114
    %v2116 = vtanh.pop %v2115
    %v2117 = vmul.f32 %v2112, %v2116
    %2118 = vrot.lane.b32.xlu0 %v1908, 64
    %v2119 = vpop.permute.xlu0 %2118
    %v2120 = vsel %vm328, %v2117, %v2119
    %v2121 = vpack.c.bf16 %v2120, %v2120
    %v2122 = vld [vmem:[%s4] sm:$0xff]
    %v2123 = vld [vmem:[%s4 + $0x8] sm:$0xff]
    %v2124 = vld [vmem:[%s4 + $0x10] sm:$0xff]
    %v2125 = vld [vmem:[%s4 + $0x18] sm:$0xff]
    %v2126 = vld [vmem:[%s4 + $0x20] sm:$0xff]
    %v2127 = vld [vmem:[%s4 + $0x28] sm:$0xff]
    %v2128 = vld [vmem:[%s4 + $0x30] sm:$0xff]
    %v2129 = vld [vmem:[%s4 + $0x38] sm:$0xff]
    %v2130 = vld [vmem:[%s4 + $0x40] sm:$0xff]
    %v2131 = vld [vmem:[%s4 + $0x48] sm:$0xff]
    %v2132 = vld [vmem:[%s4 + $0x50] sm:$0xff]
    %v2133 = vld [vmem:[%s4 + $0x58] sm:$0xff]
    %v2134 = vld [vmem:[%s4 + $0x60] sm:$0xff]
    %v2135 = vld [vmem:[%s4 + $0x68] sm:$0xff]
    %v2136 = vld [vmem:[%s4 + $0x70] sm:$0xff]
    %v2137 = vld [vmem:[%s4 + $0x78] sm:$0xff]
    %v2138 = vld [vmem:[%s4 + $0x80] sm:$0xff]
    %v2139 = vld [vmem:[%s4 + $0x88] sm:$0xff]
    %v2140 = vld [vmem:[%s4 + $0x90] sm:$0xff]
    %v2141 = vld [vmem:[%s4 + $0x98] sm:$0xff]
    %v2142 = vld [vmem:[%s4 + $0xa0] sm:$0xff]
    %v2143 = vld [vmem:[%s4 + $0xa8] sm:$0xff]
    %v2144 = vld [vmem:[%s4 + $0xb0] sm:$0xff]
    %v2145 = vld [vmem:[%s4 + $0xb8] sm:$0xff]
    %v2146 = vld [vmem:[%s4 + $0xc0] sm:$0xff]
    %v2147 = vld [vmem:[%s4 + $0xc8] sm:$0xff]
    %v2148 = vld [vmem:[%s4 + $0xd0] sm:$0xff]
    %v2149 = vld [vmem:[%s4 + $0xd8] sm:$0xff]
    %v2150 = vld [vmem:[%s4 + $0xe0] sm:$0xff]
    %v2151 = vld [vmem:[%s4 + $0xe8] sm:$0xff]
    %v2152 = vld [vmem:[%s4 + $0xf0] sm:$0xff]
    %v2153 = vld [vmem:[%s4 + $0xf8] sm:$0xff]
    %v2154 = vld [vmem:[%s5] sm:$0xf]
    %v2156 = vlaneseq
    %v2157 = vshrl.u32 %v2156, 7
    %v2158 = vsub.s32 0, %v2157
    %v2159 = vrot.slane %v2154, %v2158
    %v2160 = vlaneseq
    %v2161 = vshrl.u32 %v2160, 7
    %v2162 = vsub.s32 1, %v2161
    %v2163 = vrot.slane %v2154, %v2162
    %v2164 = vlaneseq
    %v2165 = vshrl.u32 %v2164, 7
    %v2166 = vsub.s32 2, %v2165
    %v2167 = vrot.slane %v2154, %v2166
    %v2168 = vlaneseq
    %v2169 = vshrl.u32 %v2168, 7
    %v2170 = vsub.s32 3, %v2169
    %v2171 = vrot.slane %v2154, %v2170
    %v2208 = vunpack.c.l.b16 %v2122
    %v2209 = vunpack.c.h.b16 %v2122
    %v2210 = vunpack.c.l.b16 %v2123
    %v2211 = vunpack.c.h.b16 %v2123
    %v2212 = vunpack.c.l.b16 %v2124
    %v2213 = vunpack.c.h.b16 %v2124
    %v2214 = vunpack.c.l.b16 %v2125
    %v2215 = vunpack.c.h.b16 %v2125
    %v2216 = vunpack.c.l.b16 %v2126
    %v2217 = vunpack.c.h.b16 %v2126
    %v2218 = vunpack.c.l.b16 %v2127
    %v2219 = vunpack.c.h.b16 %v2127
    %v2220 = vunpack.c.l.b16 %v2128
    %v2221 = vunpack.c.h.b16 %v2128
    %v2222 = vunpack.c.l.b16 %v2129
    %v2223 = vunpack.c.h.b16 %v2129
    %v2224 = vunpack.c.l.b16 %v2130
    %v2225 = vunpack.c.h.b16 %v2130
    %v2226 = vunpack.c.l.b16 %v2131
    %v2227 = vunpack.c.h.b16 %v2131
    %v2228 = vunpack.c.l.b16 %v2132
    %v2229 = vunpack.c.h.b16 %v2132
    %v2230 = vunpack.c.l.b16 %v2133
    %v2231 = vunpack.c.h.b16 %v2133
    %v2232 = vunpack.c.l.b16 %v2134
    %v2233 = vunpack.c.h.b16 %v2134
    %v2234 = vunpack.c.l.b16 %v2135
    %v2235 = vunpack.c.h.b16 %v2135
    %v2236 = vunpack.c.l.b16 %v2136
    %v2237 = vunpack.c.h.b16 %v2136
    %v2238 = vunpack.c.l.b16 %v2137
    %v2239 = vunpack.c.h.b16 %v2137
    %v2240 = vunpack.c.l.b16 %v2138
    %v2241 = vunpack.c.h.b16 %v2138
    %v2242 = vunpack.c.l.b16 %v2139
    %v2243 = vunpack.c.h.b16 %v2139
    %v2244 = vunpack.c.l.b16 %v2140
    %v2245 = vunpack.c.h.b16 %v2140
    %v2246 = vunpack.c.l.b16 %v2141
    %v2247 = vunpack.c.h.b16 %v2141
    %v2248 = vunpack.c.l.b16 %v2142
    %v2249 = vunpack.c.h.b16 %v2142
    %v2250 = vunpack.c.l.b16 %v2143
    %v2251 = vunpack.c.h.b16 %v2143
    %v2252 = vunpack.c.l.b16 %v2144
    %v2253 = vunpack.c.h.b16 %v2144
    %v2254 = vunpack.c.l.b16 %v2145
    %v2255 = vunpack.c.h.b16 %v2145
    %v2256 = vunpack.c.l.b16 %v2146
    %v2257 = vunpack.c.h.b16 %v2146
    %v2258 = vunpack.c.l.b16 %v2147
    %v2259 = vunpack.c.h.b16 %v2147
    %v2260 = vunpack.c.l.b16 %v2148
    %v2261 = vunpack.c.h.b16 %v2148
    %v2262 = vunpack.c.l.b16 %v2149
    %v2263 = vunpack.c.h.b16 %v2149
    %v2264 = vunpack.c.l.b16 %v2150
    %v2265 = vunpack.c.h.b16 %v2150
    %v2266 = vunpack.c.l.b16 %v2151
    %v2267 = vunpack.c.h.b16 %v2151
    %v2268 = vunpack.c.l.b16 %v2152
    %v2269 = vunpack.c.h.b16 %v2152
    %v2270 = vunpack.c.l.b16 %v2153
    %v2271 = vunpack.c.h.b16 %v2153
    %v2272 = vpack.c.b16 %v2212, %v2208
    %v2273 = vpack.c.b16 %v2213, %v2209
    %v2274 = vpack.c.b16 %v2214, %v2210
    %v2275 = vpack.c.b16 %v2215, %v2211
    %v2276 = vpack.c.b16 %v2220, %v2216
    %v2277 = vpack.c.b16 %v2221, %v2217
    %v2278 = vpack.c.b16 %v2222, %v2218
    %v2279 = vpack.c.b16 %v2223, %v2219
    %v2280 = vpack.c.b16 %v2228, %v2224
    %v2281 = vpack.c.b16 %v2229, %v2225
    %v2282 = vpack.c.b16 %v2230, %v2226
    %v2283 = vpack.c.b16 %v2231, %v2227
    %v2284 = vpack.c.b16 %v2236, %v2232
    %v2285 = vpack.c.b16 %v2237, %v2233
    %v2286 = vpack.c.b16 %v2238, %v2234
    %v2287 = vpack.c.b16 %v2239, %v2235
    %v2288 = vpack.c.b16 %v2244, %v2240
    %v2289 = vpack.c.b16 %v2245, %v2241
    %v2290 = vpack.c.b16 %v2246, %v2242
    %v2291 = vpack.c.b16 %v2247, %v2243
    %v2292 = vpack.c.b16 %v2252, %v2248
    %v2293 = vpack.c.b16 %v2253, %v2249
    %v2294 = vpack.c.b16 %v2254, %v2250
    %v2295 = vpack.c.b16 %v2255, %v2251
    %v2296 = vpack.c.b16 %v2260, %v2256
    %v2297 = vpack.c.b16 %v2261, %v2257
    %v2298 = vpack.c.b16 %v2262, %v2258
    %v2299 = vpack.c.b16 %v2263, %v2259
    %v2300 = vpack.c.b16 %v2268, %v2264
    %v2301 = vpack.c.b16 %v2269, %v2265
    %v2302 = vpack.c.b16 %v2270, %v2266
    %v2303 = vpack.c.b16 %v2271, %v2267
    %2336 = vmatprep.subr.bf16.mxu0 %v2301
    %2337 = vmatpush1.bf16.msra.mxu0 %v2300
    %2338 = vmatprep.subr.bf16.mxu0 %v2297
    %2339 = vmatpush1.bf16.msra.mxu0 %v2296
    %2340 = vmatprep.subr.bf16.mxu0 %v2293
    %2341 = vmatpush1.bf16.msra.mxu0 %v2292
    %2342 = vmatprep.subr.bf16.mxu0 %v2289
    %2343 = vmatpush1.bf16.msra.mxu0 %v2288
    %2344 = vmatprep.subr.bf16.mxu0 %v2285
    %2345 = vmatpush1.bf16.msra.mxu0 %v2284
    %2346 = vmatprep.subr.bf16.mxu0 %v2281
    %2347 = vmatpush1.bf16.msra.mxu0 %v2280
    %2348 = vmatprep.subr.bf16.mxu0 %v2277
    %2349 = vmatpush1.bf16.msra.mxu0 %v2276
    %2350 = vmatprep.subr.bf16.mxu0 %v2273
    %2351 = vmatpush1.bf16.msra.mxu0 %v2272
    %2352 = vmatprep.subr.bf16.mxu0 0
    %2353 = vmatpush2.bf16.msra.mxu0 0
    %2354 = vmatprep.subr.bf16.mxu0 0
    %2355 = vmatpush2.bf16.msra.mxu0 0
    %2356 = vmatprep.subr.bf16.mxu0 0
    %2357 = vmatpush2.bf16.msra.mxu0 0
    %2358 = vmatprep.subr.bf16.mxu0 0
    %2359 = vmatpush2.bf16.msra.mxu0 0
    %2360 = vmatprep.subr.bf16.mxu0 0
    %2361 = vmatpush2.bf16.msra.mxu0 0
    %2362 = vmatprep.subr.bf16.mxu0 0
    %2363 = vmatpush2.bf16.msra.mxu0 0
    %2364 = vmatprep.subr.bf16.mxu0 0
    %2365 = vmatpush2.bf16.msra.mxu0 0
    %2366 = vmatprep.subr.bf16.mxu0 0
    %2367 = vmatpush2.bf16.msra.mxu0 0
    %2368 = vmatprep.mubr.bf16.mxu0 0
    %2369 = vmatmul.mubr.bf16.gmra.mxu0 %v2121
    %v2370 = vpop.f32.mrf.mxu0
    %v2371 = vadd.f32 %v2159, %v2370
    %v2372 = vpop.f32.mrf.mxu0
    %v2373 = vadd.f32 %v2163, %v2372
    %v2374 = vpop.f32.mrf.mxu0
    %v2375 = vpop.f32.mrf.mxu0
    %2376 = vdwg.mxu0
    %2377 = vmatprep.subr.bf16.mxu0 %v2303
    %2378 = vmatpush1.bf16.msra.mxu0 %v2302
    %2379 = vmatprep.subr.bf16.mxu0 %v2299
    %2380 = vmatpush1.bf16.msra.mxu0 %v2298
    %2381 = vmatprep.subr.bf16.mxu0 %v2295
    %2382 = vmatpush1.bf16.msra.mxu0 %v2294
    %2383 = vmatprep.subr.bf16.mxu0 %v2291
    %2384 = vmatpush1.bf16.msra.mxu0 %v2290
    %2385 = vmatprep.subr.bf16.mxu0 %v2287
    %2386 = vmatpush1.bf16.msra.mxu0 %v2286
    %2387 = vmatprep.subr.bf16.mxu0 %v2283
    %2388 = vmatpush1.bf16.msra.mxu0 %v2282
    %2389 = vmatprep.subr.bf16.mxu0 %v2279
    %2390 = vmatpush1.bf16.msra.mxu0 %v2278
    %2391 = vmatprep.subr.bf16.mxu0 %v2275
    %2392 = vmatpush1.bf16.msra.mxu0 %v2274
    %2393 = vmatprep.subr.bf16.mxu0 0
    %2394 = vmatpush2.bf16.msra.mxu0 0
    %2395 = vmatprep.subr.bf16.mxu0 0
    %2396 = vmatpush2.bf16.msra.mxu0 0
    %2397 = vmatprep.subr.bf16.mxu0 0
    %2398 = vmatpush2.bf16.msra.mxu0 0
    %2399 = vmatprep.subr.bf16.mxu0 0
    %2400 = vmatpush2.bf16.msra.mxu0 0
    %2401 = vmatprep.subr.bf16.mxu0 0
    %2402 = vmatpush2.bf16.msra.mxu0 0
    %2403 = vmatprep.subr.bf16.mxu0 0
    %2404 = vmatpush2.bf16.msra.mxu0 0
    %2405 = vmatprep.subr.bf16.mxu0 0
    %2406 = vmatpush2.bf16.msra.mxu0 0
    %2407 = vmatprep.subr.bf16.mxu0 0
    %2408 = vmatpush2.bf16.msra.mxu0 0
    %2409 = vmatprep.mubr.bf16.mxu0 0
    %2410 = vmatmul.mubr.bf16.gmra.mxu0 %v2121
    %v2411 = vpop.f32.mrf.mxu0
    %v2412 = vadd.f32 %v2167, %v2411
    %v2413 = vpop.f32.mrf.mxu0
    %v2414 = vadd.f32 %v2171, %v2413
    %v2415 = vpop.f32.mrf.mxu0
    %v2416 = vpop.f32.mrf.mxu0
    %2417 = vdwg.mxu0
    %v2418 = vmul.f32 %v2371, 0.5
    %v2419 = vtanh.pop %v2418
    %v2420 = vadd.f32 %v2419, 1.0
    %v2421 = vmul.f32 %v2420, 0.5
    %v2422 = vmul.f32 %v2373, 0.5
    %v2423 = vtanh.pop %v2422
    %v2424 = vadd.f32 %v2423, 1.0
    %v2425 = vmul.f32 %v2424, 0.5
    %v2426 = vtanh.pop %v2412
    %v2427 = vmul.f32 %v2414, 0.5
    %v2428 = vtanh.pop %v2427
    %v2429 = vadd.f32 %v2428, 1.0
    %v2430 = vmul.f32 %v2429, 0.5
    %v2431 = vmul.f32 %v2425, %v1906
    %v2432 = vmul.f32 %v2421, %v2426
    %v2433 = vadd.f32 %v2431, %v2432
    %v2434 = vtanh.pop %v2433
    %v2435 = vmul.f32 %v2430, %v2434
    %2436 = vst [vmem:[#allocation3 + $0x18] sm:$0xff] %v2435
    %v2437 = vld [vmem:[#allocation2 + $0x80] sm:$0xff]
    %v2438 = vld [vmem:[#allocation2 + $0x88] sm:$0xff]
    %v2439 = vld [vmem:[#allocation2 + $0x90] sm:$0xff]
    %v2440 = vld [vmem:[#allocation2 + $0x98] sm:$0xff]
    %v2441 = vpack.c.bf16 %v2117, %v2117
    %v2442 = vld [vmem:[%s3] sm:$0xff]
    %v2443 = vld [vmem:[%s3 + $0x8] sm:$0xff]
    %v2444 = vld [vmem:[%s3 + $0x10] sm:$0xff]
    %v2445 = vld [vmem:[%s3 + $0x18] sm:$0xff]
    %v2446 = vld [vmem:[%s3 + $0x20] sm:$0xff]
    %v2447 = vld [vmem:[%s3 + $0x28] sm:$0xff]
    %v2448 = vld [vmem:[%s3 + $0x30] sm:$0xff]
    %v2449 = vld [vmem:[%s3 + $0x38] sm:$0xff]
    %v2450 = vld [vmem:[%s3 + $0x40] sm:$0xff]
    %v2451 = vld [vmem:[%s3 + $0x48] sm:$0xff]
    %v2452 = vld [vmem:[%s3 + $0x50] sm:$0xff]
    %v2453 = vld [vmem:[%s3 + $0x58] sm:$0xff]
    %v2454 = vld [vmem:[%s3 + $0x60] sm:$0xff]
    %v2455 = vld [vmem:[%s3 + $0x68] sm:$0xff]
    %v2456 = vld [vmem:[%s3 + $0x70] sm:$0xff]
    %v2457 = vld [vmem:[%s3 + $0x78] sm:$0xff]
    %v2474 = vunpack.c.l.b16 %v2442
    %v2475 = vunpack.c.h.b16 %v2442
    %v2476 = vunpack.c.l.b16 %v2443
    %v2477 = vunpack.c.h.b16 %v2443
    %v2478 = vunpack.c.l.b16 %v2444
    %v2479 = vunpack.c.h.b16 %v2444
    %v2480 = vunpack.c.l.b16 %v2445
    %v2481 = vunpack.c.h.b16 %v2445
    %v2482 = vunpack.c.l.b16 %v2446
    %v2483 = vunpack.c.h.b16 %v2446
    %v2484 = vunpack.c.l.b16 %v2447
    %v2485 = vunpack.c.h.b16 %v2447
    %v2486 = vunpack.c.l.b16 %v2448
    %v2487 = vunpack.c.h.b16 %v2448
    %v2488 = vunpack.c.l.b16 %v2449
    %v2489 = vunpack.c.h.b16 %v2449
    %v2490 = vunpack.c.l.b16 %v2450
    %v2491 = vunpack.c.h.b16 %v2450
    %v2492 = vunpack.c.l.b16 %v2451
    %v2493 = vunpack.c.h.b16 %v2451
    %v2494 = vunpack.c.l.b16 %v2452
    %v2495 = vunpack.c.h.b16 %v2452
    %v2496 = vunpack.c.l.b16 %v2453
    %v2497 = vunpack.c.h.b16 %v2453
    %v2498 = vunpack.c.l.b16 %v2454
    %v2499 = vunpack.c.h.b16 %v2454
    %v2500 = vunpack.c.l.b16 %v2455
    %v2501 = vunpack.c.h.b16 %v2455
    %v2502 = vunpack.c.l.b16 %v2456
    %v2503 = vunpack.c.h.b16 %v2456
    %v2504 = vunpack.c.l.b16 %v2457
    %v2505 = vunpack.c.h.b16 %v2457
    %v2506 = vpack.c.b16 %v2478, %v2474
    %v2507 = vpack.c.b16 %v2479, %v2475
    %v2508 = vpack.c.b16 %v2480, %v2476
    %v2509 = vpack.c.b16 %v2481, %v2477
    %v2510 = vpack.c.b16 %v2486, %v2482
    %v2511 = vpack.c.b16 %v2487, %v2483
    %v2512 = vpack.c.b16 %v2488, %v2484
    %v2513 = vpack.c.b16 %v2489, %v2485
    %v2514 = vpack.c.b16 %v2494, %v2490
    %v2515 = vpack.c.b16 %v2495, %v2491
    %v2516 = vpack.c.b16 %v2496, %v2492
    %v2517 = vpack.c.b16 %v2497, %v2493
    %v2518 = vpack.c.b16 %v2502, %v2498
    %v2519 = vpack.c.b16 %v2503, %v2499
    %v2520 = vpack.c.b16 %v2504, %v2500
    %v2521 = vpack.c.b16 %v2505, %v2501
    %v2539 = vsel %vm429, %v2441, 0
    %2541 = vmatprep.subr.bf16.mxu0 0
    %2542 = vmatpush1.bf16.msra.mxu0 0
    %2543 = vmatprep.subr.bf16.mxu0 0
    %2544 = vmatpush1.bf16.msra.mxu0 0
    %2545 = vmatprep.subr.bf16.mxu0 0
    %2546 = vmatpush1.bf16.msra.mxu0 0
    %2547 = vmatprep.subr.bf16.mxu0 0
    %2548 = vmatpush1.bf16.msra.mxu0 0
    %2549 = vmatprep.subr.bf16.mxu0 %v2519
    %2550 = vmatpush1.bf16.msra.mxu0 %v2518
    %2551 = vmatprep.subr.bf16.mxu0 %v2515
    %2552 = vmatpush1.bf16.msra.mxu0 %v2514
    %2553 = vmatprep.subr.bf16.mxu0 %v2511
    %2554 = vmatpush1.bf16.msra.mxu0 %v2510
    %2555 = vmatprep.subr.bf16.mxu0 %v2507
    %2556 = vmatpush1.bf16.msra.mxu0 %v2506
    %2557 = vmatprep.subr.bf16.mxu0 0
    %2558 = vmatpush2.bf16.msra.mxu0 0
    %2559 = vmatprep.subr.bf16.mxu0 0
    %2560 = vmatpush2.bf16.msra.mxu0 0
    %2561 = vmatprep.subr.bf16.mxu0 0
    %2562 = vmatpush2.bf16.msra.mxu0 0
    %2563 = vmatprep.subr.bf16.mxu0 0
    %2564 = vmatpush2.bf16.msra.mxu0 0
    %2565 = vmatprep.subr.bf16.mxu0 0
    %2566 = vmatpush2.bf16.msra.mxu0 0
    %2567 = vmatprep.subr.bf16.mxu0 0
    %2568 = vmatpush2.bf16.msra.mxu0 0
    %2569 = vmatprep.subr.bf16.mxu0 0
    %2570 = vmatpush2.bf16.msra.mxu0 0
    %2571 = vmatprep.subr.bf16.mxu0 0
    %2572 = vmatpush2.bf16.msra.mxu0 0
    %2573 = vmatprep.mubr.bf16.mxu0 0
    %2574 = vmatmul.mubr.bf16.gmra.mxu0 %v2539
    %v2575 = vpop.f32.mrf.mxu0
    %v2576 = vadd.f32 0.0, %v2575
    %v2577 = vpop.f32.mrf.mxu0
    %v2578 = vadd.f32 0.0, %v2577
    %v2579 = vpop.f32.mrf.mxu0
    %v2580 = vpop.f32.mrf.mxu0
    %2581 = vdwg.mxu0
    %2582 = vmatprep.subr.bf16.mxu0 0
    %2583 = vmatpush1.bf16.msra.mxu0 0
    %2584 = vmatprep.subr.bf16.mxu0 0
    %2585 = vmatpush1.bf16.msra.mxu0 0
    %2586 = vmatprep.subr.bf16.mxu0 0
    %2587 = vmatpush1.bf16.msra.mxu0 0
    %2588 = vmatprep.subr.bf16.mxu0 0
    %2589 = vmatpush1.bf16.msra.mxu0 0
    %2590 = vmatprep.subr.bf16.mxu0 %v2521
    %2591 = vmatpush1.bf16.msra.mxu0 %v2520
    %2592 = vmatprep.subr.bf16.mxu0 %v2517
    %2593 = vmatpush1.bf16.msra.mxu0 %v2516
    %2594 = vmatprep.subr.bf16.mxu0 %v2513
    %2595 = vmatpush1.bf16.msra.mxu0 %v2512
    %2596 = vmatprep.subr.bf16.mxu0 %v2509
    %2597 = vmatpush1.bf16.msra.mxu0 %v2508
    %2598 = vmatprep.subr.bf16.mxu0 0
    %2599 = vmatpush2.bf16.msra.mxu0 0
    %2600 = vmatprep.subr.bf16.mxu0 0
    %2601 = vmatpush2.bf16.msra.mxu0 0
    %2602 = vmatprep.subr.bf16.mxu0 0
    %2603 = vmatpush2.bf16.msra.mxu0 0
    %2604 = vmatprep.subr.bf16.mxu0 0
    %2605 = vmatpush2.bf16.msra.mxu0 0
    %2606 = vmatprep.subr.bf16.mxu0 0
    %2607 = vmatpush2.bf16.msra.mxu0 0
    %2608 = vmatprep.subr.bf16.mxu0 0
    %2609 = vmatpush2.bf16.msra.mxu0 0
    %2610 = vmatprep.subr.bf16.mxu0 0
    %2611 = vmatpush2.bf16.msra.mxu0 0
    %2612 = vmatprep.subr.bf16.mxu0 0
    %2613 = vmatpush2.bf16.msra.mxu0 0
    %2614 = vmatprep.mubr.bf16.mxu0 0
    %2615 = vmatmul.mubr.bf16.gmra.mxu0 %v2539
    %v2616 = vpop.f32.mrf.mxu0
    %v2617 = vadd.f32 0.0, %v2616
    %v2618 = vpop.f32.mrf.mxu0
    %v2619 = vadd.f32 0.0, %v2618
    %v2620 = vpop.f32.mrf.mxu0
    %v2621 = vpop.f32.mrf.mxu0
    %2622 = vdwg.mxu0
    %v2623 = vadd.f32 %v2437, %v2576
    %v2624 = vadd.f32 %v2438, %v2578
    %v2625 = vadd.f32 %v2439, %v2617
    %v2626 = vadd.f32 %v2440, %v2619
    %v2627 = vmul.f32 %v2623, 0.5
    %v2628 = vtanh.pop %v2627
    %v2629 = vadd.f32 %v2628, 1.0
    %v2630 = vmul.f32 %v2629, 0.5
    %v2631 = vmul.f32 %v2624, 0.5
    %v2632 = vtanh.pop %v2631
    %v2633 = vadd.f32 %v2632, 1.0
    %v2634 = vmul.f32 %v2633, 0.5
    %v2635 = vtanh.pop %v2625
    %v2636 = vmul.f32 %v2626, 0.5
    %v2637 = vtanh.pop %v2636
    %v2638 = vadd.f32 %v2637, 1.0
    %v2639 = vmul.f32 %v2638, 0.5
    %v2640 = vmul.f32 %v2634, %v2115
    %v2641 = vmul.f32 %v2630, %v2635
    %v2642 = vadd.f32 %v2640, %v2641
    %v2643 = vtanh.pop %v2642
    %v2644 = vmul.f32 %v2639, %v2643
    %2645 = vrot.lane.b32.xlu0 %v2435, 64
    %v2646 = vpop.permute.xlu0 %2645
    %v2647 = vsel %vm328, %v2644, %v2646
    %v2648 = vpack.c.bf16 %v2647, %v2647
    %v2649 = vld [vmem:[%s4] sm:$0xff]
    %v2650 = vld [vmem:[%s4 + $0x8] sm:$0xff]
    %v2651 = vld [vmem:[%s4 + $0x10] sm:$0xff]
    %v2652 = vld [vmem:[%s4 + $0x18] sm:$0xff]
    %v2653 = vld [vmem:[%s4 + $0x20] sm:$0xff]
    %v2654 = vld [vmem:[%s4 + $0x28] sm:$0xff]
    %v2655 = vld [vmem:[%s4 + $0x30] sm:$0xff]
    %v2656 = vld [vmem:[%s4 + $0x38] sm:$0xff]
    %v2657 = vld [vmem:[%s4 + $0x40] sm:$0xff]
    %v2658 = vld [vmem:[%s4 + $0x48] sm:$0xff]
    %v2659 = vld [vmem:[%s4 + $0x50] sm:$0xff]
    %v2660 = vld [vmem:[%s4 + $0x58] sm:$0xff]
    %v2661 = vld [vmem:[%s4 + $0x60] sm:$0xff]
    %v2662 = vld [vmem:[%s4 + $0x68] sm:$0xff]
    %v2663 = vld [vmem:[%s4 + $0x70] sm:$0xff]
    %v2664 = vld [vmem:[%s4 + $0x78] sm:$0xff]
    %v2665 = vld [vmem:[%s4 + $0x80] sm:$0xff]
    %v2666 = vld [vmem:[%s4 + $0x88] sm:$0xff]
    %v2667 = vld [vmem:[%s4 + $0x90] sm:$0xff]
    %v2668 = vld [vmem:[%s4 + $0x98] sm:$0xff]
    %v2669 = vld [vmem:[%s4 + $0xa0] sm:$0xff]
    %v2670 = vld [vmem:[%s4 + $0xa8] sm:$0xff]
    %v2671 = vld [vmem:[%s4 + $0xb0] sm:$0xff]
    %v2672 = vld [vmem:[%s4 + $0xb8] sm:$0xff]
    %v2673 = vld [vmem:[%s4 + $0xc0] sm:$0xff]
    %v2674 = vld [vmem:[%s4 + $0xc8] sm:$0xff]
    %v2675 = vld [vmem:[%s4 + $0xd0] sm:$0xff]
    %v2676 = vld [vmem:[%s4 + $0xd8] sm:$0xff]
    %v2677 = vld [vmem:[%s4 + $0xe0] sm:$0xff]
    %v2678 = vld [vmem:[%s4 + $0xe8] sm:$0xff]
    %v2679 = vld [vmem:[%s4 + $0xf0] sm:$0xff]
    %v2680 = vld [vmem:[%s4 + $0xf8] sm:$0xff]
    %v2681 = vld [vmem:[%s5] sm:$0xf]
    %v2683 = vlaneseq
    %v2684 = vshrl.u32 %v2683, 7
    %v2685 = vsub.s32 0, %v2684
    %v2686 = vrot.slane %v2681, %v2685
    %v2687 = vlaneseq
    %v2688 = vshrl.u32 %v2687, 7
    %v2689 = vsub.s32 1, %v2688
    %v2690 = vrot.slane %v2681, %v2689
    %v2691 = vlaneseq
    %v2692 = vshrl.u32 %v2691, 7
    %v2693 = vsub.s32 2, %v2692
    %v2694 = vrot.slane %v2681, %v2693
    %v2695 = vlaneseq
    %v2696 = vshrl.u32 %v2695, 7
    %v2697 = vsub.s32 3, %v2696
    %v2698 = vrot.slane %v2681, %v2697
    %v2735 = vunpack.c.l.b16 %v2649
    %v2736 = vunpack.c.h.b16 %v2649
    %v2737 = vunpack.c.l.b16 %v2650
    %v2738 = vunpack.c.h.b16 %v2650
    %v2739 = vunpack.c.l.b16 %v2651
    %v2740 = vunpack.c.h.b16 %v2651
    %v2741 = vunpack.c.l.b16 %v2652
    %v2742 = vunpack.c.h.b16 %v2652
    %v2743 = vunpack.c.l.b16 %v2653
    %v2744 = vunpack.c.h.b16 %v2653
    %v2745 = vunpack.c.l.b16 %v2654
    %v2746 = vunpack.c.h.b16 %v2654
    %v2747 = vunpack.c.l.b16 %v2655
    %v2748 = vunpack.c.h.b16 %v2655
    %v2749 = vunpack.c.l.b16 %v2656
    %v2750 = vunpack.c.h.b16 %v2656
    %v2751 = vunpack.c.l.b16 %v2657
    %v2752 = vunpack.c.h.b16 %v2657
    %v2753 = vunpack.c.l.b16 %v2658
    %v2754 = vunpack.c.h.b16 %v2658
    %v2755 = vunpack.c.l.b16 %v2659
    %v2756 = vunpack.c.h.b16 %v2659
    %v2757 = vunpack.c.l.b16 %v2660
    %v2758 = vunpack.c.h.b16 %v2660
    %v2759 = vunpack.c.l.b16 %v2661
    %v2760 = vunpack.c.h.b16 %v2661
    %v2761 = vunpack.c.l.b16 %v2662
    %v2762 = vunpack.c.h.b16 %v2662
    %v2763 = vunpack.c.l.b16 %v2663
    %v2764 = vunpack.c.h.b16 %v2663
    %v2765 = vunpack.c.l.b16 %v2664
    %v2766 = vunpack.c.h.b16 %v2664
    %v2767 = vunpack.c.l.b16 %v2665
    %v2768 = vunpack.c.h.b16 %v2665
    %v2769 = vunpack.c.l.b16 %v2666
    %v2770 = vunpack.c.h.b16 %v2666
    %v2771 = vunpack.c.l.b16 %v2667
    %v2772 = vunpack.c.h.b16 %v2667
    %v2773 = vunpack.c.l.b16 %v2668
    %v2774 = vunpack.c.h.b16 %v2668
    %v2775 = vunpack.c.l.b16 %v2669
    %v2776 = vunpack.c.h.b16 %v2669
    %v2777 = vunpack.c.l.b16 %v2670
    %v2778 = vunpack.c.h.b16 %v2670
    %v2779 = vunpack.c.l.b16 %v2671
    %v2780 = vunpack.c.h.b16 %v2671
    %v2781 = vunpack.c.l.b16 %v2672
    %v2782 = vunpack.c.h.b16 %v2672
    %v2783 = vunpack.c.l.b16 %v2673
    %v2784 = vunpack.c.h.b16 %v2673
    %v2785 = vunpack.c.l.b16 %v2674
    %v2786 = vunpack.c.h.b16 %v2674
    %v2787 = vunpack.c.l.b16 %v2675
    %v2788 = vunpack.c.h.b16 %v2675
    %v2789 = vunpack.c.l.b16 %v2676
    %v2790 = vunpack.c.h.b16 %v2676
    %v2791 = vunpack.c.l.b16 %v2677
    %v2792 = vunpack.c.h.b16 %v2677
    %v2793 = vunpack.c.l.b16 %v2678
    %v2794 = vunpack.c.h.b16 %v2678
    %v2795 = vunpack.c.l.b16 %v2679
    %v2796 = vunpack.c.h.b16 %v2679
    %v2797 = vunpack.c.l.b16 %v2680
    %v2798 = vunpack.c.h.b16 %v2680
    %v2799 = vpack.c.b16 %v2739, %v2735
    %v2800 = vpack.c.b16 %v2740, %v2736
    %v2801 = vpack.c.b16 %v2741, %v2737
    %v2802 = vpack.c.b16 %v2742, %v2738
    %v2803 = vpack.c.b16 %v2747, %v2743
    %v2804 = vpack.c.b16 %v2748, %v2744
    %v2805 = vpack.c.b16 %v2749, %v2745
    %v2806 = vpack.c.b16 %v2750, %v2746
    %v2807 = vpack.c.b16 %v2755, %v2751
    %v2808 = vpack.c.b16 %v2756, %v2752
    %v2809 = vpack.c.b16 %v2757, %v2753
    %v2810 = vpack.c.b16 %v2758, %v2754
    %v2811 = vpack.c.b16 %v2763, %v2759
    %v2812 = vpack.c.b16 %v2764, %v2760
    %v2813 = vpack.c.b16 %v2765, %v2761
    %v2814 = vpack.c.b16 %v2766, %v2762
    %v2815 = vpack.c.b16 %v2771, %v2767
    %v2816 = vpack.c.b16 %v2772, %v2768
    %v2817 = vpack.c.b16 %v2773, %v2769
    %v2818 = vpack.c.b16 %v2774, %v2770
    %v2819 = vpack.c.b16 %v2779, %v2775
    %v2820 = vpack.c.b16 %v2780, %v2776
    %v2821 = vpack.c.b16 %v2781, %v2777
    %v2822 = vpack.c.b16 %v2782, %v2778
    %v2823 = vpack.c.b16 %v2787, %v2783
    %v2824 = vpack.c.b16 %v2788, %v2784
    %v2825 = vpack.c.b16 %v2789, %v2785
    %v2826 = vpack.c.b16 %v2790, %v2786
    %v2827 = vpack.c.b16 %v2795, %v2791
    %v2828 = vpack.c.b16 %v2796, %v2792
    %v2829 = vpack.c.b16 %v2797, %v2793
    %v2830 = vpack.c.b16 %v2798, %v2794
    %2863 = vmatprep.subr.bf16.mxu0 %v2828
    %2864 = vmatpush1.bf16.msra.mxu0 %v2827
    %2865 = vmatprep.subr.bf16.mxu0 %v2824
    %2866 = vmatpush1.bf16.msra.mxu0 %v2823
    %2867 = vmatprep.subr.bf16.mxu0 %v2820
    %2868 = vmatpush1.bf16.msra.mxu0 %v2819
    %2869 = vmatprep.subr.bf16.mxu0 %v2816
    %2870 = vmatpush1.bf16.msra.mxu0 %v2815
    %2871 = vmatprep.subr.bf16.mxu0 %v2812
    %2872 = vmatpush1.bf16.msra.mxu0 %v2811
    %2873 = vmatprep.subr.bf16.mxu0 %v2808
    %2874 = vmatpush1.bf16.msra.mxu0 %v2807
    %2875 = vmatprep.subr.bf16.mxu0 %v2804
    %2876 = vmatpush1.bf16.msra.mxu0 %v2803
    %2877 = vmatprep.subr.bf16.mxu0 %v2800
    %2878 = vmatpush1.bf16.msra.mxu0 %v2799
    %2879 = vmatprep.subr.bf16.mxu0 0
    %2880 = vmatpush2.bf16.msra.mxu0 0
    %2881 = vmatprep.subr.bf16.mxu0 0
    %2882 = vmatpush2.bf16.msra.mxu0 0
    %2883 = vmatprep.subr.bf16.mxu0 0
    %2884 = vmatpush2.bf16.msra.mxu0 0
    %2885 = vmatprep.subr.bf16.mxu0 0
    %2886 = vmatpush2.bf16.msra.mxu0 0
    %2887 = vmatprep.subr.bf16.mxu0 0
    %2888 = vmatpush2.bf16.msra.mxu0 0
    %2889 = vmatprep.subr.bf16.mxu0 0
    %2890 = vmatpush2.bf16.msra.mxu0 0
    %2891 = vmatprep.subr.bf16.mxu0 0
    %2892 = vmatpush2.bf16.msra.mxu0 0
    %2893 = vmatprep.subr.bf16.mxu0 0
    %2894 = vmatpush2.bf16.msra.mxu0 0
    %2895 = vmatprep.mubr.bf16.mxu0 0
    %2896 = vmatmul.mubr.bf16.gmra.mxu0 %v2648
    %v2897 = vpop.f32.mrf.mxu0
    %v2898 = vadd.f32 %v2686, %v2897
    %v2899 = vpop.f32.mrf.mxu0
    %v2900 = vadd.f32 %v2690, %v2899
    %v2901 = vpop.f32.mrf.mxu0
    %v2902 = vpop.f32.mrf.mxu0
    %2903 = vdwg.mxu0
    %2904 = vmatprep.subr.bf16.mxu0 %v2830
    %2905 = vmatpush1.bf16.msra.mxu0 %v2829
    %2906 = vmatprep.subr.bf16.mxu0 %v2826
    %2907 = vmatpush1.bf16.msra.mxu0 %v2825
    %2908 = vmatprep.subr.bf16.mxu0 %v2822
    %2909 = vmatpush1.bf16.msra.mxu0 %v2821
    %2910 = vmatprep.subr.bf16.mxu0 %v2818
    %2911 = vmatpush1.bf16.msra.mxu0 %v2817
    %2912 = vmatprep.subr.bf16.mxu0 %v2814
    %2913 = vmatpush1.bf16.msra.mxu0 %v2813
    %2914 = vmatprep.subr.bf16.mxu0 %v2810
    %2915 = vmatpush1.bf16.msra.mxu0 %v2809
    %2916 = vmatprep.subr.bf16.mxu0 %v2806
    %2917 = vmatpush1.bf16.msra.mxu0 %v2805
    %2918 = vmatprep.subr.bf16.mxu0 %v2802
    %2919 = vmatpush1.bf16.msra.mxu0 %v2801
    %2920 = vmatprep.subr.bf16.mxu0 0
    %2921 = vmatpush2.bf16.msra.mxu0 0
    %2922 = vmatprep.subr.bf16.mxu0 0
    %2923 = vmatpush2.bf16.msra.mxu0 0
    %2924 = vmatprep.subr.bf16.mxu0 0
    %2925 = vmatpush2.bf16.msra.mxu0 0
    %2926 = vmatprep.subr.bf16.mxu0 0
    %2927 = vmatpush2.bf16.msra.mxu0 0
    %2928 = vmatprep.subr.bf16.mxu0 0
    %2929 = vmatpush2.bf16.msra.mxu0 0
    %2930 = vmatprep.subr.bf16.mxu0 0
    %2931 = vmatpush2.bf16.msra.mxu0 0
    %2932 = vmatprep.subr.bf16.mxu0 0
    %2933 = vmatpush2.bf16.msra.mxu0 0
    %2934 = vmatprep.subr.bf16.mxu0 0
    %2935 = vmatpush2.bf16.msra.mxu0 0
    %2936 = vmatprep.mubr.bf16.mxu0 0
    %2937 = vmatmul.mubr.bf16.gmra.mxu0 %v2648
    %v2938 = vpop.f32.mrf.mxu0
    %v2939 = vadd.f32 %v2694, %v2938
    %v2940 = vpop.f32.mrf.mxu0
    %v2941 = vadd.f32 %v2698, %v2940
    %v2942 = vpop.f32.mrf.mxu0
    %v2943 = vpop.f32.mrf.mxu0
    %2944 = vdwg.mxu0
    %v2945 = vmul.f32 %v2898, 0.5
    %v2946 = vtanh.pop %v2945
    %v2947 = vadd.f32 %v2946, 1.0
    %v2948 = vmul.f32 %v2947, 0.5
    %v2949 = vmul.f32 %v2900, 0.5
    %v2950 = vtanh.pop %v2949
    %v2951 = vadd.f32 %v2950, 1.0
    %v2952 = vmul.f32 %v2951, 0.5
    %v2953 = vtanh.pop %v2939
    %v2954 = vmul.f32 %v2941, 0.5
    %v2955 = vtanh.pop %v2954
    %v2956 = vadd.f32 %v2955, 1.0
    %v2957 = vmul.f32 %v2956, 0.5
    %v2958 = vmul.f32 %v2952, %v2433
    %v2959 = vmul.f32 %v2948, %v2953
    %v2960 = vadd.f32 %v2958, %v2959
    %v2961 = vtanh.pop %v2960
    %v2962 = vmul.f32 %v2957, %v2961
    %2963 = vst [vmem:[#allocation3 + $0x20] sm:$0xff] %v2962
    %v2964 = vld [vmem:[#allocation2 + $0xa0] sm:$0xff]
    %v2965 = vld [vmem:[#allocation2 + $0xa8] sm:$0xff]
    %v2966 = vld [vmem:[#allocation2 + $0xb0] sm:$0xff]
    %v2967 = vld [vmem:[#allocation2 + $0xb8] sm:$0xff]
    %v2968 = vpack.c.bf16 %v2644, %v2644
    %v2969 = vld [vmem:[%s3] sm:$0xff]
    %v2970 = vld [vmem:[%s3 + $0x8] sm:$0xff]
    %v2971 = vld [vmem:[%s3 + $0x10] sm:$0xff]
    %v2972 = vld [vmem:[%s3 + $0x18] sm:$0xff]
    %v2973 = vld [vmem:[%s3 + $0x20] sm:$0xff]
    %v2974 = vld [vmem:[%s3 + $0x28] sm:$0xff]
    %v2975 = vld [vmem:[%s3 + $0x30] sm:$0xff]
    %v2976 = vld [vmem:[%s3 + $0x38] sm:$0xff]
    %v2977 = vld [vmem:[%s3 + $0x40] sm:$0xff]
    %v2978 = vld [vmem:[%s3 + $0x48] sm:$0xff]
    %v2979 = vld [vmem:[%s3 + $0x50] sm:$0xff]
    %v2980 = vld [vmem:[%s3 + $0x58] sm:$0xff]
    %v2981 = vld [vmem:[%s3 + $0x60] sm:$0xff]
    %v2982 = vld [vmem:[%s3 + $0x68] sm:$0xff]
    %v2983 = vld [vmem:[%s3 + $0x70] sm:$0xff]
    %v2984 = vld [vmem:[%s3 + $0x78] sm:$0xff]
    %v3001 = vunpack.c.l.b16 %v2969
    %v3002 = vunpack.c.h.b16 %v2969
    %v3003 = vunpack.c.l.b16 %v2970
    %v3004 = vunpack.c.h.b16 %v2970
    %v3005 = vunpack.c.l.b16 %v2971
    %v3006 = vunpack.c.h.b16 %v2971
    %v3007 = vunpack.c.l.b16 %v2972
    %v3008 = vunpack.c.h.b16 %v2972
    %v3009 = vunpack.c.l.b16 %v2973
    %v3010 = vunpack.c.h.b16 %v2973
    %v3011 = vunpack.c.l.b16 %v2974
    %v3012 = vunpack.c.h.b16 %v2974
    %v3013 = vunpack.c.l.b16 %v2975
    %v3014 = vunpack.c.h.b16 %v2975
    %v3015 = vunpack.c.l.b16 %v2976
    %v3016 = vunpack.c.h.b16 %v2976
    %v3017 = vunpack.c.l.b16 %v2977
    %v3018 = vunpack.c.h.b16 %v2977
    %v3019 = vunpack.c.l.b16 %v2978
    %v3020 = vunpack.c.h.b16 %v2978
    %v3021 = vunpack.c.l.b16 %v2979
    %v3022 = vunpack.c.h.b16 %v2979
    %v3023 = vunpack.c.l.b16 %v2980
    %v3024 = vunpack.c.h.b16 %v2980
    %v3025 = vunpack.c.l.b16 %v2981
    %v3026 = vunpack.c.h.b16 %v2981
    %v3027 = vunpack.c.l.b16 %v2982
    %v3028 = vunpack.c.h.b16 %v2982
    %v3029 = vunpack.c.l.b16 %v2983
    %v3030 = vunpack.c.h.b16 %v2983
    %v3031 = vunpack.c.l.b16 %v2984
    %v3032 = vunpack.c.h.b16 %v2984
    %v3033 = vpack.c.b16 %v3005, %v3001
    %v3034 = vpack.c.b16 %v3006, %v3002
    %v3035 = vpack.c.b16 %v3007, %v3003
    %v3036 = vpack.c.b16 %v3008, %v3004
    %v3037 = vpack.c.b16 %v3013, %v3009
    %v3038 = vpack.c.b16 %v3014, %v3010
    %v3039 = vpack.c.b16 %v3015, %v3011
    %v3040 = vpack.c.b16 %v3016, %v3012
    %v3041 = vpack.c.b16 %v3021, %v3017
    %v3042 = vpack.c.b16 %v3022, %v3018
    %v3043 = vpack.c.b16 %v3023, %v3019
    %v3044 = vpack.c.b16 %v3024, %v3020
    %v3045 = vpack.c.b16 %v3029, %v3025
    %v3046 = vpack.c.b16 %v3030, %v3026
    %v3047 = vpack.c.b16 %v3031, %v3027
    %v3048 = vpack.c.b16 %v3032, %v3028
    %v3066 = vsel %vm429, %v2968, 0
    %3068 = vmatprep.subr.bf16.mxu0 0
    %3069 = vmatpush1.bf16.msra.mxu0 0
    %3070 = vmatprep.subr.bf16.mxu0 0
    %3071 = vmatpush1.bf16.msra.mxu0 0
    %3072 = vmatprep.subr.bf16.mxu0 0
    %3073 = vmatpush1.bf16.msra.mxu0 0
    %3074 = vmatprep.subr.bf16.mxu0 0
    %3075 = vmatpush1.bf16.msra.mxu0 0
    %3076 = vmatprep.subr.bf16.mxu0 %v3046
    %3077 = vmatpush1.bf16.msra.mxu0 %v3045
    %3078 = vmatprep.subr.bf16.mxu0 %v3042
    %3079 = vmatpush1.bf16.msra.mxu0 %v3041
    %3080 = vmatprep.subr.bf16.mxu0 %v3038
    %3081 = vmatpush1.bf16.msra.mxu0 %v3037
    %3082 = vmatprep.subr.bf16.mxu0 %v3034
    %3083 = vmatpush1.bf16.msra.mxu0 %v3033
    %3084 = vmatprep.subr.bf16.mxu0 0
    %3085 = vmatpush2.bf16.msra.mxu0 0
    %3086 = vmatprep.subr.bf16.mxu0 0
    %3087 = vmatpush2.bf16.msra.mxu0 0
    %3088 = vmatprep.subr.bf16.mxu0 0
    %3089 = vmatpush2.bf16.msra.mxu0 0
    %3090 = vmatprep.subr.bf16.mxu0 0
    %3091 = vmatpush2.bf16.msra.mxu0 0
    %3092 = vmatprep.subr.bf16.mxu0 0
    %3093 = vmatpush2.bf16.msra.mxu0 0
    %3094 = vmatprep.subr.bf16.mxu0 0
    %3095 = vmatpush2.bf16.msra.mxu0 0
    %3096 = vmatprep.subr.bf16.mxu0 0
    %3097 = vmatpush2.bf16.msra.mxu0 0
    %3098 = vmatprep.subr.bf16.mxu0 0
    %3099 = vmatpush2.bf16.msra.mxu0 0
    %3100 = vmatprep.mubr.bf16.mxu0 0
    %3101 = vmatmul.mubr.bf16.gmra.mxu0 %v3066
    %v3102 = vpop.f32.mrf.mxu0
    %v3103 = vadd.f32 0.0, %v3102
    %v3104 = vpop.f32.mrf.mxu0
    %v3105 = vadd.f32 0.0, %v3104
    %v3106 = vpop.f32.mrf.mxu0
    %v3107 = vpop.f32.mrf.mxu0
    %3108 = vdwg.mxu0
    %3109 = vmatprep.subr.bf16.mxu0 0
    %3110 = vmatpush1.bf16.msra.mxu0 0
    %3111 = vmatprep.subr.bf16.mxu0 0
    %3112 = vmatpush1.bf16.msra.mxu0 0
    %3113 = vmatprep.subr.bf16.mxu0 0
    %3114 = vmatpush1.bf16.msra.mxu0 0
    %3115 = vmatprep.subr.bf16.mxu0 0
    %3116 = vmatpush1.bf16.msra.mxu0 0
    %3117 = vmatprep.subr.bf16.mxu0 %v3048
    %3118 = vmatpush1.bf16.msra.mxu0 %v3047
    %3119 = vmatprep.subr.bf16.mxu0 %v3044
    %3120 = vmatpush1.bf16.msra.mxu0 %v3043
    %3121 = vmatprep.subr.bf16.mxu0 %v3040
    %3122 = vmatpush1.bf16.msra.mxu0 %v3039
    %3123 = vmatprep.subr.bf16.mxu0 %v3036
    %3124 = vmatpush1.bf16.msra.mxu0 %v3035
    %3125 = vmatprep.subr.bf16.mxu0 0
    %3126 = vmatpush2.bf16.msra.mxu0 0
    %3127 = vmatprep.subr.bf16.mxu0 0
    %3128 = vmatpush2.bf16.msra.mxu0 0
    %3129 = vmatprep.subr.bf16.mxu0 0
    %3130 = vmatpush2.bf16.msra.mxu0 0
    %3131 = vmatprep.subr.bf16.mxu0 0
    %3132 = vmatpush2.bf16.msra.mxu0 0
    %3133 = vmatprep.subr.bf16.mxu0 0
    %3134 = vmatpush2.bf16.msra.mxu0 0
    %3135 = vmatprep.subr.bf16.mxu0 0
    %3136 = vmatpush2.bf16.msra.mxu0 0
    %3137 = vmatprep.subr.bf16.mxu0 0
    %3138 = vmatpush2.bf16.msra.mxu0 0
    %3139 = vmatprep.subr.bf16.mxu0 0
    %3140 = vmatpush2.bf16.msra.mxu0 0
    %3141 = vmatprep.mubr.bf16.mxu0 0
    %3142 = vmatmul.mubr.bf16.gmra.mxu0 %v3066
    %v3143 = vpop.f32.mrf.mxu0
    %v3144 = vadd.f32 0.0, %v3143
    %v3145 = vpop.f32.mrf.mxu0
    %v3146 = vadd.f32 0.0, %v3145
    %v3147 = vpop.f32.mrf.mxu0
    %v3148 = vpop.f32.mrf.mxu0
    %3149 = vdwg.mxu0
    %v3150 = vadd.f32 %v2964, %v3103
    %v3151 = vadd.f32 %v2965, %v3105
    %v3152 = vadd.f32 %v2966, %v3144
    %v3153 = vadd.f32 %v2967, %v3146
    %v3154 = vmul.f32 %v3150, 0.5
    %v3155 = vtanh.pop %v3154
    %v3156 = vadd.f32 %v3155, 1.0
    %v3157 = vmul.f32 %v3156, 0.5
    %v3158 = vmul.f32 %v3151, 0.5
    %v3159 = vtanh.pop %v3158
    %v3160 = vadd.f32 %v3159, 1.0
    %v3161 = vmul.f32 %v3160, 0.5
    %v3162 = vtanh.pop %v3152
    %v3163 = vmul.f32 %v3153, 0.5
    %v3164 = vtanh.pop %v3163
    %v3165 = vadd.f32 %v3164, 1.0
    %v3166 = vmul.f32 %v3165, 0.5
    %v3167 = vmul.f32 %v3161, %v2642
    %v3168 = vmul.f32 %v3157, %v3162
    %v3169 = vadd.f32 %v3167, %v3168
    %v3170 = vtanh.pop %v3169
    %v3171 = vmul.f32 %v3166, %v3170
    %3172 = vrot.lane.b32.xlu0 %v2962, 64
    %v3173 = vpop.permute.xlu0 %3172
    %v3174 = vsel %vm328, %v3171, %v3173
    %v3175 = vpack.c.bf16 %v3174, %v3174
    %v3176 = vld [vmem:[%s4] sm:$0xff]
    %v3177 = vld [vmem:[%s4 + $0x8] sm:$0xff]
    %v3178 = vld [vmem:[%s4 + $0x10] sm:$0xff]
    %v3179 = vld [vmem:[%s4 + $0x18] sm:$0xff]
    %v3180 = vld [vmem:[%s4 + $0x20] sm:$0xff]
    %v3181 = vld [vmem:[%s4 + $0x28] sm:$0xff]
    %v3182 = vld [vmem:[%s4 + $0x30] sm:$0xff]
    %v3183 = vld [vmem:[%s4 + $0x38] sm:$0xff]
    %v3184 = vld [vmem:[%s4 + $0x40] sm:$0xff]
    %v3185 = vld [vmem:[%s4 + $0x48] sm:$0xff]
    %v3186 = vld [vmem:[%s4 + $0x50] sm:$0xff]
    %v3187 = vld [vmem:[%s4 + $0x58] sm:$0xff]
    %v3188 = vld [vmem:[%s4 + $0x60] sm:$0xff]
    %v3189 = vld [vmem:[%s4 + $0x68] sm:$0xff]
    %v3190 = vld [vmem:[%s4 + $0x70] sm:$0xff]
    %v3191 = vld [vmem:[%s4 + $0x78] sm:$0xff]
    %v3192 = vld [vmem:[%s4 + $0x80] sm:$0xff]
    %v3193 = vld [vmem:[%s4 + $0x88] sm:$0xff]
    %v3194 = vld [vmem:[%s4 + $0x90] sm:$0xff]
    %v3195 = vld [vmem:[%s4 + $0x98] sm:$0xff]
    %v3196 = vld [vmem:[%s4 + $0xa0] sm:$0xff]
    %v3197 = vld [vmem:[%s4 + $0xa8] sm:$0xff]
    %v3198 = vld [vmem:[%s4 + $0xb0] sm:$0xff]
    %v3199 = vld [vmem:[%s4 + $0xb8] sm:$0xff]
    %v3200 = vld [vmem:[%s4 + $0xc0] sm:$0xff]
    %v3201 = vld [vmem:[%s4 + $0xc8] sm:$0xff]
    %v3202 = vld [vmem:[%s4 + $0xd0] sm:$0xff]
    %v3203 = vld [vmem:[%s4 + $0xd8] sm:$0xff]
    %v3204 = vld [vmem:[%s4 + $0xe0] sm:$0xff]
    %v3205 = vld [vmem:[%s4 + $0xe8] sm:$0xff]
    %v3206 = vld [vmem:[%s4 + $0xf0] sm:$0xff]
    %v3207 = vld [vmem:[%s4 + $0xf8] sm:$0xff]
    %v3208 = vld [vmem:[%s5] sm:$0xf]
    %v3210 = vlaneseq
    %v3211 = vshrl.u32 %v3210, 7
    %v3212 = vsub.s32 0, %v3211
    %v3213 = vrot.slane %v3208, %v3212
    %v3214 = vlaneseq
    %v3215 = vshrl.u32 %v3214, 7
    %v3216 = vsub.s32 1, %v3215
    %v3217 = vrot.slane %v3208, %v3216
    %v3218 = vlaneseq
    %v3219 = vshrl.u32 %v3218, 7
    %v3220 = vsub.s32 2, %v3219
    %v3221 = vrot.slane %v3208, %v3220
    %v3222 = vlaneseq
    %v3223 = vshrl.u32 %v3222, 7
    %v3224 = vsub.s32 3, %v3223
    %v3225 = vrot.slane %v3208, %v3224
    %v3262 = vunpack.c.l.b16 %v3176
    %v3263 = vunpack.c.h.b16 %v3176
    %v3264 = vunpack.c.l.b16 %v3177
    %v3265 = vunpack.c.h.b16 %v3177
    %v3266 = vunpack.c.l.b16 %v3178
    %v3267 = vunpack.c.h.b16 %v3178
    %v3268 = vunpack.c.l.b16 %v3179
    %v3269 = vunpack.c.h.b16 %v3179
    %v3270 = vunpack.c.l.b16 %v3180
    %v3271 = vunpack.c.h.b16 %v3180
    %v3272 = vunpack.c.l.b16 %v3181
    %v3273 = vunpack.c.h.b16 %v3181
    %v3274 = vunpack.c.l.b16 %v3182
    %v3275 = vunpack.c.h.b16 %v3182
    %v3276 = vunpack.c.l.b16 %v3183
    %v3277 = vunpack.c.h.b16 %v3183
    %v3278 = vunpack.c.l.b16 %v3184
    %v3279 = vunpack.c.h.b16 %v3184
    %v3280 = vunpack.c.l.b16 %v3185
    %v3281 = vunpack.c.h.b16 %v3185
    %v3282 = vunpack.c.l.b16 %v3186
    %v3283 = vunpack.c.h.b16 %v3186
    %v3284 = vunpack.c.l.b16 %v3187
    %v3285 = vunpack.c.h.b16 %v3187
    %v3286 = vunpack.c.l.b16 %v3188
    %v3287 = vunpack.c.h.b16 %v3188
    %v3288 = vunpack.c.l.b16 %v3189
    %v3289 = vunpack.c.h.b16 %v3189
    %v3290 = vunpack.c.l.b16 %v3190
    %v3291 = vunpack.c.h.b16 %v3190
    %v3292 = vunpack.c.l.b16 %v3191
    %v3293 = vunpack.c.h.b16 %v3191
    %v3294 = vunpack.c.l.b16 %v3192
    %v3295 = vunpack.c.h.b16 %v3192
    %v3296 = vunpack.c.l.b16 %v3193
    %v3297 = vunpack.c.h.b16 %v3193
    %v3298 = vunpack.c.l.b16 %v3194
    %v3299 = vunpack.c.h.b16 %v3194
    %v3300 = vunpack.c.l.b16 %v3195
    %v3301 = vunpack.c.h.b16 %v3195
    %v3302 = vunpack.c.l.b16 %v3196
    %v3303 = vunpack.c.h.b16 %v3196
    %v3304 = vunpack.c.l.b16 %v3197
    %v3305 = vunpack.c.h.b16 %v3197
    %v3306 = vunpack.c.l.b16 %v3198
    %v3307 = vunpack.c.h.b16 %v3198
    %v3308 = vunpack.c.l.b16 %v3199
    %v3309 = vunpack.c.h.b16 %v3199
    %v3310 = vunpack.c.l.b16 %v3200
    %v3311 = vunpack.c.h.b16 %v3200
    %v3312 = vunpack.c.l.b16 %v3201
    %v3313 = vunpack.c.h.b16 %v3201
    %v3314 = vunpack.c.l.b16 %v3202
    %v3315 = vunpack.c.h.b16 %v3202
    %v3316 = vunpack.c.l.b16 %v3203
    %v3317 = vunpack.c.h.b16 %v3203
    %v3318 = vunpack.c.l.b16 %v3204
    %v3319 = vunpack.c.h.b16 %v3204
    %v3320 = vunpack.c.l.b16 %v3205
    %v3321 = vunpack.c.h.b16 %v3205
    %v3322 = vunpack.c.l.b16 %v3206
    %v3323 = vunpack.c.h.b16 %v3206
    %v3324 = vunpack.c.l.b16 %v3207
    %v3325 = vunpack.c.h.b16 %v3207
    %v3326 = vpack.c.b16 %v3266, %v3262
    %v3327 = vpack.c.b16 %v3267, %v3263
    %v3328 = vpack.c.b16 %v3268, %v3264
    %v3329 = vpack.c.b16 %v3269, %v3265
    %v3330 = vpack.c.b16 %v3274, %v3270
    %v3331 = vpack.c.b16 %v3275, %v3271
    %v3332 = vpack.c.b16 %v3276, %v3272
    %v3333 = vpack.c.b16 %v3277, %v3273
    %v3334 = vpack.c.b16 %v3282, %v3278
    %v3335 = vpack.c.b16 %v3283, %v3279
    %v3336 = vpack.c.b16 %v3284, %v3280
    %v3337 = vpack.c.b16 %v3285, %v3281
    %v3338 = vpack.c.b16 %v3290, %v3286
    %v3339 = vpack.c.b16 %v3291, %v3287
    %v3340 = vpack.c.b16 %v3292, %v3288
    %v3341 = vpack.c.b16 %v3293, %v3289
    %v3342 = vpack.c.b16 %v3298, %v3294
    %v3343 = vpack.c.b16 %v3299, %v3295
    %v3344 = vpack.c.b16 %v3300, %v3296
    %v3345 = vpack.c.b16 %v3301, %v3297
    %v3346 = vpack.c.b16 %v3306, %v3302
    %v3347 = vpack.c.b16 %v3307, %v3303
    %v3348 = vpack.c.b16 %v3308, %v3304
    %v3349 = vpack.c.b16 %v3309, %v3305
    %v3350 = vpack.c.b16 %v3314, %v3310
    %v3351 = vpack.c.b16 %v3315, %v3311
    %v3352 = vpack.c.b16 %v3316, %v3312
    %v3353 = vpack.c.b16 %v3317, %v3313
    %v3354 = vpack.c.b16 %v3322, %v3318
    %v3355 = vpack.c.b16 %v3323, %v3319
    %v3356 = vpack.c.b16 %v3324, %v3320
    %v3357 = vpack.c.b16 %v3325, %v3321
    %3390 = vmatprep.subr.bf16.mxu0 %v3355
    %3391 = vmatpush1.bf16.msra.mxu0 %v3354
    %3392 = vmatprep.subr.bf16.mxu0 %v3351
    %3393 = vmatpush1.bf16.msra.mxu0 %v3350
    %3394 = vmatprep.subr.bf16.mxu0 %v3347
    %3395 = vmatpush1.bf16.msra.mxu0 %v3346
    %3396 = vmatprep.subr.bf16.mxu0 %v3343
    %3397 = vmatpush1.bf16.msra.mxu0 %v3342
    %3398 = vmatprep.subr.bf16.mxu0 %v3339
    %3399 = vmatpush1.bf16.msra.mxu0 %v3338
    %3400 = vmatprep.subr.bf16.mxu0 %v3335
    %3401 = vmatpush1.bf16.msra.mxu0 %v3334
    %3402 = vmatprep.subr.bf16.mxu0 %v3331
    %3403 = vmatpush1.bf16.msra.mxu0 %v3330
    %3404 = vmatprep.subr.bf16.mxu0 %v3327
    %3405 = vmatpush1.bf16.msra.mxu0 %v3326
    %3406 = vmatprep.subr.bf16.mxu0 0
    %3407 = vmatpush2.bf16.msra.mxu0 0
    %3408 = vmatprep.subr.bf16.mxu0 0
    %3409 = vmatpush2.bf16.msra.mxu0 0
    %3410 = vmatprep.subr.bf16.mxu0 0
    %3411 = vmatpush2.bf16.msra.mxu0 0
    %3412 = vmatprep.subr.bf16.mxu0 0
    %3413 = vmatpush2.bf16.msra.mxu0 0
    %3414 = vmatprep.subr.bf16.mxu0 0
    %3415 = vmatpush2.bf16.msra.mxu0 0
    %3416 = vmatprep.subr.bf16.mxu0 0
    %3417 = vmatpush2.bf16.msra.mxu0 0
    %3418 = vmatprep.subr.bf16.mxu0 0
    %3419 = vmatpush2.bf16.msra.mxu0 0
    %3420 = vmatprep.subr.bf16.mxu0 0
    %3421 = vmatpush2.bf16.msra.mxu0 0
    %3422 = vmatprep.mubr.bf16.mxu0 0
    %3423 = vmatmul.mubr.bf16.gmra.mxu0 %v3175
    %v3424 = vpop.f32.mrf.mxu0
    %v3425 = vadd.f32 %v3213, %v3424
    %v3426 = vpop.f32.mrf.mxu0
    %v3427 = vadd.f32 %v3217, %v3426
    %v3428 = vpop.f32.mrf.mxu0
    %v3429 = vpop.f32.mrf.mxu0
    %3430 = vdwg.mxu0
    %3431 = vmatprep.subr.bf16.mxu0 %v3357
    %3432 = vmatpush1.bf16.msra.mxu0 %v3356
    %3433 = vmatprep.subr.bf16.mxu0 %v3353
    %3434 = vmatpush1.bf16.msra.mxu0 %v3352
    %3435 = vmatprep.subr.bf16.mxu0 %v3349
    %3436 = vmatpush1.bf16.msra.mxu0 %v3348
    %3437 = vmatprep.subr.bf16.mxu0 %v3345
    %3438 = vmatpush1.bf16.msra.mxu0 %v3344
    %3439 = vmatprep.subr.bf16.mxu0 %v3341
    %3440 = vmatpush1.bf16.msra.mxu0 %v3340
    %3441 = vmatprep.subr.bf16.mxu0 %v3337
    %3442 = vmatpush1.bf16.msra.mxu0 %v3336
    %3443 = vmatprep.subr.bf16.mxu0 %v3333
    %3444 = vmatpush1.bf16.msra.mxu0 %v3332
    %3445 = vmatprep.subr.bf16.mxu0 %v3329
    %3446 = vmatpush1.bf16.msra.mxu0 %v3328
    %3447 = vmatprep.subr.bf16.mxu0 0
    %3448 = vmatpush2.bf16.msra.mxu0 0
    %3449 = vmatprep.subr.bf16.mxu0 0
    %3450 = vmatpush2.bf16.msra.mxu0 0
    %3451 = vmatprep.subr.bf16.mxu0 0
    %3452 = vmatpush2.bf16.msra.mxu0 0
    %3453 = vmatprep.subr.bf16.mxu0 0
    %3454 = vmatpush2.bf16.msra.mxu0 0
    %3455 = vmatprep.subr.bf16.mxu0 0
    %3456 = vmatpush2.bf16.msra.mxu0 0
    %3457 = vmatprep.subr.bf16.mxu0 0
    %3458 = vmatpush2.bf16.msra.mxu0 0
    %3459 = vmatprep.subr.bf16.mxu0 0
    %3460 = vmatpush2.bf16.msra.mxu0 0
    %3461 = vmatprep.subr.bf16.mxu0 0
    %3462 = vmatpush2.bf16.msra.mxu0 0
    %3463 = vmatprep.mubr.bf16.mxu0 0
    %3464 = vmatmul.mubr.bf16.gmra.mxu0 %v3175
    %v3465 = vpop.f32.mrf.mxu0
    %v3466 = vadd.f32 %v3221, %v3465
    %v3467 = vpop.f32.mrf.mxu0
    %v3468 = vadd.f32 %v3225, %v3467
    %v3469 = vpop.f32.mrf.mxu0
    %v3470 = vpop.f32.mrf.mxu0
    %3471 = vdwg.mxu0
    %v3472 = vmul.f32 %v3425, 0.5
    %v3473 = vtanh.pop %v3472
    %v3474 = vadd.f32 %v3473, 1.0
    %v3475 = vmul.f32 %v3474, 0.5
    %v3476 = vmul.f32 %v3427, 0.5
    %v3477 = vtanh.pop %v3476
    %v3478 = vadd.f32 %v3477, 1.0
    %v3479 = vmul.f32 %v3478, 0.5
    %v3480 = vtanh.pop %v3466
    %v3481 = vmul.f32 %v3468, 0.5
    %v3482 = vtanh.pop %v3481
    %v3483 = vadd.f32 %v3482, 1.0
    %v3484 = vmul.f32 %v3483, 0.5
    %v3485 = vmul.f32 %v3479, %v2960
    %v3486 = vmul.f32 %v3475, %v3480
    %v3487 = vadd.f32 %v3485, %v3486
    %v3488 = vtanh.pop %v3487
    %v3489 = vmul.f32 %v3484, %v3488
    %3490 = vst [vmem:[#allocation3 + $0x28] sm:$0xff] %v3489
    %v3491 = vld [vmem:[#allocation2 + $0xc0] sm:$0xff]
    %v3492 = vld [vmem:[#allocation2 + $0xc8] sm:$0xff]
    %v3493 = vld [vmem:[#allocation2 + $0xd0] sm:$0xff]
    %v3494 = vld [vmem:[#allocation2 + $0xd8] sm:$0xff]
    %v3495 = vpack.c.bf16 %v3171, %v3171
    %v3496 = vld [vmem:[%s3] sm:$0xff]
    %v3497 = vld [vmem:[%s3 + $0x8] sm:$0xff]
    %v3498 = vld [vmem:[%s3 + $0x10] sm:$0xff]
    %v3499 = vld [vmem:[%s3 + $0x18] sm:$0xff]
    %v3500 = vld [vmem:[%s3 + $0x20] sm:$0xff]
    %v3501 = vld [vmem:[%s3 + $0x28] sm:$0xff]
    %v3502 = vld [vmem:[%s3 + $0x30] sm:$0xff]
    %v3503 = vld [vmem:[%s3 + $0x38] sm:$0xff]
    %v3504 = vld [vmem:[%s3 + $0x40] sm:$0xff]
    %v3505 = vld [vmem:[%s3 + $0x48] sm:$0xff]
    %v3506 = vld [vmem:[%s3 + $0x50] sm:$0xff]
    %v3507 = vld [vmem:[%s3 + $0x58] sm:$0xff]
    %v3508 = vld [vmem:[%s3 + $0x60] sm:$0xff]
    %v3509 = vld [vmem:[%s3 + $0x68] sm:$0xff]
    %v3510 = vld [vmem:[%s3 + $0x70] sm:$0xff]
    %v3511 = vld [vmem:[%s3 + $0x78] sm:$0xff]
    %v3528 = vunpack.c.l.b16 %v3496
    %v3529 = vunpack.c.h.b16 %v3496
    %v3530 = vunpack.c.l.b16 %v3497
    %v3531 = vunpack.c.h.b16 %v3497
    %v3532 = vunpack.c.l.b16 %v3498
    %v3533 = vunpack.c.h.b16 %v3498
    %v3534 = vunpack.c.l.b16 %v3499
    %v3535 = vunpack.c.h.b16 %v3499
    %v3536 = vunpack.c.l.b16 %v3500
    %v3537 = vunpack.c.h.b16 %v3500
    %v3538 = vunpack.c.l.b16 %v3501
    %v3539 = vunpack.c.h.b16 %v3501
    %v3540 = vunpack.c.l.b16 %v3502
    %v3541 = vunpack.c.h.b16 %v3502
    %v3542 = vunpack.c.l.b16 %v3503
    %v3543 = vunpack.c.h.b16 %v3503
    %v3544 = vunpack.c.l.b16 %v3504
    %v3545 = vunpack.c.h.b16 %v3504
    %v3546 = vunpack.c.l.b16 %v3505
    %v3547 = vunpack.c.h.b16 %v3505
    %v3548 = vunpack.c.l.b16 %v3506
    %v3549 = vunpack.c.h.b16 %v3506
    %v3550 = vunpack.c.l.b16 %v3507
    %v3551 = vunpack.c.h.b16 %v3507
    %v3552 = vunpack.c.l.b16 %v3508
    %v3553 = vunpack.c.h.b16 %v3508
    %v3554 = vunpack.c.l.b16 %v3509
    %v3555 = vunpack.c.h.b16 %v3509
    %v3556 = vunpack.c.l.b16 %v3510
    %v3557 = vunpack.c.h.b16 %v3510
    %v3558 = vunpack.c.l.b16 %v3511
    %v3559 = vunpack.c.h.b16 %v3511
    %v3560 = vpack.c.b16 %v3532, %v3528
    %v3561 = vpack.c.b16 %v3533, %v3529
    %v3562 = vpack.c.b16 %v3534, %v3530
    %v3563 = vpack.c.b16 %v3535, %v3531
    %v3564 = vpack.c.b16 %v3540, %v3536
    %v3565 = vpack.c.b16 %v3541, %v3537
    %v3566 = vpack.c.b16 %v3542, %v3538
    %v3567 = vpack.c.b16 %v3543, %v3539
    %v3568 = vpack.c.b16 %v3548, %v3544
    %v3569 = vpack.c.b16 %v3549, %v3545
    %v3570 = vpack.c.b16 %v3550, %v3546
    %v3571 = vpack.c.b16 %v3551, %v3547
    %v3572 = vpack.c.b16 %v3556, %v3552
    %v3573 = vpack.c.b16 %v3557, %v3553
    %v3574 = vpack.c.b16 %v3558, %v3554
    %v3575 = vpack.c.b16 %v3559, %v3555
    %v3593 = vsel %vm429, %v3495, 0
    %3595 = vmatprep.subr.bf16.mxu0 0
    %3596 = vmatpush1.bf16.msra.mxu0 0
    %3597 = vmatprep.subr.bf16.mxu0 0
    %3598 = vmatpush1.bf16.msra.mxu0 0
    %3599 = vmatprep.subr.bf16.mxu0 0
    %3600 = vmatpush1.bf16.msra.mxu0 0
    %3601 = vmatprep.subr.bf16.mxu0 0
    %3602 = vmatpush1.bf16.msra.mxu0 0
    %3603 = vmatprep.subr.bf16.mxu0 %v3573
    %3604 = vmatpush1.bf16.msra.mxu0 %v3572
    %3605 = vmatprep.subr.bf16.mxu0 %v3569
    %3606 = vmatpush1.bf16.msra.mxu0 %v3568
    %3607 = vmatprep.subr.bf16.mxu0 %v3565
    %3608 = vmatpush1.bf16.msra.mxu0 %v3564
    %3609 = vmatprep.subr.bf16.mxu0 %v3561
    %3610 = vmatpush1.bf16.msra.mxu0 %v3560
    %3611 = vmatprep.subr.bf16.mxu0 0
    %3612 = vmatpush2.bf16.msra.mxu0 0
    %3613 = vmatprep.subr.bf16.mxu0 0
    %3614 = vmatpush2.bf16.msra.mxu0 0
    %3615 = vmatprep.subr.bf16.mxu0 0
    %3616 = vmatpush2.bf16.msra.mxu0 0
    %3617 = vmatprep.subr.bf16.mxu0 0
    %3618 = vmatpush2.bf16.msra.mxu0 0
    %3619 = vmatprep.subr.bf16.mxu0 0
    %3620 = vmatpush2.bf16.msra.mxu0 0
    %3621 = vmatprep.subr.bf16.mxu0 0
    %3622 = vmatpush2.bf16.msra.mxu0 0
    %3623 = vmatprep.subr.bf16.mxu0 0
    %3624 = vmatpush2.bf16.msra.mxu0 0
    %3625 = vmatprep.subr.bf16.mxu0 0
    %3626 = vmatpush2.bf16.msra.mxu0 0
    %3627 = vmatprep.mubr.bf16.mxu0 0
    %3628 = vmatmul.mubr.bf16.gmra.mxu0 %v3593
    %v3629 = vpop.f32.mrf.mxu0
    %v3630 = vadd.f32 0.0, %v3629
    %v3631 = vpop.f32.mrf.mxu0
    %v3632 = vadd.f32 0.0, %v3631
    %v3633 = vpop.f32.mrf.mxu0
    %v3634 = vpop.f32.mrf.mxu0
    %3635 = vdwg.mxu0
    %3636 = vmatprep.subr.bf16.mxu0 0
    %3637 = vmatpush1.bf16.msra.mxu0 0
    %3638 = vmatprep.subr.bf16.mxu0 0
    %3639 = vmatpush1.bf16.msra.mxu0 0
    %3640 = vmatprep.subr.bf16.mxu0 0
    %3641 = vmatpush1.bf16.msra.mxu0 0
    %3642 = vmatprep.subr.bf16.mxu0 0
    %3643 = vmatpush1.bf16.msra.mxu0 0
    %3644 = vmatprep.subr.bf16.mxu0 %v3575
    %3645 = vmatpush1.bf16.msra.mxu0 %v3574
    %3646 = vmatprep.subr.bf16.mxu0 %v3571
    %3647 = vmatpush1.bf16.msra.mxu0 %v3570
    %3648 = vmatprep.subr.bf16.mxu0 %v3567
    %3649 = vmatpush1.bf16.msra.mxu0 %v3566
    %3650 = vmatprep.subr.bf16.mxu0 %v3563
    %3651 = vmatpush1.bf16.msra.mxu0 %v3562
    %3652 = vmatprep.subr.bf16.mxu0 0
    %3653 = vmatpush2.bf16.msra.mxu0 0
    %3654 = vmatprep.subr.bf16.mxu0 0
    %3655 = vmatpush2.bf16.msra.mxu0 0
    %3656 = vmatprep.subr.bf16.mxu0 0
    %3657 = vmatpush2.bf16.msra.mxu0 0
    %3658 = vmatprep.subr.bf16.mxu0 0
    %3659 = vmatpush2.bf16.msra.mxu0 0
    %3660 = vmatprep.subr.bf16.mxu0 0
    %3661 = vmatpush2.bf16.msra.mxu0 0
    %3662 = vmatprep.subr.bf16.mxu0 0
    %3663 = vmatpush2.bf16.msra.mxu0 0
    %3664 = vmatprep.subr.bf16.mxu0 0
    %3665 = vmatpush2.bf16.msra.mxu0 0
    %3666 = vmatprep.subr.bf16.mxu0 0
    %3667 = vmatpush2.bf16.msra.mxu0 0
    %3668 = vmatprep.mubr.bf16.mxu0 0
    %3669 = vmatmul.mubr.bf16.gmra.mxu0 %v3593
    %v3670 = vpop.f32.mrf.mxu0
    %v3671 = vadd.f32 0.0, %v3670
    %v3672 = vpop.f32.mrf.mxu0
    %v3673 = vadd.f32 0.0, %v3672
    %v3674 = vpop.f32.mrf.mxu0
    %v3675 = vpop.f32.mrf.mxu0
    %3676 = vdwg.mxu0
    %v3677 = vadd.f32 %v3491, %v3630
    %v3678 = vadd.f32 %v3492, %v3632
    %v3679 = vadd.f32 %v3493, %v3671
    %v3680 = vadd.f32 %v3494, %v3673
    %v3681 = vmul.f32 %v3677, 0.5
    %v3682 = vtanh.pop %v3681
    %v3683 = vadd.f32 %v3682, 1.0
    %v3684 = vmul.f32 %v3683, 0.5
    %v3685 = vmul.f32 %v3678, 0.5
    %v3686 = vtanh.pop %v3685
    %v3687 = vadd.f32 %v3686, 1.0
    %v3688 = vmul.f32 %v3687, 0.5
    %v3689 = vtanh.pop %v3679
    %v3690 = vmul.f32 %v3680, 0.5
    %v3691 = vtanh.pop %v3690
    %v3692 = vadd.f32 %v3691, 1.0
    %v3693 = vmul.f32 %v3692, 0.5
    %v3694 = vmul.f32 %v3688, %v3169
    %v3695 = vmul.f32 %v3684, %v3689
    %v3696 = vadd.f32 %v3694, %v3695
    %v3697 = vtanh.pop %v3696
    %v3698 = vmul.f32 %v3693, %v3697
    %3699 = vrot.lane.b32.xlu0 %v3489, 64
    %v3700 = vpop.permute.xlu0 %3699
    %v3701 = vsel %vm328, %v3698, %v3700
    %v3702 = vpack.c.bf16 %v3701, %v3701
    %v3703 = vld [vmem:[%s4] sm:$0xff]
    %v3704 = vld [vmem:[%s4 + $0x8] sm:$0xff]
    %v3705 = vld [vmem:[%s4 + $0x10] sm:$0xff]
    %v3706 = vld [vmem:[%s4 + $0x18] sm:$0xff]
    %v3707 = vld [vmem:[%s4 + $0x20] sm:$0xff]
    %v3708 = vld [vmem:[%s4 + $0x28] sm:$0xff]
    %v3709 = vld [vmem:[%s4 + $0x30] sm:$0xff]
    %v3710 = vld [vmem:[%s4 + $0x38] sm:$0xff]
    %v3711 = vld [vmem:[%s4 + $0x40] sm:$0xff]
    %v3712 = vld [vmem:[%s4 + $0x48] sm:$0xff]
    %v3713 = vld [vmem:[%s4 + $0x50] sm:$0xff]
    %v3714 = vld [vmem:[%s4 + $0x58] sm:$0xff]
    %v3715 = vld [vmem:[%s4 + $0x60] sm:$0xff]
    %v3716 = vld [vmem:[%s4 + $0x68] sm:$0xff]
    %v3717 = vld [vmem:[%s4 + $0x70] sm:$0xff]
    %v3718 = vld [vmem:[%s4 + $0x78] sm:$0xff]
    %v3719 = vld [vmem:[%s4 + $0x80] sm:$0xff]
    %v3720 = vld [vmem:[%s4 + $0x88] sm:$0xff]
    %v3721 = vld [vmem:[%s4 + $0x90] sm:$0xff]
    %v3722 = vld [vmem:[%s4 + $0x98] sm:$0xff]
    %v3723 = vld [vmem:[%s4 + $0xa0] sm:$0xff]
    %v3724 = vld [vmem:[%s4 + $0xa8] sm:$0xff]
    %v3725 = vld [vmem:[%s4 + $0xb0] sm:$0xff]
    %v3726 = vld [vmem:[%s4 + $0xb8] sm:$0xff]
    %v3727 = vld [vmem:[%s4 + $0xc0] sm:$0xff]
    %v3728 = vld [vmem:[%s4 + $0xc8] sm:$0xff]
    %v3729 = vld [vmem:[%s4 + $0xd0] sm:$0xff]
    %v3730 = vld [vmem:[%s4 + $0xd8] sm:$0xff]
    %v3731 = vld [vmem:[%s4 + $0xe0] sm:$0xff]
    %v3732 = vld [vmem:[%s4 + $0xe8] sm:$0xff]
    %v3733 = vld [vmem:[%s4 + $0xf0] sm:$0xff]
    %v3734 = vld [vmem:[%s4 + $0xf8] sm:$0xff]
    %v3735 = vld [vmem:[%s5] sm:$0xf]
    %v3737 = vlaneseq
    %v3738 = vshrl.u32 %v3737, 7
    %v3739 = vsub.s32 0, %v3738
    %v3740 = vrot.slane %v3735, %v3739
    %v3741 = vlaneseq
    %v3742 = vshrl.u32 %v3741, 7
    %v3743 = vsub.s32 1, %v3742
    %v3744 = vrot.slane %v3735, %v3743
    %v3745 = vlaneseq
    %v3746 = vshrl.u32 %v3745, 7
    %v3747 = vsub.s32 2, %v3746
    %v3748 = vrot.slane %v3735, %v3747
    %v3749 = vlaneseq
    %v3750 = vshrl.u32 %v3749, 7
    %v3751 = vsub.s32 3, %v3750
    %v3752 = vrot.slane %v3735, %v3751
    %v3789 = vunpack.c.l.b16 %v3703
    %v3790 = vunpack.c.h.b16 %v3703
    %v3791 = vunpack.c.l.b16 %v3704
    %v3792 = vunpack.c.h.b16 %v3704
    %v3793 = vunpack.c.l.b16 %v3705
    %v3794 = vunpack.c.h.b16 %v3705
    %v3795 = vunpack.c.l.b16 %v3706
    %v3796 = vunpack.c.h.b16 %v3706
    %v3797 = vunpack.c.l.b16 %v3707
    %v3798 = vunpack.c.h.b16 %v3707
    %v3799 = vunpack.c.l.b16 %v3708
    %v3800 = vunpack.c.h.b16 %v3708
    %v3801 = vunpack.c.l.b16 %v3709
    %v3802 = vunpack.c.h.b16 %v3709
    %v3803 = vunpack.c.l.b16 %v3710
    %v3804 = vunpack.c.h.b16 %v3710
    %v3805 = vunpack.c.l.b16 %v3711
    %v3806 = vunpack.c.h.b16 %v3711
    %v3807 = vunpack.c.l.b16 %v3712
    %v3808 = vunpack.c.h.b16 %v3712
    %v3809 = vunpack.c.l.b16 %v3713
    %v3810 = vunpack.c.h.b16 %v3713
    %v3811 = vunpack.c.l.b16 %v3714
    %v3812 = vunpack.c.h.b16 %v3714
    %v3813 = vunpack.c.l.b16 %v3715
    %v3814 = vunpack.c.h.b16 %v3715
    %v3815 = vunpack.c.l.b16 %v3716
    %v3816 = vunpack.c.h.b16 %v3716
    %v3817 = vunpack.c.l.b16 %v3717
    %v3818 = vunpack.c.h.b16 %v3717
    %v3819 = vunpack.c.l.b16 %v3718
    %v3820 = vunpack.c.h.b16 %v3718
    %v3821 = vunpack.c.l.b16 %v3719
    %v3822 = vunpack.c.h.b16 %v3719
    %v3823 = vunpack.c.l.b16 %v3720
    %v3824 = vunpack.c.h.b16 %v3720
    %v3825 = vunpack.c.l.b16 %v3721
    %v3826 = vunpack.c.h.b16 %v3721
    %v3827 = vunpack.c.l.b16 %v3722
    %v3828 = vunpack.c.h.b16 %v3722
    %v3829 = vunpack.c.l.b16 %v3723
    %v3830 = vunpack.c.h.b16 %v3723
    %v3831 = vunpack.c.l.b16 %v3724
    %v3832 = vunpack.c.h.b16 %v3724
    %v3833 = vunpack.c.l.b16 %v3725
    %v3834 = vunpack.c.h.b16 %v3725
    %v3835 = vunpack.c.l.b16 %v3726
    %v3836 = vunpack.c.h.b16 %v3726
    %v3837 = vunpack.c.l.b16 %v3727
    %v3838 = vunpack.c.h.b16 %v3727
    %v3839 = vunpack.c.l.b16 %v3728
    %v3840 = vunpack.c.h.b16 %v3728
    %v3841 = vunpack.c.l.b16 %v3729
    %v3842 = vunpack.c.h.b16 %v3729
    %v3843 = vunpack.c.l.b16 %v3730
    %v3844 = vunpack.c.h.b16 %v3730
    %v3845 = vunpack.c.l.b16 %v3731
    %v3846 = vunpack.c.h.b16 %v3731
    %v3847 = vunpack.c.l.b16 %v3732
    %v3848 = vunpack.c.h.b16 %v3732
    %v3849 = vunpack.c.l.b16 %v3733
    %v3850 = vunpack.c.h.b16 %v3733
    %v3851 = vunpack.c.l.b16 %v3734
    %v3852 = vunpack.c.h.b16 %v3734
    %v3853 = vpack.c.b16 %v3793, %v3789
    %v3854 = vpack.c.b16 %v3794, %v3790
    %v3855 = vpack.c.b16 %v3795, %v3791
    %v3856 = vpack.c.b16 %v3796, %v3792
    %v3857 = vpack.c.b16 %v3801, %v3797
    %v3858 = vpack.c.b16 %v3802, %v3798
    %v3859 = vpack.c.b16 %v3803, %v3799
    %v3860 = vpack.c.b16 %v3804, %v3800
    %v3861 = vpack.c.b16 %v3809, %v3805
    %v3862 = vpack.c.b16 %v3810, %v3806
    %v3863 = vpack.c.b16 %v3811, %v3807
    %v3864 = vpack.c.b16 %v3812, %v3808
    %v3865 = vpack.c.b16 %v3817, %v3813
    %v3866 = vpack.c.b16 %v3818, %v3814
    %v3867 = vpack.c.b16 %v3819, %v3815
    %v3868 = vpack.c.b16 %v3820, %v3816
    %v3869 = vpack.c.b16 %v3825, %v3821
    %v3870 = vpack.c.b16 %v3826, %v3822
    %v3871 = vpack.c.b16 %v3827, %v3823
    %v3872 = vpack.c.b16 %v3828, %v3824
    %v3873 = vpack.c.b16 %v3833, %v3829
    %v3874 = vpack.c.b16 %v3834, %v3830
    %v3875 = vpack.c.b16 %v3835, %v3831
    %v3876 = vpack.c.b16 %v3836, %v3832
    %v3877 = vpack.c.b16 %v3841, %v3837
    %v3878 = vpack.c.b16 %v3842, %v3838
    %v3879 = vpack.c.b16 %v3843, %v3839
    %v3880 = vpack.c.b16 %v3844, %v3840
    %v3881 = vpack.c.b16 %v3849, %v3845
    %v3882 = vpack.c.b16 %v3850, %v3846
    %v3883 = vpack.c.b16 %v3851, %v3847
    %v3884 = vpack.c.b16 %v3852, %v3848
    %3917 = vmatprep.subr.bf16.mxu0 %v3882
    %3918 = vmatpush1.bf16.msra.mxu0 %v3881
    %3919 = vmatprep.subr.bf16.mxu0 %v3878
    %3920 = vmatpush1.bf16.msra.mxu0 %v3877
    %3921 = vmatprep.subr.bf16.mxu0 %v3874
    %3922 = vmatpush1.bf16.msra.mxu0 %v3873
    %3923 = vmatprep.subr.bf16.mxu0 %v3870
    %3924 = vmatpush1.bf16.msra.mxu0 %v3869
    %3925 = vmatprep.subr.bf16.mxu0 %v3866
    %3926 = vmatpush1.bf16.msra.mxu0 %v3865
    %3927 = vmatprep.subr.bf16.mxu0 %v3862
    %3928 = vmatpush1.bf16.msra.mxu0 %v3861
    %3929 = vmatprep.subr.bf16.mxu0 %v3858
    %3930 = vmatpush1.bf16.msra.mxu0 %v3857
    %3931 = vmatprep.subr.bf16.mxu0 %v3854
    %3932 = vmatpush1.bf16.msra.mxu0 %v3853
    %3933 = vmatprep.subr.bf16.mxu0 0
    %3934 = vmatpush2.bf16.msra.mxu0 0
    %3935 = vmatprep.subr.bf16.mxu0 0
    %3936 = vmatpush2.bf16.msra.mxu0 0
    %3937 = vmatprep.subr.bf16.mxu0 0
    %3938 = vmatpush2.bf16.msra.mxu0 0
    %3939 = vmatprep.subr.bf16.mxu0 0
    %3940 = vmatpush2.bf16.msra.mxu0 0
    %3941 = vmatprep.subr.bf16.mxu0 0
    %3942 = vmatpush2.bf16.msra.mxu0 0
    %3943 = vmatprep.subr.bf16.mxu0 0
    %3944 = vmatpush2.bf16.msra.mxu0 0
    %3945 = vmatprep.subr.bf16.mxu0 0
    %3946 = vmatpush2.bf16.msra.mxu0 0
    %3947 = vmatprep.subr.bf16.mxu0 0
    %3948 = vmatpush2.bf16.msra.mxu0 0
    %3949 = vmatprep.mubr.bf16.mxu0 0
    %3950 = vmatmul.mubr.bf16.gmra.mxu0 %v3702
    %v3951 = vpop.f32.mrf.mxu0
    %v3952 = vadd.f32 %v3740, %v3951
    %v3953 = vpop.f32.mrf.mxu0
    %v3954 = vadd.f32 %v3744, %v3953
    %v3955 = vpop.f32.mrf.mxu0
    %v3956 = vpop.f32.mrf.mxu0
    %3957 = vdwg.mxu0
    %3958 = vmatprep.subr.bf16.mxu0 %v3884
    %3959 = vmatpush1.bf16.msra.mxu0 %v3883
    %3960 = vmatprep.subr.bf16.mxu0 %v3880
    %3961 = vmatpush1.bf16.msra.mxu0 %v3879
    %3962 = vmatprep.subr.bf16.mxu0 %v3876
    %3963 = vmatpush1.bf16.msra.mxu0 %v3875
    %3964 = vmatprep.subr.bf16.mxu0 %v3872
    %3965 = vmatpush1.bf16.msra.mxu0 %v3871
    %3966 = vmatprep.subr.bf16.mxu0 %v3868
    %3967 = vmatpush1.bf16.msra.mxu0 %v3867
    %3968 = vmatprep.subr.bf16.mxu0 %v3864
    %3969 = vmatpush1.bf16.msra.mxu0 %v3863
    %3970 = vmatprep.subr.bf16.mxu0 %v3860
    %3971 = vmatpush1.bf16.msra.mxu0 %v3859
    %3972 = vmatprep.subr.bf16.mxu0 %v3856
    %3973 = vmatpush1.bf16.msra.mxu0 %v3855
    %3974 = vmatprep.subr.bf16.mxu0 0
    %3975 = vmatpush2.bf16.msra.mxu0 0
    %3976 = vmatprep.subr.bf16.mxu0 0
    %3977 = vmatpush2.bf16.msra.mxu0 0
    %3978 = vmatprep.subr.bf16.mxu0 0
    %3979 = vmatpush2.bf16.msra.mxu0 0
    %3980 = vmatprep.subr.bf16.mxu0 0
    %3981 = vmatpush2.bf16.msra.mxu0 0
    %3982 = vmatprep.subr.bf16.mxu0 0
    %3983 = vmatpush2.bf16.msra.mxu0 0
    %3984 = vmatprep.subr.bf16.mxu0 0
    %3985 = vmatpush2.bf16.msra.mxu0 0
    %3986 = vmatprep.subr.bf16.mxu0 0
    %3987 = vmatpush2.bf16.msra.mxu0 0
    %3988 = vmatprep.subr.bf16.mxu0 0
    %3989 = vmatpush2.bf16.msra.mxu0 0
    %3990 = vmatprep.mubr.bf16.mxu0 0
    %3991 = vmatmul.mubr.bf16.gmra.mxu0 %v3702
    %v3992 = vpop.f32.mrf.mxu0
    %v3993 = vadd.f32 %v3748, %v3992
    %v3994 = vpop.f32.mrf.mxu0
    %v3995 = vadd.f32 %v3752, %v3994
    %v3996 = vpop.f32.mrf.mxu0
    %v3997 = vpop.f32.mrf.mxu0
    %3998 = vdwg.mxu0
    %v3999 = vmul.f32 %v3952, 0.5
    %v4000 = vtanh.pop %v3999
    %v4001 = vadd.f32 %v4000, 1.0
    %v4002 = vmul.f32 %v4001, 0.5
    %v4003 = vmul.f32 %v3954, 0.5
    %v4004 = vtanh.pop %v4003
    %v4005 = vadd.f32 %v4004, 1.0
    %v4006 = vmul.f32 %v4005, 0.5
    %v4007 = vtanh.pop %v3993
    %v4008 = vmul.f32 %v3995, 0.5
    %v4009 = vtanh.pop %v4008
    %v4010 = vadd.f32 %v4009, 1.0
    %v4011 = vmul.f32 %v4010, 0.5
    %v4012 = vmul.f32 %v4006, %v3487
    %v4013 = vmul.f32 %v4002, %v4007
    %v4014 = vadd.f32 %v4012, %v4013
    %v4015 = vtanh.pop %v4014
    %v4016 = vmul.f32 %v4011, %v4015
    %4017 = vst [vmem:[#allocation3 + $0x30] sm:$0xff] %v4016
    %v4018 = vld [vmem:[#allocation2 + $0xe0] sm:$0xff]
    %v4019 = vld [vmem:[#allocation2 + $0xe8] sm:$0xff]
    %v4020 = vld [vmem:[#allocation2 + $0xf0] sm:$0xff]
    %v4021 = vld [vmem:[#allocation2 + $0xf8] sm:$0xff]
    %v4022 = vpack.c.bf16 %v3698, %v3698
    %v4023 = vld [vmem:[%s3] sm:$0xff]
    %v4024 = vld [vmem:[%s3 + $0x8] sm:$0xff]
    %v4025 = vld [vmem:[%s3 + $0x10] sm:$0xff]
    %v4026 = vld [vmem:[%s3 + $0x18] sm:$0xff]
    %v4027 = vld [vmem:[%s3 + $0x20] sm:$0xff]
    %v4028 = vld [vmem:[%s3 + $0x28] sm:$0xff]
    %v4029 = vld [vmem:[%s3 + $0x30] sm:$0xff]
    %v4030 = vld [vmem:[%s3 + $0x38] sm:$0xff]
    %v4031 = vld [vmem:[%s3 + $0x40] sm:$0xff]
    %v4032 = vld [vmem:[%s3 + $0x48] sm:$0xff]
    %v4033 = vld [vmem:[%s3 + $0x50] sm:$0xff]
    %v4034 = vld [vmem:[%s3 + $0x58] sm:$0xff]
    %v4035 = vld [vmem:[%s3 + $0x60] sm:$0xff]
    %v4036 = vld [vmem:[%s3 + $0x68] sm:$0xff]
    %v4037 = vld [vmem:[%s3 + $0x70] sm:$0xff]
    %v4038 = vld [vmem:[%s3 + $0x78] sm:$0xff]
    %v4055 = vunpack.c.l.b16 %v4023
    %v4056 = vunpack.c.h.b16 %v4023
    %v4057 = vunpack.c.l.b16 %v4024
    %v4058 = vunpack.c.h.b16 %v4024
    %v4059 = vunpack.c.l.b16 %v4025
    %v4060 = vunpack.c.h.b16 %v4025
    %v4061 = vunpack.c.l.b16 %v4026
    %v4062 = vunpack.c.h.b16 %v4026
    %v4063 = vunpack.c.l.b16 %v4027
    %v4064 = vunpack.c.h.b16 %v4027
    %v4065 = vunpack.c.l.b16 %v4028
    %v4066 = vunpack.c.h.b16 %v4028
    %v4067 = vunpack.c.l.b16 %v4029
    %v4068 = vunpack.c.h.b16 %v4029
    %v4069 = vunpack.c.l.b16 %v4030
    %v4070 = vunpack.c.h.b16 %v4030
    %v4071 = vunpack.c.l.b16 %v4031
    %v4072 = vunpack.c.h.b16 %v4031
    %v4073 = vunpack.c.l.b16 %v4032
    %v4074 = vunpack.c.h.b16 %v4032
    %v4075 = vunpack.c.l.b16 %v4033
    %v4076 = vunpack.c.h.b16 %v4033
    %v4077 = vunpack.c.l.b16 %v4034
    %v4078 = vunpack.c.h.b16 %v4034
    %v4079 = vunpack.c.l.b16 %v4035
    %v4080 = vunpack.c.h.b16 %v4035
    %v4081 = vunpack.c.l.b16 %v4036
    %v4082 = vunpack.c.h.b16 %v4036
    %v4083 = vunpack.c.l.b16 %v4037
    %v4084 = vunpack.c.h.b16 %v4037
    %v4085 = vunpack.c.l.b16 %v4038
    %v4086 = vunpack.c.h.b16 %v4038
    %v4087 = vpack.c.b16 %v4059, %v4055
    %v4088 = vpack.c.b16 %v4060, %v4056
    %v4089 = vpack.c.b16 %v4061, %v4057
    %v4090 = vpack.c.b16 %v4062, %v4058
    %v4091 = vpack.c.b16 %v4067, %v4063
    %v4092 = vpack.c.b16 %v4068, %v4064
    %v4093 = vpack.c.b16 %v4069, %v4065
    %v4094 = vpack.c.b16 %v4070, %v4066
    %v4095 = vpack.c.b16 %v4075, %v4071
    %v4096 = vpack.c.b16 %v4076, %v4072
    %v4097 = vpack.c.b16 %v4077, %v4073
    %v4098 = vpack.c.b16 %v4078, %v4074
    %v4099 = vpack.c.b16 %v4083, %v4079
    %v4100 = vpack.c.b16 %v4084, %v4080
    %v4101 = vpack.c.b16 %v4085, %v4081
    %v4102 = vpack.c.b16 %v4086, %v4082
    %v4120 = vsel %vm429, %v4022, 0
    %4122 = vmatprep.subr.bf16.mxu0 0
    %4123 = vmatpush1.bf16.msra.mxu0 0
    %4124 = vmatprep.subr.bf16.mxu0 0
    %4125 = vmatpush1.bf16.msra.mxu0 0
    %4126 = vmatprep.subr.bf16.mxu0 0
    %4127 = vmatpush1.bf16.msra.mxu0 0
    %4128 = vmatprep.subr.bf16.mxu0 0
    %4129 = vmatpush1.bf16.msra.mxu0 0
    %4130 = vmatprep.subr.bf16.mxu0 %v4100
    %4131 = vmatpush1.bf16.msra.mxu0 %v4099
    %4132 = vmatprep.subr.bf16.mxu0 %v4096
    %4133 = vmatpush1.bf16.msra.mxu0 %v4095
    %4134 = vmatprep.subr.bf16.mxu0 %v4092
    %4135 = vmatpush1.bf16.msra.mxu0 %v4091
    %4136 = vmatprep.subr.bf16.mxu0 %v4088
    %4137 = vmatpush1.bf16.msra.mxu0 %v4087
    %4138 = vmatprep.subr.bf16.mxu0 0
    %4139 = vmatpush2.bf16.msra.mxu0 0
    %4140 = vmatprep.subr.bf16.mxu0 0
    %4141 = vmatpush2.bf16.msra.mxu0 0
    %4142 = vmatprep.subr.bf16.mxu0 0
    %4143 = vmatpush2.bf16.msra.mxu0 0
    %4144 = vmatprep.subr.bf16.mxu0 0
    %4145 = vmatpush2.bf16.msra.mxu0 0
    %4146 = vmatprep.subr.bf16.mxu0 0
    %4147 = vmatpush2.bf16.msra.mxu0 0
    %4148 = vmatprep.subr.bf16.mxu0 0
    %4149 = vmatpush2.bf16.msra.mxu0 0
    %4150 = vmatprep.subr.bf16.mxu0 0
    %4151 = vmatpush2.bf16.msra.mxu0 0
    %4152 = vmatprep.subr.bf16.mxu0 0
    %4153 = vmatpush2.bf16.msra.mxu0 0
    %4154 = vmatprep.mubr.bf16.mxu0 0
    %4155 = vmatmul.mubr.bf16.gmra.mxu0 %v4120
    %v4156 = vpop.f32.mrf.mxu0
    %v4157 = vadd.f32 0.0, %v4156
    %v4158 = vpop.f32.mrf.mxu0
    %v4159 = vadd.f32 0.0, %v4158
    %v4160 = vpop.f32.mrf.mxu0
    %v4161 = vpop.f32.mrf.mxu0
    %4162 = vdwg.mxu0
    %4163 = vmatprep.subr.bf16.mxu0 0
    %4164 = vmatpush1.bf16.msra.mxu0 0
    %4165 = vmatprep.subr.bf16.mxu0 0
    %4166 = vmatpush1.bf16.msra.mxu0 0
    %4167 = vmatprep.subr.bf16.mxu0 0
    %4168 = vmatpush1.bf16.msra.mxu0 0
    %4169 = vmatprep.subr.bf16.mxu0 0
    %4170 = vmatpush1.bf16.msra.mxu0 0
    %4171 = vmatprep.subr.bf16.mxu0 %v4102
    %4172 = vmatpush1.bf16.msra.mxu0 %v4101
    %4173 = vmatprep.subr.bf16.mxu0 %v4098
    %4174 = vmatpush1.bf16.msra.mxu0 %v4097
    %4175 = vmatprep.subr.bf16.mxu0 %v4094
    %4176 = vmatpush1.bf16.msra.mxu0 %v4093
    %4177 = vmatprep.subr.bf16.mxu0 %v4090
    %4178 = vmatpush1.bf16.msra.mxu0 %v4089
    %4179 = vmatprep.subr.bf16.mxu0 0
    %4180 = vmatpush2.bf16.msra.mxu0 0
    %4181 = vmatprep.subr.bf16.mxu0 0
    %4182 = vmatpush2.bf16.msra.mxu0 0
    %4183 = vmatprep.subr.bf16.mxu0 0
    %4184 = vmatpush2.bf16.msra.mxu0 0
    %4185 = vmatprep.subr.bf16.mxu0 0
    %4186 = vmatpush2.bf16.msra.mxu0 0
    %4187 = vmatprep.subr.bf16.mxu0 0
    %4188 = vmatpush2.bf16.msra.mxu0 0
    %4189 = vmatprep.subr.bf16.mxu0 0
    %4190 = vmatpush2.bf16.msra.mxu0 0
    %4191 = vmatprep.subr.bf16.mxu0 0
    %4192 = vmatpush2.bf16.msra.mxu0 0
    %4193 = vmatprep.subr.bf16.mxu0 0
    %4194 = vmatpush2.bf16.msra.mxu0 0
    %4195 = vmatprep.mubr.bf16.mxu0 0
    %4196 = vmatmul.mubr.bf16.gmra.mxu0 %v4120
    %v4197 = vpop.f32.mrf.mxu0
    %v4198 = vadd.f32 0.0, %v4197
    %v4199 = vpop.f32.mrf.mxu0
    %v4200 = vadd.f32 0.0, %v4199
    %v4201 = vpop.f32.mrf.mxu0
    %v4202 = vpop.f32.mrf.mxu0
    %4203 = vdwg.mxu0
    %v4204 = vadd.f32 %v4018, %v4157
    %v4205 = vadd.f32 %v4019, %v4159
    %v4206 = vadd.f32 %v4020, %v4198
    %v4207 = vadd.f32 %v4021, %v4200
    %v4208 = vmul.f32 %v4204, 0.5
    %v4209 = vtanh.pop %v4208
    %v4210 = vadd.f32 %v4209, 1.0
    %v4211 = vmul.f32 %v4210, 0.5
    %v4212 = vmul.f32 %v4205, 0.5
    %v4213 = vtanh.pop %v4212
    %v4214 = vadd.f32 %v4213, 1.0
    %v4215 = vmul.f32 %v4214, 0.5
    %v4216 = vtanh.pop %v4206
    %v4217 = vmul.f32 %v4207, 0.5
    %v4218 = vtanh.pop %v4217
    %v4219 = vadd.f32 %v4218, 1.0
    %v4220 = vmul.f32 %v4219, 0.5
    %v4221 = vmul.f32 %v4215, %v3696
    %v4222 = vmul.f32 %v4211, %v4216
    %v4223 = vadd.f32 %v4221, %v4222
    %v4224 = vtanh.pop %v4223
    %v4225 = vmul.f32 %v4220, %v4224
    %4226 = vrot.lane.b32.xlu0 %v4016, 64
    %v4227 = vpop.permute.xlu0 %4226
    %v4228 = vsel %vm328, %v4225, %v4227
    %v4229 = vpack.c.bf16 %v4228, %v4228
    %v4230 = vld [vmem:[%s4] sm:$0xff]
    %v4231 = vld [vmem:[%s4 + $0x8] sm:$0xff]
    %v4232 = vld [vmem:[%s4 + $0x10] sm:$0xff]
    %v4233 = vld [vmem:[%s4 + $0x18] sm:$0xff]
    %v4234 = vld [vmem:[%s4 + $0x20] sm:$0xff]
    %v4235 = vld [vmem:[%s4 + $0x28] sm:$0xff]
    %v4236 = vld [vmem:[%s4 + $0x30] sm:$0xff]
    %v4237 = vld [vmem:[%s4 + $0x38] sm:$0xff]
    %v4238 = vld [vmem:[%s4 + $0x40] sm:$0xff]
    %v4239 = vld [vmem:[%s4 + $0x48] sm:$0xff]
    %v4240 = vld [vmem:[%s4 + $0x50] sm:$0xff]
    %v4241 = vld [vmem:[%s4 + $0x58] sm:$0xff]
    %v4242 = vld [vmem:[%s4 + $0x60] sm:$0xff]
    %v4243 = vld [vmem:[%s4 + $0x68] sm:$0xff]
    %v4244 = vld [vmem:[%s4 + $0x70] sm:$0xff]
    %v4245 = vld [vmem:[%s4 + $0x78] sm:$0xff]
    %v4246 = vld [vmem:[%s4 + $0x80] sm:$0xff]
    %v4247 = vld [vmem:[%s4 + $0x88] sm:$0xff]
    %v4248 = vld [vmem:[%s4 + $0x90] sm:$0xff]
    %v4249 = vld [vmem:[%s4 + $0x98] sm:$0xff]
    %v4250 = vld [vmem:[%s4 + $0xa0] sm:$0xff]
    %v4251 = vld [vmem:[%s4 + $0xa8] sm:$0xff]
    %v4252 = vld [vmem:[%s4 + $0xb0] sm:$0xff]
    %v4253 = vld [vmem:[%s4 + $0xb8] sm:$0xff]
    %v4254 = vld [vmem:[%s4 + $0xc0] sm:$0xff]
    %v4255 = vld [vmem:[%s4 + $0xc8] sm:$0xff]
    %v4256 = vld [vmem:[%s4 + $0xd0] sm:$0xff]
    %v4257 = vld [vmem:[%s4 + $0xd8] sm:$0xff]
    %v4258 = vld [vmem:[%s4 + $0xe0] sm:$0xff]
    %v4259 = vld [vmem:[%s4 + $0xe8] sm:$0xff]
    %v4260 = vld [vmem:[%s4 + $0xf0] sm:$0xff]
    %v4261 = vld [vmem:[%s4 + $0xf8] sm:$0xff]
    %v4262 = vld [vmem:[%s5] sm:$0xf]
    %v4264 = vlaneseq
    %v4265 = vshrl.u32 %v4264, 7
    %v4266 = vsub.s32 0, %v4265
    %v4267 = vrot.slane %v4262, %v4266
    %v4268 = vlaneseq
    %v4269 = vshrl.u32 %v4268, 7
    %v4270 = vsub.s32 1, %v4269
    %v4271 = vrot.slane %v4262, %v4270
    %v4272 = vlaneseq
    %v4273 = vshrl.u32 %v4272, 7
    %v4274 = vsub.s32 2, %v4273
    %v4275 = vrot.slane %v4262, %v4274
    %v4276 = vlaneseq
    %v4277 = vshrl.u32 %v4276, 7
    %v4278 = vsub.s32 3, %v4277
    %v4279 = vrot.slane %v4262, %v4278
    %v4316 = vunpack.c.l.b16 %v4230
    %v4317 = vunpack.c.h.b16 %v4230
    %v4318 = vunpack.c.l.b16 %v4231
    %v4319 = vunpack.c.h.b16 %v4231
    %v4320 = vunpack.c.l.b16 %v4232
    %v4321 = vunpack.c.h.b16 %v4232
    %v4322 = vunpack.c.l.b16 %v4233
    %v4323 = vunpack.c.h.b16 %v4233
    %v4324 = vunpack.c.l.b16 %v4234
    %v4325 = vunpack.c.h.b16 %v4234
    %v4326 = vunpack.c.l.b16 %v4235
    %v4327 = vunpack.c.h.b16 %v4235
    %v4328 = vunpack.c.l.b16 %v4236
    %v4329 = vunpack.c.h.b16 %v4236
    %v4330 = vunpack.c.l.b16 %v4237
    %v4331 = vunpack.c.h.b16 %v4237
    %v4332 = vunpack.c.l.b16 %v4238
    %v4333 = vunpack.c.h.b16 %v4238
    %v4334 = vunpack.c.l.b16 %v4239
    %v4335 = vunpack.c.h.b16 %v4239
    %v4336 = vunpack.c.l.b16 %v4240
    %v4337 = vunpack.c.h.b16 %v4240
    %v4338 = vunpack.c.l.b16 %v4241
    %v4339 = vunpack.c.h.b16 %v4241
    %v4340 = vunpack.c.l.b16 %v4242
    %v4341 = vunpack.c.h.b16 %v4242
    %v4342 = vunpack.c.l.b16 %v4243
    %v4343 = vunpack.c.h.b16 %v4243
    %v4344 = vunpack.c.l.b16 %v4244
    %v4345 = vunpack.c.h.b16 %v4244
    %v4346 = vunpack.c.l.b16 %v4245
    %v4347 = vunpack.c.h.b16 %v4245
    %v4348 = vunpack.c.l.b16 %v4246
    %v4349 = vunpack.c.h.b16 %v4246
    %v4350 = vunpack.c.l.b16 %v4247
    %v4351 = vunpack.c.h.b16 %v4247
    %v4352 = vunpack.c.l.b16 %v4248
    %v4353 = vunpack.c.h.b16 %v4248
    %v4354 = vunpack.c.l.b16 %v4249
    %v4355 = vunpack.c.h.b16 %v4249
    %v4356 = vunpack.c.l.b16 %v4250
    %v4357 = vunpack.c.h.b16 %v4250
    %v4358 = vunpack.c.l.b16 %v4251
    %v4359 = vunpack.c.h.b16 %v4251
    %v4360 = vunpack.c.l.b16 %v4252
    %v4361 = vunpack.c.h.b16 %v4252
    %v4362 = vunpack.c.l.b16 %v4253
    %v4363 = vunpack.c.h.b16 %v4253
    %v4364 = vunpack.c.l.b16 %v4254
    %v4365 = vunpack.c.h.b16 %v4254
    %v4366 = vunpack.c.l.b16 %v4255
    %v4367 = vunpack.c.h.b16 %v4255
    %v4368 = vunpack.c.l.b16 %v4256
    %v4369 = vunpack.c.h.b16 %v4256
    %v4370 = vunpack.c.l.b16 %v4257
    %v4371 = vunpack.c.h.b16 %v4257
    %v4372 = vunpack.c.l.b16 %v4258
    %v4373 = vunpack.c.h.b16 %v4258
    %v4374 = vunpack.c.l.b16 %v4259
    %v4375 = vunpack.c.h.b16 %v4259
    %v4376 = vunpack.c.l.b16 %v4260
    %v4377 = vunpack.c.h.b16 %v4260
    %v4378 = vunpack.c.l.b16 %v4261
    %v4379 = vunpack.c.h.b16 %v4261
    %v4380 = vpack.c.b16 %v4320, %v4316
    %v4381 = vpack.c.b16 %v4321, %v4317
    %v4382 = vpack.c.b16 %v4322, %v4318
    %v4383 = vpack.c.b16 %v4323, %v4319
    %v4384 = vpack.c.b16 %v4328, %v4324
    %v4385 = vpack.c.b16 %v4329, %v4325
    %v4386 = vpack.c.b16 %v4330, %v4326
    %v4387 = vpack.c.b16 %v4331, %v4327
    %v4388 = vpack.c.b16 %v4336, %v4332
    %v4389 = vpack.c.b16 %v4337, %v4333
    %v4390 = vpack.c.b16 %v4338, %v4334
    %v4391 = vpack.c.b16 %v4339, %v4335
    %v4392 = vpack.c.b16 %v4344, %v4340
    %v4393 = vpack.c.b16 %v4345, %v4341
    %v4394 = vpack.c.b16 %v4346, %v4342
    %v4395 = vpack.c.b16 %v4347, %v4343
    %v4396 = vpack.c.b16 %v4352, %v4348
    %v4397 = vpack.c.b16 %v4353, %v4349
    %v4398 = vpack.c.b16 %v4354, %v4350
    %v4399 = vpack.c.b16 %v4355, %v4351
    %v4400 = vpack.c.b16 %v4360, %v4356
    %v4401 = vpack.c.b16 %v4361, %v4357
    %v4402 = vpack.c.b16 %v4362, %v4358
    %v4403 = vpack.c.b16 %v4363, %v4359
    %v4404 = vpack.c.b16 %v4368, %v4364
    %v4405 = vpack.c.b16 %v4369, %v4365
    %v4406 = vpack.c.b16 %v4370, %v4366
    %v4407 = vpack.c.b16 %v4371, %v4367
    %v4408 = vpack.c.b16 %v4376, %v4372
    %v4409 = vpack.c.b16 %v4377, %v4373
    %v4410 = vpack.c.b16 %v4378, %v4374
    %v4411 = vpack.c.b16 %v4379, %v4375
    %4444 = vmatprep.subr.bf16.mxu0 %v4409
    %4445 = vmatpush1.bf16.msra.mxu0 %v4408
    %4446 = vmatprep.subr.bf16.mxu0 %v4405
    %4447 = vmatpush1.bf16.msra.mxu0 %v4404
    %4448 = vmatprep.subr.bf16.mxu0 %v4401
    %4449 = vmatpush1.bf16.msra.mxu0 %v4400
    %4450 = vmatprep.subr.bf16.mxu0 %v4397
    %4451 = vmatpush1.bf16.msra.mxu0 %v4396
    %4452 = vmatprep.subr.bf16.mxu0 %v4393
    %4453 = vmatpush1.bf16.msra.mxu0 %v4392
    %4454 = vmatprep.subr.bf16.mxu0 %v4389
    %4455 = vmatpush1.bf16.msra.mxu0 %v4388
    %4456 = vmatprep.subr.bf16.mxu0 %v4385
    %4457 = vmatpush1.bf16.msra.mxu0 %v4384
    %4458 = vmatprep.subr.bf16.mxu0 %v4381
    %4459 = vmatpush1.bf16.msra.mxu0 %v4380
    %4460 = vmatprep.subr.bf16.mxu0 0
    %4461 = vmatpush2.bf16.msra.mxu0 0
    %4462 = vmatprep.subr.bf16.mxu0 0
    %4463 = vmatpush2.bf16.msra.mxu0 0
    %4464 = vmatprep.subr.bf16.mxu0 0
    %4465 = vmatpush2.bf16.msra.mxu0 0
    %4466 = vmatprep.subr.bf16.mxu0 0
    %4467 = vmatpush2.bf16.msra.mxu0 0
    %4468 = vmatprep.subr.bf16.mxu0 0
    %4469 = vmatpush2.bf16.msra.mxu0 0
    %4470 = vmatprep.subr.bf16.mxu0 0
    %4471 = vmatpush2.bf16.msra.mxu0 0
    %4472 = vmatprep.subr.bf16.mxu0 0
    %4473 = vmatpush2.bf16.msra.mxu0 0
    %4474 = vmatprep.subr.bf16.mxu0 0
    %4475 = vmatpush2.bf16.msra.mxu0 0
    %4476 = vmatprep.mubr.bf16.mxu0 0
    %4477 = vmatmul.mubr.bf16.gmra.mxu0 %v4229
    %v4478 = vpop.f32.mrf.mxu0
    %v4479 = vadd.f32 %v4267, %v4478
    %v4480 = vpop.f32.mrf.mxu0
    %v4481 = vadd.f32 %v4271, %v4480
    %v4482 = vpop.f32.mrf.mxu0
    %v4483 = vpop.f32.mrf.mxu0
    %4484 = vdwg.mxu0
    %4485 = vmatprep.subr.bf16.mxu0 %v4411
    %4486 = vmatpush1.bf16.msra.mxu0 %v4410
    %4487 = vmatprep.subr.bf16.mxu0 %v4407
    %4488 = vmatpush1.bf16.msra.mxu0 %v4406
    %4489 = vmatprep.subr.bf16.mxu0 %v4403
    %4490 = vmatpush1.bf16.msra.mxu0 %v4402
    %4491 = vmatprep.subr.bf16.mxu0 %v4399
    %4492 = vmatpush1.bf16.msra.mxu0 %v4398
    %4493 = vmatprep.subr.bf16.mxu0 %v4395
    %4494 = vmatpush1.bf16.msra.mxu0 %v4394
    %4495 = vmatprep.subr.bf16.mxu0 %v4391
    %4496 = vmatpush1.bf16.msra.mxu0 %v4390
    %4497 = vmatprep.subr.bf16.mxu0 %v4387
    %4498 = vmatpush1.bf16.msra.mxu0 %v4386
    %4499 = vmatprep.subr.bf16.mxu0 %v4383
    %4500 = vmatpush1.bf16.msra.mxu0 %v4382
    %4501 = vmatprep.subr.bf16.mxu0 0
    %4502 = vmatpush2.bf16.msra.mxu0 0
    %4503 = vmatprep.subr.bf16.mxu0 0
    %4504 = vmatpush2.bf16.msra.mxu0 0
    %4505 = vmatprep.subr.bf16.mxu0 0
    %4506 = vmatpush2.bf16.msra.mxu0 0
    %4507 = vmatprep.subr.bf16.mxu0 0
    %4508 = vmatpush2.bf16.msra.mxu0 0
    %4509 = vmatprep.subr.bf16.mxu0 0
    %4510 = vmatpush2.bf16.msra.mxu0 0
    %4511 = vmatprep.subr.bf16.mxu0 0
    %4512 = vmatpush2.bf16.msra.mxu0 0
    %4513 = vmatprep.subr.bf16.mxu0 0
    %4514 = vmatpush2.bf16.msra.mxu0 0
    %4515 = vmatprep.subr.bf16.mxu0 0
    %4516 = vmatpush2.bf16.msra.mxu0 0
    %4517 = vmatprep.mubr.bf16.mxu0 0
    %4518 = vmatmul.mubr.bf16.gmra.mxu0 %v4229
    %v4519 = vpop.f32.mrf.mxu0
    %v4520 = vadd.f32 %v4275, %v4519
    %v4521 = vpop.f32.mrf.mxu0
    %v4522 = vadd.f32 %v4279, %v4521
    %v4523 = vpop.f32.mrf.mxu0
    %v4524 = vpop.f32.mrf.mxu0
    %4525 = vdwg.mxu0
    %v4526 = vmul.f32 %v4479, 0.5
    %v4527 = vtanh.pop %v4526
    %v4528 = vadd.f32 %v4527, 1.0
    %v4529 = vmul.f32 %v4528, 0.5
    %v4530 = vmul.f32 %v4481, 0.5
    %v4531 = vtanh.pop %v4530
    %v4532 = vadd.f32 %v4531, 1.0
    %v4533 = vmul.f32 %v4532, 0.5
    %v4534 = vtanh.pop %v4520
    %v4535 = vmul.f32 %v4522, 0.5
    %v4536 = vtanh.pop %v4535
    %v4537 = vadd.f32 %v4536, 1.0
    %v4538 = vmul.f32 %v4537, 0.5
    %v4539 = vmul.f32 %v4533, %v4014
    %v4540 = vmul.f32 %v4529, %v4534
    %v4541 = vadd.f32 %v4539, %v4540
    %v4542 = vtanh.pop %v4541
    %v4543 = vmul.f32 %v4538, %v4542
    %4544 = vst [vmem:[#allocation3 + $0x38] sm:$0xff] %v4543
    %v4545 = vld [vmem:[#allocation3] sm:$0xff]
    %v4546 = vld [vmem:[#allocation3 + $0x8] sm:$0xff]
    %v4547 = vld [vmem:[#allocation3 + $0x10] sm:$0xff]
    %v4548 = vld [vmem:[#allocation3 + $0x18] sm:$0xff]
    %v4549 = vld [vmem:[#allocation3 + $0x20] sm:$0xff]
    %v4550 = vld [vmem:[#allocation3 + $0x28] sm:$0xff]
    %v4551 = vld [vmem:[#allocation3 + $0x30] sm:$0xff]
    %v4552 = vld [vmem:[#allocation3 + $0x38] sm:$0xff]
    %v4553 = vpack.c.bf16 %v4545, %v4545
    %v4554 = vpack.c.bf16 %v4546, %v4546
    %v4555 = vpack.c.bf16 %v4547, %v4547
    %v4556 = vpack.c.bf16 %v4548, %v4548
    %v4557 = vpack.c.bf16 %v4549, %v4549
    %v4558 = vpack.c.bf16 %v4550, %v4550
    %v4559 = vpack.c.bf16 %v4551, %v4551
    %v4560 = vpack.c.bf16 %v4552, %v4552
    %v4561 = vld [vmem:[%s6] sm:$0xf]
    %v4562 = vld [vmem:[%s6 + $0x4] sm:$0xf]
    %v4563 = vld [vmem:[%s6 + $0x8] sm:$0xf]
    %v4564 = vld [vmem:[%s6 + $0xc] sm:$0xf]
    %v4565 = vld [vmem:[%s6 + $0x10] sm:$0xf]
    %v4566 = vld [vmem:[%s6 + $0x14] sm:$0xf]
    %v4567 = vld [vmem:[%s6 + $0x18] sm:$0xf]
    %v4568 = vld [vmem:[%s6 + $0x1c] sm:$0xf]
    %v4569 = vld [vmem:[%s6 + $0x20] sm:$0xf]
    %v4570 = vld [vmem:[%s6 + $0x24] sm:$0xf]
    %v4571 = vld [vmem:[%s6 + $0x28] sm:$0xf]
    %v4572 = vld [vmem:[%s6 + $0x2c] sm:$0xf]
    %v4573 = vld [vmem:[%s6 + $0x30] sm:$0xf]
    %v4574 = vld [vmem:[%s6 + $0x34] sm:$0xf]
    %v4575 = vld [vmem:[%s6 + $0x38] sm:$0xf]
    %v4576 = vld [vmem:[%s6 + $0x3c] sm:$0xf]
    %v4577 = vld [vmem:[%s6 + $0x40] sm:$0xf]
    %v4578 = vld [vmem:[%s6 + $0x44] sm:$0xf]
    %v4579 = vld [vmem:[%s6 + $0x48] sm:$0xf]
    %v4580 = vld [vmem:[%s6 + $0x4c] sm:$0xf]
    %v4581 = vld [vmem:[%s6 + $0x50] sm:$0xf]
    %v4582 = vld [vmem:[%s6 + $0x54] sm:$0xf]
    %v4583 = vld [vmem:[%s6 + $0x58] sm:$0xf]
    %v4584 = vld [vmem:[%s6 + $0x5c] sm:$0xf]
    %v4585 = vld [vmem:[%s6 + $0x60] sm:$0xf]
    %v4586 = vld [vmem:[%s6 + $0x64] sm:$0xf]
    %v4587 = vld [vmem:[%s6 + $0x68] sm:$0xf]
    %v4588 = vld [vmem:[%s6 + $0x6c] sm:$0xf]
    %v4589 = vld [vmem:[%s6 + $0x70] sm:$0xf]
    %v4590 = vld [vmem:[%s6 + $0x74] sm:$0xf]
    %v4591 = vld [vmem:[%s6 + $0x78] sm:$0xf]
    %v4592 = vld [vmem:[%s6 + $0x7c] sm:$0xf]
    %v4593 = vld [vmem:[%s6 + $0x80] sm:$0xf]
    %v4594 = vld [vmem:[%s6 + $0x84] sm:$0xf]
    %v4595 = vld [vmem:[%s6 + $0x88] sm:$0xf]
    %v4596 = vld [vmem:[%s6 + $0x8c] sm:$0xf]
    %v4597 = vld [vmem:[%s6 + $0x90] sm:$0xf]
    %v4598 = vld [vmem:[%s6 + $0x94] sm:$0xf]
    %v4599 = vld [vmem:[%s6 + $0x98] sm:$0xf]
    %v4600 = vld [vmem:[%s6 + $0x9c] sm:$0xf]
    %v4601 = vld [vmem:[%s6 + $0xa0] sm:$0xf]
    %v4602 = vld [vmem:[%s6 + $0xa4] sm:$0xf]
    %v4603 = vld [vmem:[%s6 + $0xa8] sm:$0xf]
    %v4604 = vld [vmem:[%s6 + $0xac] sm:$0xf]
    %v4605 = vld [vmem:[%s6 + $0xb0] sm:$0xf]
    %v4606 = vld [vmem:[%s6 + $0xb4] sm:$0xf]
    %v4607 = vld [vmem:[%s6 + $0xb8] sm:$0xf]
    %v4608 = vld [vmem:[%s6 + $0xbc] sm:$0xf]
    %v4609 = vld [vmem:[%s6 + $0xc0] sm:$0xf]
    %v4610 = vld [vmem:[%s6 + $0xc4] sm:$0xf]
    %v4611 = vld [vmem:[%s6 + $0xc8] sm:$0xf]
    %v4612 = vld [vmem:[%s6 + $0xcc] sm:$0xf]
    %v4613 = vld [vmem:[%s6 + $0xd0] sm:$0xf]
    %v4614 = vld [vmem:[%s6 + $0xd4] sm:$0xf]
    %v4615 = vld [vmem:[%s6 + $0xd8] sm:$0xf]
    %v4616 = vld [vmem:[%s6 + $0xdc] sm:$0xf]
    %v4617 = vld [vmem:[%s6 + $0xe0] sm:$0xf]
    %v4618 = vld [vmem:[%s6 + $0xe4] sm:$0xf]
    %v4619 = vld [vmem:[%s6 + $0xe8] sm:$0xf]
    %v4620 = vld [vmem:[%s6 + $0xec] sm:$0xf]
    %v4621 = vld [vmem:[%s6 + $0xf0] sm:$0xf]
    %v4622 = vld [vmem:[%s6 + $0xf4] sm:$0xf]
    %v4623 = vld [vmem:[%s6 + $0xf8] sm:$0xf]
    %v4624 = vld [vmem:[%s6 + $0xfc] sm:$0xf]
    %v4625 = vld [vmem:[%s6 + $0x100] sm:$0xf]
    %v4626 = vld [vmem:[%s6 + $0x104] sm:$0xf]
    %v4627 = vld [vmem:[%s6 + $0x108] sm:$0xf]
    %v4628 = vld [vmem:[%s6 + $0x10c] sm:$0xf]
    %v4629 = vld [vmem:[%s6 + $0x110] sm:$0xf]
    %v4630 = vld [vmem:[%s6 + $0x114] sm:$0xf]
    %v4631 = vld [vmem:[%s6 + $0x118] sm:$0xf]
    %v4632 = vld [vmem:[%s6 + $0x11c] sm:$0xf]
    %v4633 = vld [vmem:[%s6 + $0x120] sm:$0xf]
    %v4634 = vld [vmem:[%s6 + $0x124] sm:$0xf]
    %v4635 = vld [vmem:[%s6 + $0x128] sm:$0xf]
    %v4636 = vld [vmem:[%s6 + $0x12c] sm:$0xf]
    %v4637 = vld [vmem:[%s6 + $0x130] sm:$0xf]
    %v4638 = vld [vmem:[%s6 + $0x134] sm:$0xf]
    %v4639 = vld [vmem:[%s6 + $0x138] sm:$0xf]
    %v4640 = vld [vmem:[%s6 + $0x13c] sm:$0xf]
    %v4641 = vld [vmem:[%s6 + $0x140] sm:$0xf]
    %v4642 = vld [vmem:[%s6 + $0x144] sm:$0xf]
    %v4643 = vld [vmem:[%s6 + $0x148] sm:$0xf]
    %v4644 = vld [vmem:[%s6 + $0x14c] sm:$0xf]
    %v4645 = vld [vmem:[%s6 + $0x150] sm:$0xf]
    %v4646 = vld [vmem:[%s6 + $0x154] sm:$0xf]
    %v4647 = vld [vmem:[%s6 + $0x158] sm:$0xf]
    %v4648 = vld [vmem:[%s6 + $0x15c] sm:$0xf]
    %v4649 = vld [vmem:[%s6 + $0x160] sm:$0xf]
    %v4650 = vld [vmem:[%s6 + $0x164] sm:$0xf]
    %v4651 = vld [vmem:[%s6 + $0x168] sm:$0xf]
    %v4652 = vld [vmem:[%s6 + $0x16c] sm:$0xf]
    %v4653 = vld [vmem:[%s6 + $0x170] sm:$0xf]
    %v4654 = vld [vmem:[%s6 + $0x174] sm:$0xf]
    %v4655 = vld [vmem:[%s6 + $0x178] sm:$0xf]
    %v4656 = vld [vmem:[%s6 + $0x17c] sm:$0xf]
    %v4657 = vld [vmem:[%s6 + $0x180] sm:$0xf]
    %v4658 = vld [vmem:[%s6 + $0x184] sm:$0xf]
    %v4659 = vld [vmem:[%s6 + $0x188] sm:$0xf]
    %v4660 = vld [vmem:[%s6 + $0x18c] sm:$0xf]
    %v4661 = vld [vmem:[%s6 + $0x190] sm:$0xf]
    %v4662 = vld [vmem:[%s6 + $0x194] sm:$0xf]
    %v4663 = vld [vmem:[%s6 + $0x198] sm:$0xf]
    %v4664 = vld [vmem:[%s6 + $0x19c] sm:$0xf]
    %v4665 = vld [vmem:[%s6 + $0x1a0] sm:$0xf]
    %v4666 = vld [vmem:[%s6 + $0x1a4] sm:$0xf]
    %v4667 = vld [vmem:[%s6 + $0x1a8] sm:$0xf]
    %v4668 = vld [vmem:[%s6 + $0x1ac] sm:$0xf]
    %v4669 = vld [vmem:[%s6 + $0x1b0] sm:$0xf]
    %v4670 = vld [vmem:[%s6 + $0x1b4] sm:$0xf]
    %v4671 = vld [vmem:[%s6 + $0x1b8] sm:$0xf]
    %v4672 = vld [vmem:[%s6 + $0x1bc] sm:$0xf]
    %v4673 = vld [vmem:[%s6 + $0x1c0] sm:$0xf]
    %v4674 = vld [vmem:[%s6 + $0x1c4] sm:$0xf]
    %v4675 = vld [vmem:[%s6 + $0x1c8] sm:$0xf]
    %v4676 = vld [vmem:[%s6 + $0x1cc] sm:$0xf]
    %v4677 = vld [vmem:[%s6 + $0x1d0] sm:$0xf]
    %v4678 = vld [vmem:[%s6 + $0x1d4] sm:$0xf]
    %v4679 = vld [vmem:[%s6 + $0x1d8] sm:$0xf]
    %v4680 = vld [vmem:[%s6 + $0x1dc] sm:$0xf]
    %v4681 = vld [vmem:[%s6 + $0x1e0] sm:$0xf]
    %v4682 = vld [vmem:[%s6 + $0x1e4] sm:$0xf]
    %v4683 = vld [vmem:[%s6 + $0x1e8] sm:$0xf]
    %v4684 = vld [vmem:[%s6 + $0x1ec] sm:$0xf]
    %v4685 = vld [vmem:[%s6 + $0x1f0] sm:$0xf]
    %v4686 = vld [vmem:[%s6 + $0x1f4] sm:$0xf]
    %v4687 = vld [vmem:[%s6 + $0x1f8] sm:$0xf]
    %v4688 = vld [vmem:[%s6 + $0x1fc] sm:$0xf]
    %v4689 = vld [vmem:[%s7] sm:$0x1]
    %v4691 = vlaneseq
    %v4692 = vshrl.u32 %v4691, 7
    %v4693 = vsub.s32 0, %v4692
    %v4694 = vrot.slane %v4689, %v4693
    %v4824 = vunpack.c.l.b16 %v4561
    %v4825 = vunpack.c.l.b16 %v4562
    %v4826 = vunpack.c.l.b16 %v4563
    %v4827 = vunpack.c.l.b16 %v4564
    %v4828 = vunpack.c.l.b16 %v4565
    %v4829 = vunpack.c.l.b16 %v4566
    %v4830 = vunpack.c.l.b16 %v4567
    %v4831 = vunpack.c.l.b16 %v4568
    %v4832 = vunpack.c.l.b16 %v4569
    %v4833 = vunpack.c.l.b16 %v4570
    %v4834 = vunpack.c.l.b16 %v4571
    %v4835 = vunpack.c.l.b16 %v4572
    %v4836 = vunpack.c.l.b16 %v4573
    %v4837 = vunpack.c.l.b16 %v4574
    %v4838 = vunpack.c.l.b16 %v4575
    %v4839 = vunpack.c.l.b16 %v4576
    %v4840 = vunpack.c.l.b16 %v4577
    %v4841 = vunpack.c.l.b16 %v4578
    %v4842 = vunpack.c.l.b16 %v4579
    %v4843 = vunpack.c.l.b16 %v4580
    %v4844 = vunpack.c.l.b16 %v4581
    %v4845 = vunpack.c.l.b16 %v4582
    %v4846 = vunpack.c.l.b16 %v4583
    %v4847 = vunpack.c.l.b16 %v4584
    %v4848 = vunpack.c.l.b16 %v4585
    %v4849 = vunpack.c.l.b16 %v4586
    %v4850 = vunpack.c.l.b16 %v4587
    %v4851 = vunpack.c.l.b16 %v4588
    %v4852 = vunpack.c.l.b16 %v4589
    %v4853 = vunpack.c.l.b16 %v4590
    %v4854 = vunpack.c.l.b16 %v4591
    %v4855 = vunpack.c.l.b16 %v4592
    %v4856 = vunpack.c.l.b16 %v4593
    %v4857 = vunpack.c.l.b16 %v4594
    %v4858 = vunpack.c.l.b16 %v4595
    %v4859 = vunpack.c.l.b16 %v4596
    %v4860 = vunpack.c.l.b16 %v4597
    %v4861 = vunpack.c.l.b16 %v4598
    %v4862 = vunpack.c.l.b16 %v4599
    %v4863 = vunpack.c.l.b16 %v4600
    %v4864 = vunpack.c.l.b16 %v4601
    %v4865 = vunpack.c.l.b16 %v4602
    %v4866 = vunpack.c.l.b16 %v4603
    %v4867 = vunpack.c.l.b16 %v4604
    %v4868 = vunpack.c.l.b16 %v4605
    %v4869 = vunpack.c.l.b16 %v4606
    %v4870 = vunpack.c.l.b16 %v4607
    %v4871 = vunpack.c.l.b16 %v4608
    %v4872 = vunpack.c.l.b16 %v4609
    %v4873 = vunpack.c.l.b16 %v4610
    %v4874 = vunpack.c.l.b16 %v4611
    %v4875 = vunpack.c.l.b16 %v4612
    %v4876 = vunpack.c.l.b16 %v4613
    %v4877 = vunpack.c.l.b16 %v4614
    %v4878 = vunpack.c.l.b16 %v4615
    %v4879 = vunpack.c.l.b16 %v4616
    %v4880 = vunpack.c.l.b16 %v4617
    %v4881 = vunpack.c.l.b16 %v4618
    %v4882 = vunpack.c.l.b16 %v4619
    %v4883 = vunpack.c.l.b16 %v4620
    %v4884 = vunpack.c.l.b16 %v4621
    %v4885 = vunpack.c.l.b16 %v4622
    %v4886 = vunpack.c.l.b16 %v4623
    %v4887 = vunpack.c.l.b16 %v4624
    %v4888 = vunpack.c.l.b16 %v4625
    %v4889 = vunpack.c.l.b16 %v4626
    %v4890 = vunpack.c.l.b16 %v4627
    %v4891 = vunpack.c.l.b16 %v4628
    %v4892 = vunpack.c.l.b16 %v4629
    %v4893 = vunpack.c.l.b16 %v4630
    %v4894 = vunpack.c.l.b16 %v4631
    %v4895 = vunpack.c.l.b16 %v4632
    %v4896 = vunpack.c.l.b16 %v4633
    %v4897 = vunpack.c.l.b16 %v4634
    %v4898 = vunpack.c.l.b16 %v4635
    %v4899 = vunpack.c.l.b16 %v4636
    %v4900 = vunpack.c.l.b16 %v4637
    %v4901 = vunpack.c.l.b16 %v4638
    %v4902 = vunpack.c.l.b16 %v4639
    %v4903 = vunpack.c.l.b16 %v4640
    %v4904 = vunpack.c.l.b16 %v4641
    %v4905 = vunpack.c.l.b16 %v4642
    %v4906 = vunpack.c.l.b16 %v4643
    %v4907 = vunpack.c.l.b16 %v4644
    %v4908 = vunpack.c.l.b16 %v4645
    %v4909 = vunpack.c.l.b16 %v4646
    %v4910 = vunpack.c.l.b16 %v4647
    %v4911 = vunpack.c.l.b16 %v4648
    %v4912 = vunpack.c.l.b16 %v4649
    %v4913 = vunpack.c.l.b16 %v4650
    %v4914 = vunpack.c.l.b16 %v4651
    %v4915 = vunpack.c.l.b16 %v4652
    %v4916 = vunpack.c.l.b16 %v4653
    %v4917 = vunpack.c.l.b16 %v4654
    %v4918 = vunpack.c.l.b16 %v4655
    %v4919 = vunpack.c.l.b16 %v4656
    %v4920 = vunpack.c.l.b16 %v4657
    %v4921 = vunpack.c.l.b16 %v4658
    %v4922 = vunpack.c.l.b16 %v4659
    %v4923 = vunpack.c.l.b16 %v4660
    %v4924 = vunpack.c.l.b16 %v4661
    %v4925 = vunpack.c.l.b16 %v4662
    %v4926 = vunpack.c.l.b16 %v4663
    %v4927 = vunpack.c.l.b16 %v4664
    %v4928 = vunpack.c.l.b16 %v4665
    %v4929 = vunpack.c.l.b16 %v4666
    %v4930 = vunpack.c.l.b16 %v4667
    %v4931 = vunpack.c.l.b16 %v4668
    %v4932 = vunpack.c.l.b16 %v4669
    %v4933 = vunpack.c.l.b16 %v4670
    %v4934 = vunpack.c.l.b16 %v4671
    %v4935 = vunpack.c.l.b16 %v4672
    %v4936 = vunpack.c.l.b16 %v4673
    %v4937 = vunpack.c.l.b16 %v4674
    %v4938 = vunpack.c.l.b16 %v4675
    %v4939 = vunpack.c.l.b16 %v4676
    %v4940 = vunpack.c.l.b16 %v4677
    %v4941 = vunpack.c.l.b16 %v4678
    %v4942 = vunpack.c.l.b16 %v4679
    %v4943 = vunpack.c.l.b16 %v4680
    %v4944 = vunpack.c.l.b16 %v4681
    %v4945 = vunpack.c.l.b16 %v4682
    %v4946 = vunpack.c.l.b16 %v4683
    %v4947 = vunpack.c.l.b16 %v4684
    %v4948 = vunpack.c.l.b16 %v4685
    %v4949 = vunpack.c.l.b16 %v4686
    %v4950 = vunpack.c.l.b16 %v4687
    %v4951 = vunpack.c.l.b16 %v4688
    %v4952 = vpack.c.b16 %v4825, %v4824
    %v4953 = vpack.c.b16 %v4827, %v4826
    %v4954 = vpack.c.b16 %v4829, %v4828
    %v4955 = vpack.c.b16 %v4831, %v4830
    %v4956 = vpack.c.b16 %v4833, %v4832
    %v4957 = vpack.c.b16 %v4835, %v4834
    %v4958 = vpack.c.b16 %v4837, %v4836
    %v4959 = vpack.c.b16 %v4839, %v4838
    %v4960 = vpack.c.b16 %v4841, %v4840
    %v4961 = vpack.c.b16 %v4843, %v4842
    %v4962 = vpack.c.b16 %v4845, %v4844
    %v4963 = vpack.c.b16 %v4847, %v4846
    %v4964 = vpack.c.b16 %v4849, %v4848
    %v4965 = vpack.c.b16 %v4851, %v4850
    %v4966 = vpack.c.b16 %v4853, %v4852
    %v4967 = vpack.c.b16 %v4855, %v4854
    %v4968 = vpack.c.b16 %v4857, %v4856
    %v4969 = vpack.c.b16 %v4859, %v4858
    %v4970 = vpack.c.b16 %v4861, %v4860
    %v4971 = vpack.c.b16 %v4863, %v4862
    %v4972 = vpack.c.b16 %v4865, %v4864
    %v4973 = vpack.c.b16 %v4867, %v4866
    %v4974 = vpack.c.b16 %v4869, %v4868
    %v4975 = vpack.c.b16 %v4871, %v4870
    %v4976 = vpack.c.b16 %v4873, %v4872
    %v4977 = vpack.c.b16 %v4875, %v4874
    %v4978 = vpack.c.b16 %v4877, %v4876
    %v4979 = vpack.c.b16 %v4879, %v4878
    %v4980 = vpack.c.b16 %v4881, %v4880
    %v4981 = vpack.c.b16 %v4883, %v4882
    %v4982 = vpack.c.b16 %v4885, %v4884
    %v4983 = vpack.c.b16 %v4887, %v4886
    %v4984 = vpack.c.b16 %v4889, %v4888
    %v4985 = vpack.c.b16 %v4891, %v4890
    %v4986 = vpack.c.b16 %v4893, %v4892
    %v4987 = vpack.c.b16 %v4895, %v4894
    %v4988 = vpack.c.b16 %v4897, %v4896
    %v4989 = vpack.c.b16 %v4899, %v4898
    %v4990 = vpack.c.b16 %v4901, %v4900
    %v4991 = vpack.c.b16 %v4903, %v4902
    %v4992 = vpack.c.b16 %v4905, %v4904
    %v4993 = vpack.c.b16 %v4907, %v4906
    %v4994 = vpack.c.b16 %v4909, %v4908
    %v4995 = vpack.c.b16 %v4911, %v4910
    %v4996 = vpack.c.b16 %v4913, %v4912
    %v4997 = vpack.c.b16 %v4915, %v4914
    %v4998 = vpack.c.b16 %v4917, %v4916
    %v4999 = vpack.c.b16 %v4919, %v4918
    %v5000 = vpack.c.b16 %v4921, %v4920
    %v5001 = vpack.c.b16 %v4923, %v4922
    %v5002 = vpack.c.b16 %v4925, %v4924
    %v5003 = vpack.c.b16 %v4927, %v4926
    %v5004 = vpack.c.b16 %v4929, %v4928
    %v5005 = vpack.c.b16 %v4931, %v4930
    %v5006 = vpack.c.b16 %v4933, %v4932
    %v5007 = vpack.c.b16 %v4935, %v4934
    %v5008 = vpack.c.b16 %v4937, %v4936
    %v5009 = vpack.c.b16 %v4939, %v4938
    %v5010 = vpack.c.b16 %v4941, %v4940
    %v5011 = vpack.c.b16 %v4943, %v4942
    %v5012 = vpack.c.b16 %v4945, %v4944
    %v5013 = vpack.c.b16 %v4947, %v4946
    %v5014 = vpack.c.b16 %v4949, %v4948
    %v5015 = vpack.c.b16 %v4951, %v4950
    %5080 = vmatprep.subr.bf16.mxu0 0
    %5081 = vmatpush1.bf16.msra.mxu0 %v4959
    %5082 = vmatprep.subr.bf16.mxu0 0
    %5083 = vmatpush1.bf16.msra.mxu0 %v4958
    %5084 = vmatprep.subr.bf16.mxu0 0
    %5085 = vmatpush1.bf16.msra.mxu0 %v4957
    %5086 = vmatprep.subr.bf16.mxu0 0
    %5087 = vmatpush1.bf16.msra.mxu0 %v4956
    %5088 = vmatprep.subr.bf16.mxu0 0
    %5089 = vmatpush1.bf16.msra.mxu0 %v4955
    %5090 = vmatprep.subr.bf16.mxu0 0
    %5091 = vmatpush1.bf16.msra.mxu0 %v4954
    %5092 = vmatprep.subr.bf16.mxu0 0
    %5093 = vmatpush1.bf16.msra.mxu0 %v4953
    %5094 = vmatprep.subr.bf16.mxu0 0
    %5095 = vmatpush1.bf16.msra.mxu0 %v4952
    %5096 = vmatprep.subr.bf16.mxu0 0
    %5097 = vmatpush2.bf16.msra.mxu0 %v4967
    %5098 = vmatprep.subr.bf16.mxu0 0
    %5099 = vmatpush2.bf16.msra.mxu0 %v4966
    %5100 = vmatprep.subr.bf16.mxu0 0
    %5101 = vmatpush2.bf16.msra.mxu0 %v4965
    %5102 = vmatprep.subr.bf16.mxu0 0
    %5103 = vmatpush2.bf16.msra.mxu0 %v4964
    %5104 = vmatprep.subr.bf16.mxu0 0
    %5105 = vmatpush2.bf16.msra.mxu0 %v4963
    %5106 = vmatprep.subr.bf16.mxu0 0
    %5107 = vmatpush2.bf16.msra.mxu0 %v4962
    %5108 = vmatprep.subr.bf16.mxu0 0
    %5109 = vmatpush2.bf16.msra.mxu0 %v4961
    %5110 = vmatprep.subr.bf16.mxu0 0
    %5111 = vmatpush2.bf16.msra.mxu0 %v4960
    %5112 = vmatprep.mubr.bf16.mxu0 %v4554
    %5113 = vmatmul.mubr.bf16.gmra.mxu0 %v4553
    %v5114 = vpop.f32.mrf.mxu0
    %v5115 = vadd.f32 %v4694, %v5114
    %v5116 = vpop.f32.mrf.mxu0
    %v5117 = vpop.f32.mrf.mxu0
    %v5118 = vpop.f32.mrf.mxu0
    %5119 = vdwg.mxu0
    %5120 = vmatprep.subr.bf16.mxu0 0
    %5121 = vmatpush1.bf16.msra.mxu0 %v4975
    %5122 = vmatprep.subr.bf16.mxu0 0
    %5123 = vmatpush1.bf16.msra.mxu0 %v4974
    %5124 = vmatprep.subr.bf16.mxu0 0
    %5125 = vmatpush1.bf16.msra.mxu0 %v4973
    %5126 = vmatprep.subr.bf16.mxu0 0
    %5127 = vmatpush1.bf16.msra.mxu0 %v4972
    %5128 = vmatprep.subr.bf16.mxu0 0
    %5129 = vmatpush1.bf16.msra.mxu0 %v4971
    %5130 = vmatprep.subr.bf16.mxu0 0
    %5131 = vmatpush1.bf16.msra.mxu0 %v4970
    %5132 = vmatprep.subr.bf16.mxu0 0
    %5133 = vmatpush1.bf16.msra.mxu0 %v4969
    %5134 = vmatprep.subr.bf16.mxu0 0
    %5135 = vmatpush1.bf16.msra.mxu0 %v4968
    %5136 = vmatprep.subr.bf16.mxu0 0
    %5137 = vmatpush2.bf16.msra.mxu0 %v4983
    %5138 = vmatprep.subr.bf16.mxu0 0
    %5139 = vmatpush2.bf16.msra.mxu0 %v4982
    %5140 = vmatprep.subr.bf16.mxu0 0
    %5141 = vmatpush2.bf16.msra.mxu0 %v4981
    %5142 = vmatprep.subr.bf16.mxu0 0
    %5143 = vmatpush2.bf16.msra.mxu0 %v4980
    %5144 = vmatprep.subr.bf16.mxu0 0
    %5145 = vmatpush2.bf16.msra.mxu0 %v4979
    %5146 = vmatprep.subr.bf16.mxu0 0
    %5147 = vmatpush2.bf16.msra.mxu0 %v4978
    %5148 = vmatprep.subr.bf16.mxu0 0
    %5149 = vmatpush2.bf16.msra.mxu0 %v4977
    %5150 = vmatprep.subr.bf16.mxu0 0
    %5151 = vmatpush2.bf16.msra.mxu0 %v4976
    %5152 = vmatprep.mubr.bf16.mxu0 %v4556
    %5153 = vmatmul.mubr.bf16.gmra.mxu0 %v4555
    %v5154 = vpop.f32.mrf.mxu0
    %v5155 = vadd.f32 %v5115, %v5154
    %v5156 = vpop.f32.mrf.mxu0
    %v5157 = vpop.f32.mrf.mxu0
    %v5158 = vpop.f32.mrf.mxu0
    %5159 = vdwg.mxu0
    %5160 = vmatprep.subr.bf16.mxu0 0
    %5161 = vmatpush1.bf16.msra.mxu0 %v4991
    %5162 = vmatprep.subr.bf16.mxu0 0
    %5163 = vmatpush1.bf16.msra.mxu0 %v4990
    %5164 = vmatprep.subr.bf16.mxu0 0
    %5165 = vmatpush1.bf16.msra.mxu0 %v4989
    %5166 = vmatprep.subr.bf16.mxu0 0
    %5167 = vmatpush1.bf16.msra.mxu0 %v4988
    %5168 = vmatprep.subr.bf16.mxu0 0
    %5169 = vmatpush1.bf16.msra.mxu0 %v4987
    %5170 = vmatprep.subr.bf16.mxu0 0
    %5171 = vmatpush1.bf16.msra.mxu0 %v4986
    %5172 = vmatprep.subr.bf16.mxu0 0
    %5173 = vmatpush1.bf16.msra.mxu0 %v4985
    %5174 = vmatprep.subr.bf16.mxu0 0
    %5175 = vmatpush1.bf16.msra.mxu0 %v4984
    %5176 = vmatprep.subr.bf16.mxu0 0
    %5177 = vmatpush2.bf16.msra.mxu0 %v4999
    %5178 = vmatprep.subr.bf16.mxu0 0
    %5179 = vmatpush2.bf16.msra.mxu0 %v4998
    %5180 = vmatprep.subr.bf16.mxu0 0
    %5181 = vmatpush2.bf16.msra.mxu0 %v4997
    %5182 = vmatprep.subr.bf16.mxu0 0
    %5183 = vmatpush2.bf16.msra.mxu0 %v4996
    %5184 = vmatprep.subr.bf16.mxu0 0
    %5185 = vmatpush2.bf16.msra.mxu0 %v4995
    %5186 = vmatprep.subr.bf16.mxu0 0
    %5187 = vmatpush2.bf16.msra.mxu0 %v4994
    %5188 = vmatprep.subr.bf16.mxu0 0
    %5189 = vmatpush2.bf16.msra.mxu0 %v4993
    %5190 = vmatprep.subr.bf16.mxu0 0
    %5191 = vmatpush2.bf16.msra.mxu0 %v4992
    %5192 = vmatprep.mubr.bf16.mxu0 %v4558
    %5193 = vmatmul.mubr.bf16.gmra.mxu0 %v4557
    %v5194 = vpop.f32.mrf.mxu0
    %v5195 = vadd.f32 %v5155, %v5194
    %v5196 = vpop.f32.mrf.mxu0
    %v5197 = vpop.f32.mrf.mxu0
    %v5198 = vpop.f32.mrf.mxu0
    %5199 = vdwg.mxu0
    %5200 = vmatprep.subr.bf16.mxu0 0
    %5201 = vmatpush1.bf16.msra.mxu0 %v5007
    %5202 = vmatprep.subr.bf16.mxu0 0
    %5203 = vmatpush1.bf16.msra.mxu0 %v5006
    %5204 = vmatprep.subr.bf16.mxu0 0
    %5205 = vmatpush1.bf16.msra.mxu0 %v5005
    %5206 = vmatprep.subr.bf16.mxu0 0
    %5207 = vmatpush1.bf16.msra.mxu0 %v5004
    %5208 = vmatprep.subr.bf16.mxu0 0
    %5209 = vmatpush1.bf16.msra.mxu0 %v5003
    %5210 = vmatprep.subr.bf16.mxu0 0
    %5211 = vmatpush1.bf16.msra.mxu0 %v5002
    %5212 = vmatprep.subr.bf16.mxu0 0
    %5213 = vmatpush1.bf16.msra.mxu0 %v5001
    %5214 = vmatprep.subr.bf16.mxu0 0
    %5215 = vmatpush1.bf16.msra.mxu0 %v5000
    %5216 = vmatprep.subr.bf16.mxu0 0
    %5217 = vmatpush2.bf16.msra.mxu0 %v5015
    %5218 = vmatprep.subr.bf16.mxu0 0
    %5219 = vmatpush2.bf16.msra.mxu0 %v5014
    %5220 = vmatprep.subr.bf16.mxu0 0
    %5221 = vmatpush2.bf16.msra.mxu0 %v5013
    %5222 = vmatprep.subr.bf16.mxu0 0
    %5223 = vmatpush2.bf16.msra.mxu0 %v5012
    %5224 = vmatprep.subr.bf16.mxu0 0
    %5225 = vmatpush2.bf16.msra.mxu0 %v5011
    %5226 = vmatprep.subr.bf16.mxu0 0
    %5227 = vmatpush2.bf16.msra.mxu0 %v5010
    %5228 = vmatprep.subr.bf16.mxu0 0
    %5229 = vmatpush2.bf16.msra.mxu0 %v5009
    %5230 = vmatprep.subr.bf16.mxu0 0
    %5231 = vmatpush2.bf16.msra.mxu0 %v5008
    %5232 = vmatprep.mubr.bf16.mxu0 %v4560
    %5233 = vmatmul.mubr.bf16.gmra.mxu0 %v4559
    %v5234 = vpop.f32.mrf.mxu0
    %v5235 = vadd.f32 %v5195, %v5234
    %v5236 = vpop.f32.mrf.mxu0
    %v5237 = vpop.f32.mrf.mxu0
    %v5238 = vpop.f32.mrf.mxu0
    %5239 = vdwg.mxu0
    %v5240 = vmax.f32 %v5235, 0.0
    %v5241 = vpack.c.bf16 %v5240, %v5240
    %v5242 = vld [vmem:[%s8] sm:$0xf]
    %v5243 = vld [vmem:[%s8 + $0x4] sm:$0xf]
    %v5244 = vld [vmem:[%s8 + $0x8] sm:$0xf]
    %v5245 = vld [vmem:[%s8 + $0xc] sm:$0xf]
    %v5246 = vld [vmem:[%s9] sm:$0x1]
    %v5248 = vlaneseq
    %v5249 = vshrl.u32 %v5248, 7
    %v5250 = vsub.s32 0, %v5249
    %v5251 = vrot.slane %v5246, %v5250
    %v5257 = vunpack.c.l.b16 %v5242
    %v5258 = vunpack.c.l.b16 %v5243
    %v5259 = vunpack.c.l.b16 %v5244
    %v5260 = vunpack.c.l.b16 %v5245
    %v5261 = vpack.c.b16 %v5258, %v5257
    %v5262 = vpack.c.b16 %v5260, %v5259
    %v5266 = vsel %vm135, %v5241, 0
    %5268 = vmatprep.subr.bf16.mxu0 0
    %5269 = vmatpush1.bf16.msra.mxu0 0
    %5270 = vmatprep.subr.bf16.mxu0 0
    %5271 = vmatpush1.bf16.msra.mxu0 0
    %5272 = vmatprep.subr.bf16.mxu0 0
    %5273 = vmatpush1.bf16.msra.mxu0 0
    %5274 = vmatprep.subr.bf16.mxu0 0
    %5275 = vmatpush1.bf16.msra.mxu0 0
    %5276 = vmatprep.subr.bf16.mxu0 0
    %5277 = vmatpush1.bf16.msra.mxu0 0
    %5278 = vmatprep.subr.bf16.mxu0 0
    %5279 = vmatpush1.bf16.msra.mxu0 0
    %5280 = vmatprep.subr.bf16.mxu0 0
    %5281 = vmatpush1.bf16.msra.mxu0 %v5262
    %5282 = vmatprep.subr.bf16.mxu0 0
    %5283 = vmatpush1.bf16.msra.mxu0 %v5261
    %5284 = vmatprep.subr.bf16.mxu0 0
    %5285 = vmatpush2.bf16.msra.mxu0 0
    %5286 = vmatprep.subr.bf16.mxu0 0
    %5287 = vmatpush2.bf16.msra.mxu0 0
    %5288 = vmatprep.subr.bf16.mxu0 0
    %5289 = vmatpush2.bf16.msra.mxu0 0
    %5290 = vmatprep.subr.bf16.mxu0 0
    %5291 = vmatpush2.bf16.msra.mxu0 0
    %5292 = vmatprep.subr.bf16.mxu0 0
    %5293 = vmatpush2.bf16.msra.mxu0 0
    %5294 = vmatprep.subr.bf16.mxu0 0
    %5295 = vmatpush2.bf16.msra.mxu0 0
    %5296 = vmatprep.subr.bf16.mxu0 0
    %5297 = vmatpush2.bf16.msra.mxu0 0
    %5298 = vmatprep.subr.bf16.mxu0 0
    %5299 = vmatpush2.bf16.msra.mxu0 0
    %5300 = vmatprep.mubr.bf16.mxu0 0
    %5301 = vmatmul.mubr.bf16.gmra.mxu0 %v5266
    %v5302 = vpop.f32.mrf.mxu0
    %v5303 = vadd.f32 %v5251, %v5302
    %v5304 = vpop.f32.mrf.mxu0
    %v5305 = vpop.f32.mrf.mxu0
    %v5306 = vpop.f32.mrf.mxu0
    %5307 = vdwg.mxu0
    %5308 = vst [vmem:[#allocation4] sm:$0xff] %v5303
    // Predicated region
    $region42: #{tpu_custom_call.1} parent=1 // pred_check
      _
    $region43: #{tpu_custom_call.1} parent=1 // pred_check_branch
      %5310 = sbr.rel (0) target = $region45
    $region44: #{tpu_custom_call.1} parent=1 // pred_region
      %s5312 = ssub.s32 128, 128
      %5313 = vsyncadd [#allocation5], %s5312
      %s5315 = sshll.u32 [#allocation4], 4
      %s5316 = int_to_ptr.vmem [resolvable:$true] %s5315
      %5318 = dma.vmem_to_hbm [thread:$0]  %s5316, 128, %s10, [#allocation5]
    $region45: #{tpu_custom_call.1} parent=1 // pred_fallthru
      _
    // Predicated region
    $region46: #{tpu_custom_call.1} parent=1 // pred_check
      _
    $region47: #{tpu_custom_call.1} parent=1 // pred_check_branch
      %5320 = sbr.rel (0) target = $region49
    $region48: #{tpu_custom_call.1} parent=1 // pred_region
      %5321 = dma.done [#allocation5], 128
    $region49: #{tpu_custom_call.1} parent=1 // pred_fallthru
      _
    %5322 = vsyncpa [#allocation5], 1

</llo_original>
